<compile_context>
chip_gen: v7x
topology: tpu7x:2x2x1
jax: 0.10.0
libtpu: 0.0.40
codegen_flags: <defaults>
</compile_context>

<pallas_src>
import numpy as np
import jax
import jax.numpy as jnp
from jax import lax
from jax.experimental import pallas as pl
from jax.experimental.pallas import tpu as pltpu

EPS = 1e-5
HIGH = lax.Precision.HIGHEST  # reference only


def _pool_targets():
    """Static map: spatial pos s=h*8+w -> pool windows p=i*2+j it belongs to.

    AvgPool2d(5, stride=2, padding=0) on an 8x8 map -> 2x2 output windows.
    """
    tgt = []
    for s in range(64):
        h, w = divmod(s, 8)
        tgt.append(tuple(i * 2 + j for i in range(2) for j in range(2)
                         if 2 * i <= h <= 2 * i + 4 and 2 * j <= w <= 2 * j + 4))
    return tuple(tgt)


_POOL_TARGETS = _pool_targets()


# ---------------------------------------------------------------------------
# Kernel
# ---------------------------------------------------------------------------
def _aux_head_kernel(x_ref, w1s_ref, sh1_ref, w2_ref, sh2_ref, wct_ref, bc_ref,
                     out_ref):
    tb = out_ref.shape[0]          # images in this batch tile
    c = x_ref.shape[2]             # true channel count (no padding)
    n2 = w2_ref.shape[2]           # 768

    # ReLU + AvgPool2d(5, stride=2) on the 8x8 map.  x_ref is spatial-major
    # (64, tb, C): each x_ref[s] is a whole (tb, C) slab, so the pool is ~100
    # VPU adds accumulated in f32 (no big matmul, no sublane gathers).
    pooled = [jnp.zeros((tb, c), jnp.float32) for _ in range(4)]
    for s in range(64):
        targets = _POOL_TARGETS[s]
        if not targets:
            continue                                   # row/col 7 unused
        slab = jnp.maximum(x_ref[s], 0).astype(jnp.float32)
        for p in targets:
            pooled[p] = pooled[p] + slab
    # (1/25 average scale and BN scale are folded into w1s in the wrapper.)

    # 1x1 conv (C -> 128) per pool position: MXU matmul + folded-BN shift + ReLU.
    h1 = [jnp.maximum(jnp.dot(pooled[p].astype(jnp.bfloat16), w1s_ref[...],
                              preferred_element_type=jnp.float32)
                      + sh1_ref[...], 0.0)
          for p in range(4)]

    # 2x2 conv (128 -> 768): accumulate the 4 positions' matmuls in f32
    # (replaces the lane-axis concat + K=512 matmul).
    acc = jnp.zeros((tb, n2), jnp.float32)
    for p in range(4):
        acc = acc + jnp.dot(h1[p].astype(jnp.bfloat16), w2_ref[p],
                            preferred_element_type=jnp.float32)
    h2 = jnp.maximum(acc + sh2_ref[...], 0.0)

    # Classifier: (tb, 768) @ (768, nc_pad) + bias, lane-dense output store.
    out_ref[...] = (jnp.dot(h2.astype(jnp.bfloat16), wct_ref[...],
                            preferred_element_type=jnp.float32) + bc_ref[...])


# ---------------------------------------------------------------------------
# Glue
# ---------------------------------------------------------------------------
def _round_up(x, m):
    return (x + m - 1) // m * m


def _full_spec(shape):
    nd = len(shape)
    return pl.BlockSpec(shape, lambda i, _nd=nd: (0,) * _nd)


def aux_head_forward(x, params, *, tb_max=128):
    """x: (B, C, 8, 8) float32 NCHW (PyTorch convention)."""
    B, C, H, W = x.shape
    assert (H, W) == (8, 8), "AuxiliaryHeadCifar assumes 8x8 spatial input"
    num_classes = params["wc"].shape[0]
    nc_pad = _round_up(max(num_classes, 128), 128)

    # ---- batch tile: as large as possible (amortize per-step overhead, >=1 MiB
    # DMAs, MXU rows filled) while keeping the double-buffered x tile under
    # ~24 MiB (safe on v7x's 64 MiB VMEM), and >=2 grid steps when the batch
    # allows it so both v7x TensorCores are active.
    tb = min(tb_max, _round_up(B, 8))
    vmem_cap_rows = max(8, ((24 << 20) // (2 * H * W * C * 2)) // 8 * 8)
    tb = min(tb, vmem_cap_rows)
    if _round_up(B, tb) // tb < 2 and tb >= 16:
        tb = max(8, (tb // 2) // 8 * 8)
    b_pad = _round_up(B, tb)

    # ---- layout: NCHW -> spatial-major (64, B, C), batch padded, bf16.
    x3 = jnp.transpose(x, (2, 3, 0, 1)).reshape(H * W, B, C)
    x3 = jnp.pad(x3, ((0, 0), (0, b_pad - B), (0, 0))).astype(jnp.bfloat16)

    # ---- fold BN (running stats) and the 1/25 pool average into the weights.
    s1v = params["g1"] / jnp.sqrt(params["v1"] + EPS)
    sh1 = (params["b1"] - params["m1"] * s1v).reshape(1, 128)
    s2v = params["g2"] / jnp.sqrt(params["v2"] + EPS)
    sh2 = (params["b2"] - params["m2"] * s2v).reshape(1, 768)

    w1s = (params["w1"].reshape(128, C).T * s1v[None, :] * (1.0 / 25.0))
    w1s = w1s.astype(jnp.bfloat16)                                 # (C, 128)

    # (768,128,2,2) -> (4,128,768) with p = kh*2 + kw, BN scale folded in.
    w2s = (jnp.transpose(params["w2"], (2, 3, 1, 0)).reshape(4, 128, 768)
           * s2v[None, None, :]).astype(jnp.bfloat16)

    wct = jnp.pad(params["wc"].T, ((0, 0), (0, nc_pad - num_classes)))
    wct = wct.astype(jnp.bfloat16)                                 # (768, nc_pad)
    bc = jnp.pad(params["bc"], (0, nc_pad - num_classes)).reshape(1, nc_pad)

    weights = (w1s, sh1, w2s, sh2, wct, bc)

    # ---- VMEM budget: double-buffered x/out tiles + resident weights + slack.
    x_tile = H * W * tb * C * 2
    out_tile = tb * nc_pad * 4
    w_bytes = sum(int(np.prod(w.shape)) * w.dtype.itemsize for w in weights)
    vmem_limit = int(min(64 << 20,
                         max(32 << 20,
                             2 * (x_tile + out_tile + w_bytes) + (8 << 20))))

    out = pl.pallas_call(
        _aux_head_kernel,
        out_shape=jax.ShapeDtypeStruct((b_pad, nc_pad), jnp.float32),
        grid=(b_pad // tb,),
        in_specs=[pl.BlockSpec((H * W, tb, C), lambda i: (0, i, 0))]
                 + [_full_spec(w.shape) for w in weights],
        out_specs=pl.BlockSpec((tb, nc_pad), lambda i: (i, 0)),
        compiler_params=pltpu.CompilerParams(
            dimension_semantics=("parallel",),
            vmem_limit_bytes=vmem_limit),
    )(x3, *weights)

    return out[:B, :num_classes]


# ---------------------------------------------------------------------------
# Pure-JAX reference (eval-mode BN), mirrors the PyTorch module.
# ---------------------------------------------------------------------------
def aux_head_reference(x, params):
    dn = ("NCHW", "OIHW", "NCHW")
    y = jnp.maximum(x, 0.0)
    y = lax.reduce_window(y, 0.0, lax.add, (1, 1, 5, 5), (1, 1, 2, 2),
                          "VALID") / 25.0
    y = lax.conv_general_dilated(y, params["w1"], (1, 1), "VALID",
                                 dimension_numbers=dn, precision=HIGH)
    y = ((y - params["m1"][None, :, None, None])
         / jnp.sqrt(params["v1"] + EPS)[None, :, None, None]
         * params["g1"][None, :, None, None]
         + params["b1"][None, :, None, None])
    y = jnp.maximum(y, 0.0)
    y = lax.conv_general_dilated(y, params["w2"], (1, 1), "VALID",
                                 dimension_numbers=dn, precision=HIGH)
    y = ((y - params["m2"][None, :, None, None])
         / jnp.sqrt(params["v2"] + EPS)[None, :, None, None]
         * params["g2"][None, :, None, None]
         + params["b2"][None, :, None, None])
    y = jnp.maximum(y, 0.0)
    y = y.reshape(y.shape[0], -1)                                  # (B, 768)
    return jnp.dot(y, params["wc"].T, precision=HIGH) + params["bc"]


def make_params(key, c_inputs, num_classes):
    ks = jax.random.split(key, 12)
    return {
        "w1": 0.1 * jax.random.normal(ks[0], (128, c_inputs, 1, 1), jnp.float32),
        "g1": jax.random.uniform(ks[1], (128,), jnp.float32, 0.5, 1.5),
        "b1": 0.1 * jax.random.normal(ks[2], (128,), jnp.float32),
        "m1": 0.1 * jax.random.normal(ks[3], (128,), jnp.float32),
        "v1": jax.random.uniform(ks[4], (128,), jnp.float32, 0.5, 1.5),
        "w2": 0.05 * jax.random.normal(ks[5], (768, 128, 2, 2), jnp.float32),
        "g2": jax.random.uniform(ks[6], (768,), jnp.float32, 0.5, 1.5),
        "b2": 0.1 * jax.random.normal(ks[7], (768,), jnp.float32),
        "m2": 0.1 * jax.random.normal(ks[8], (768,), jnp.float32),
        "v2": jax.random.uniform(ks[9], (768,), jnp.float32, 0.5, 1.5),
        "wc": 0.05 * jax.random.normal(ks[10], (num_classes, 768), jnp.float32),
        "bc": 0.1 * jax.random.normal(ks[11], (num_classes,), jnp.float32),
    }


if __name__ == "__main__":
    B, C, NUM_CLASSES = 2, 16, 10
    key = jax.random.PRNGKey(0)
    kx, kp = jax.random.split(key)
    x = jax.random.normal(kx, (B, C, 8, 8), jnp.float32)   # NCHW, 8x8 as in PC-DARTS
    params = make_params(kp, C, NUM_CLASSES)

    out = jax.block_until_ready(aux_head_forward(x, params))
    ref = jax.block_until_ready(aux_head_reference(x, params))

    if not np.allclose(np.asarray(out), np.asarray(ref), rtol=2e-2, atol=2e-2):
        raise AssertionError("Pallas kernel output does not match reference")
    print("KERNEL_OK")
</pallas_src>

<mosaic_0001>
module attributes {stable_mosaic.version = 11 : i64} {
  func.func @_aux_head_kernel(%arg0: i32, %arg1: memref<64x8x16xbf16, #tpu.memory_space<vmem>>, %arg2: memref<16x128xbf16, #tpu.memory_space<vmem>>, %arg3: memref<1x128xf32, #tpu.memory_space<vmem>>, %arg4: memref<4x128x768xbf16, #tpu.memory_space<vmem>>, %arg5: memref<1x768xf32, #tpu.memory_space<vmem>>, %arg6: memref<768x128xbf16, #tpu.memory_space<vmem>>, %arg7: memref<1x128xf32, #tpu.memory_space<vmem>>, %arg8: memref<8x128xf32, #tpu.memory_space<vmem>>) attributes {dimension_semantics = [#tpu.dimension_semantics<parallel>], iteration_bounds = array<i64: 1>, scalar_prefetch = 0 : i64, scratch_operands = 0 : i64, tpu.core_type = #tpu.core_type<tc>, window_params = [{transform_indices = @transform_0, window_bounds = array<i64: 64, 8, 16>}, {pipeline_mode = #tpu.pipeline_mode<synchronous>, transform_indices = @transform_1, window_bounds = array<i64: 16, 128>}, {pipeline_mode = #tpu.pipeline_mode<synchronous>, transform_indices = @transform_2, window_bounds = array<i64: 1, 128>}, {pipeline_mode = #tpu.pipeline_mode<synchronous>, transform_indices = @transform_3, window_bounds = array<i64: 4, 128, 768>}, {pipeline_mode = #tpu.pipeline_mode<synchronous>, transform_indices = @transform_4, window_bounds = array<i64: 1, 768>}, {pipeline_mode = #tpu.pipeline_mode<synchronous>, transform_indices = @transform_5, window_bounds = array<i64: 768, 128>}, {pipeline_mode = #tpu.pipeline_mode<synchronous>, transform_indices = @transform_6, window_bounds = array<i64: 1, 128>}, {transform_indices = @transform_7, window_bounds = array<i64: 8, 128>}]} {
    %cst = arith.constant 0.000000e+00 : f32
    %0 = vector.broadcast %cst : f32 to vector<8x16xf32>
    %cst_0 = arith.constant 0.000000e+00 : f32
    %1 = vector.broadcast %cst_0 : f32 to vector<8x16xf32>
    %cst_1 = arith.constant 0.000000e+00 : f32
    %2 = vector.broadcast %cst_1 : f32 to vector<8x16xf32>
    %cst_2 = arith.constant 0.000000e+00 : f32
    %3 = vector.broadcast %cst_2 : f32 to vector<8x16xf32>
    %c0 = arith.constant 0 : index
    %c0_3 = arith.constant 0 : index
    %c0_4 = arith.constant 0 : index
    %4 = vector.load %arg1[%c0, %c0_3, %c0_4] : memref<64x8x16xbf16, #tpu.memory_space<vmem>>, vector<1x8x16xbf16>
    %5 = vector.shape_cast %4 : vector<1x8x16xbf16> to vector<8x16xbf16>
    %cst_5 = arith.constant 0.000000e+00 : bf16
    %6 = vector.broadcast %cst_5 : bf16 to vector<8x16xbf16>
    %7 = arith.maximumf %5, %6 : vector<8x16xbf16>
    %8 = arith.extf %7 : vector<8x16xbf16> to vector<8x16xf32>
    %9 = arith.addf %0, %8 : vector<8x16xf32>
    %c1 = arith.constant 1 : index
    %c0_6 = arith.constant 0 : index
    %c0_7 = arith.constant 0 : index
    %10 = vector.load %arg1[%c1, %c0_6, %c0_7] : memref<64x8x16xbf16, #tpu.memory_space<vmem>>, vector<1x8x16xbf16>
    %11 = vector.shape_cast %10 : vector<1x8x16xbf16> to vector<8x16xbf16>
    %cst_8 = arith.constant 0.000000e+00 : bf16
    %12 = vector.broadcast %cst_8 : bf16 to vector<8x16xbf16>
    %13 = arith.maximumf %11, %12 : vector<8x16xbf16>
    %14 = arith.extf %13 : vector<8x16xbf16> to vector<8x16xf32>
    %15 = arith.addf %9, %14 : vector<8x16xf32>
    %c2 = arith.constant 2 : index
    %c0_9 = arith.constant 0 : index
    %c0_10 = arith.constant 0 : index
    %16 = vector.load %arg1[%c2, %c0_9, %c0_10] : memref<64x8x16xbf16, #tpu.memory_space<vmem>>, vector<1x8x16xbf16>
    %17 = vector.shape_cast %16 : vector<1x8x16xbf16> to vector<8x16xbf16>
    %cst_11 = arith.constant 0.000000e+00 : bf16
    %18 = vector.broadcast %cst_11 : bf16 to vector<8x16xbf16>
    %19 = arith.maximumf %17, %18 : vector<8x16xbf16>
    %20 = arith.extf %19 : vector<8x16xbf16> to vector<8x16xf32>
    %21 = arith.addf %15, %20 : vector<8x16xf32>
    %22 = arith.addf %1, %20 : vector<8x16xf32>
    %c3 = arith.constant 3 : index
    %c0_12 = arith.constant 0 : index
    %c0_13 = arith.constant 0 : index
    %23 = vector.load %arg1[%c3, %c0_12, %c0_13] : memref<64x8x16xbf16, #tpu.memory_space<vmem>>, vector<1x8x16xbf16>
    %24 = vector.shape_cast %23 : vector<1x8x16xbf16> to vector<8x16xbf16>
    %cst_14 = arith.constant 0.000000e+00 : bf16
    %25 = vector.broadcast %cst_14 : bf16 to vector<8x16xbf16>
    %26 = arith.maximumf %24, %25 : vector<8x16xbf16>
    %27 = arith.extf %26 : vector<8x16xbf16> to vector<8x16xf32>
    %28 = arith.addf %21, %27 : vector<8x16xf32>
    %29 = arith.addf %22, %27 : vector<8x16xf32>
    %c4 = arith.constant 4 : index
    %c0_15 = arith.constant 0 : index
    %c0_16 = arith.constant 0 : index
    %30 = vector.load %arg1[%c4, %c0_15, %c0_16] : memref<64x8x16xbf16, #tpu.memory_space<vmem>>, vector<1x8x16xbf16>
    %31 = vector.shape_cast %30 : vector<1x8x16xbf16> to vector<8x16xbf16>
    %cst_17 = arith.constant 0.000000e+00 : bf16
    %32 = vector.broadcast %cst_17 : bf16 to vector<8x16xbf16>
    %33 = arith.maximumf %31, %32 : vector<8x16xbf16>
    %34 = arith.extf %33 : vector<8x16xbf16> to vector<8x16xf32>
    %35 = arith.addf %28, %34 : vector<8x16xf32>
    %36 = arith.addf %29, %34 : vector<8x16xf32>
    %c5 = arith.constant 5 : index
    %c0_18 = arith.constant 0 : index
    %c0_19 = arith.constant 0 : index
    %37 = vector.load %arg1[%c5, %c0_18, %c0_19] : memref<64x8x16xbf16, #tpu.memory_space<vmem>>, vector<1x8x16xbf16>
    %38 = vector.shape_cast %37 : vector<1x8x16xbf16> to vector<8x16xbf16>
    %cst_20 = arith.constant 0.000000e+00 : bf16
    %39 = vector.broadcast %cst_20 : bf16 to vector<8x16xbf16>
    %40 = arith.maximumf %38, %39 : vector<8x16xbf16>
    %41 = arith.extf %40 : vector<8x16xbf16> to vector<8x16xf32>
    %42 = arith.addf %36, %41 : vector<8x16xf32>
    %c6 = arith.constant 6 : index
    %c0_21 = arith.constant 0 : index
    %c0_22 = arith.constant 0 : index
    %43 = vector.load %arg1[%c6, %c0_21, %c0_22] : memref<64x8x16xbf16, #tpu.memory_space<vmem>>, vector<1x8x16xbf16>
    %44 = vector.shape_cast %43 : vector<1x8x16xbf16> to vector<8x16xbf16>
    %cst_23 = arith.constant 0.000000e+00 : bf16
    %45 = vector.broadcast %cst_23 : bf16 to vector<8x16xbf16>
    %46 = arith.maximumf %44, %45 : vector<8x16xbf16>
    %47 = arith.extf %46 : vector<8x16xbf16> to vector<8x16xf32>
    %48 = arith.addf %42, %47 : vector<8x16xf32>
    %c8 = arith.constant 8 : index
    %c0_24 = arith.constant 0 : index
    %c0_25 = arith.constant 0 : index
    %49 = vector.load %arg1[%c8, %c0_24, %c0_25] : memref<64x8x16xbf16, #tpu.memory_space<vmem>>, vector<1x8x16xbf16>
    %50 = vector.shape_cast %49 : vector<1x8x16xbf16> to vector<8x16xbf16>
    %cst_26 = arith.constant 0.000000e+00 : bf16
    %51 = vector.broadcast %cst_26 : bf16 to vector<8x16xbf16>
    %52 = arith.maximumf %50, %51 : vector<8x16xbf16>
    %53 = arith.extf %52 : vector<8x16xbf16> to vector<8x16xf32>
    %54 = arith.addf %35, %53 : vector<8x16xf32>
    %c9 = arith.constant 9 : index
    %c0_27 = arith.constant 0 : index
    %c0_28 = arith.constant 0 : index
    %55 = vector.load %arg1[%c9, %c0_27, %c0_28] : memref<64x8x16xbf16, #tpu.memory_space<vmem>>, vector<1x8x16xbf16>
    %56 = vector.shape_cast %55 : vector<1x8x16xbf16> to vector<8x16xbf16>
    %cst_29 = arith.constant 0.000000e+00 : bf16
    %57 = vector.broadcast %cst_29 : bf16 to vector<8x16xbf16>
    %58 = arith.maximumf %56, %57 : vector<8x16xbf16>
    %59 = arith.extf %58 : vector<8x16xbf16> to vector<8x16xf32>
    %60 = arith.addf %54, %59 : vector<8x16xf32>
    %c10 = arith.constant 10 : index
    %c0_30 = arith.constant 0 : index
    %c0_31 = arith.constant 0 : index
    %61 = vector.load %arg1[%c10, %c0_30, %c0_31] : memref<64x8x16xbf16, #tpu.memory_space<vmem>>, vector<1x8x16xbf16>
    %62 = vector.shape_cast %61 : vector<1x8x16xbf16> to vector<8x16xbf16>
    %cst_32 = arith.constant 0.000000e+00 : bf16
    %63 = vector.broadcast %cst_32 : bf16 to vector<8x16xbf16>
    %64 = arith.maximumf %62, %63 : vector<8x16xbf16>
    %65 = arith.extf %64 : vector<8x16xbf16> to vector<8x16xf32>
    %66 = arith.addf %60, %65 : vector<8x16xf32>
    %67 = arith.addf %48, %65 : vector<8x16xf32>
    %c11 = arith.constant 11 : index
    %c0_33 = arith.constant 0 : index
    %c0_34 = arith.constant 0 : index
    %68 = vector.load %arg1[%c11, %c0_33, %c0_34] : memref<64x8x16xbf16, #tpu.memory_space<vmem>>, vector<1x8x16xbf16>
    %69 = vector.shape_cast %68 : vector<1x8x16xbf16> to vector<8x16xbf16>
    %cst_35 = arith.constant 0.000000e+00 : bf16
    %70 = vector.broadcast %cst_35 : bf16 to vector<8x16xbf16>
    %71 = arith.maximumf %69, %70 : vector<8x16xbf16>
    %72 = arith.extf %71 : vector<8x16xbf16> to vector<8x16xf32>
    %73 = arith.addf %66, %72 : vector<8x16xf32>
    %74 = arith.addf %67, %72 : vector<8x16xf32>
    %c12 = arith.constant 12 : index
    %c0_36 = arith.constant 0 : index
    %c0_37 = arith.constant 0 : index
    %75 = vector.load %arg1[%c12, %c0_36, %c0_37] : memref<64x8x16xbf16, #tpu.memory_space<vmem>>, vector<1x8x16xbf16>
    %76 = vector.shape_cast %75 : vector<1x8x16xbf16> to vector<8x16xbf16>
    %cst_38 = arith.constant 0.000000e+00 : bf16
    %77 = vector.broadcast %cst_38 : bf16 to vector<8x16xbf16>
    %78 = arith.maximumf %76, %77 : vector<8x16xbf16>
    %79 = arith.extf %78 : vector<8x16xbf16> to vector<8x16xf32>
    %80 = arith.addf %73, %79 : vector<8x16xf32>
    %81 = arith.addf %74, %79 : vector<8x16xf32>
    %c13 = arith.constant 13 : index
    %c0_39 = arith.constant 0 : index
    %c0_40 = arith.constant 0 : index
    %82 = vector.load %arg1[%c13, %c0_39, %c0_40] : memref<64x8x16xbf16, #tpu.memory_space<vmem>>, vector<1x8x16xbf16>
    %83 = vector.shape_cast %82 : vector<1x8x16xbf16> to vector<8x16xbf16>
    %cst_41 = arith.constant 0.000000e+00 : bf16
    %84 = vector.broadcast %cst_41 : bf16 to vector<8x16xbf16>
    %85 = arith.maximumf %83, %84 : vector<8x16xbf16>
    %86 = arith.extf %85 : vector<8x16xbf16> to vector<8x16xf32>
    %87 = arith.addf %81, %86 : vector<8x16xf32>
    %c14 = arith.constant 14 : index
    %c0_42 = arith.constant 0 : index
    %c0_43 = arith.constant 0 : index
    %88 = vector.load %arg1[%c14, %c0_42, %c0_43] : memref<64x8x16xbf16, #tpu.memory_space<vmem>>, vector<1x8x16xbf16>
    %89 = vector.shape_cast %88 : vector<1x8x16xbf16> to vector<8x16xbf16>
    %cst_44 = arith.constant 0.000000e+00 : bf16
    %90 = vector.broadcast %cst_44 : bf16 to vector<8x16xbf16>
    %91 = arith.maximumf %89, %90 : vector<8x16xbf16>
    %92 = arith.extf %91 : vector<8x16xbf16> to vector<8x16xf32>
    %93 = arith.addf %87, %92 : vector<8x16xf32>
    %c16 = arith.constant 16 : index
    %c0_45 = arith.constant 0 : index
    %c0_46 = arith.constant 0 : index
    %94 = vector.load %arg1[%c16, %c0_45, %c0_46] : memref<64x8x16xbf16, #tpu.memory_space<vmem>>, vector<1x8x16xbf16>
    %95 = vector.shape_cast %94 : vector<1x8x16xbf16> to vector<8x16xbf16>
    %cst_47 = arith.constant 0.000000e+00 : bf16
    %96 = vector.broadcast %cst_47 : bf16 to vector<8x16xbf16>
    %97 = arith.maximumf %95, %96 : vector<8x16xbf16>
    %98 = arith.extf %97 : vector<8x16xbf16> to vector<8x16xf32>
    %99 = arith.addf %80, %98 : vector<8x16xf32>
    %100 = arith.addf %2, %98 : vector<8x16xf32>
    %c17 = arith.constant 17 : index
    %c0_48 = arith.constant 0 : index
    %c0_49 = arith.constant 0 : index
    %101 = vector.load %arg1[%c17, %c0_48, %c0_49] : memref<64x8x16xbf16, #tpu.memory_space<vmem>>, vector<1x8x16xbf16>
    %102 = vector.shape_cast %101 : vector<1x8x16xbf16> to vector<8x16xbf16>
    %cst_50 = arith.constant 0.000000e+00 : bf16
    %103 = vector.broadcast %cst_50 : bf16 to vector<8x16xbf16>
    %104 = arith.maximumf %102, %103 : vector<8x16xbf16>
    %105 = arith.extf %104 : vector<8x16xbf16> to vector<8x16xf32>
    %106 = arith.addf %99, %105 : vector<8x16xf32>
    %107 = arith.addf %100, %105 : vector<8x16xf32>
    %c18 = arith.constant 18 : index
    %c0_51 = arith.constant 0 : index
    %c0_52 = arith.constant 0 : index
    %108 = vector.load %arg1[%c18, %c0_51, %c0_52] : memref<64x8x16xbf16, #tpu.memory_space<vmem>>, vector<1x8x16xbf16>
    %109 = vector.shape_cast %108 : vector<1x8x16xbf16> to vector<8x16xbf16>
    %cst_53 = arith.constant 0.000000e+00 : bf16
    %110 = vector.broadcast %cst_53 : bf16 to vector<8x16xbf16>
    %111 = arith.maximumf %109, %110 : vector<8x16xbf16>
    %112 = arith.extf %111 : vector<8x16xbf16> to vector<8x16xf32>
    %113 = arith.addf %106, %112 : vector<8x16xf32>
    %114 = arith.addf %93, %112 : vector<8x16xf32>
    %115 = arith.addf %107, %112 : vector<8x16xf32>
    %116 = arith.addf %3, %112 : vector<8x16xf32>
    %c19 = arith.constant 19 : index
    %c0_54 = arith.constant 0 : index
    %c0_55 = arith.constant 0 : index
    %117 = vector.load %arg1[%c19, %c0_54, %c0_55] : memref<64x8x16xbf16, #tpu.memory_space<vmem>>, vector<1x8x16xbf16>
    %118 = vector.shape_cast %117 : vector<1x8x16xbf16> to vector<8x16xbf16>
    %cst_56 = arith.constant 0.000000e+00 : bf16
    %119 = vector.broadcast %cst_56 : bf16 to vector<8x16xbf16>
    %120 = arith.maximumf %118, %119 : vector<8x16xbf16>
    %121 = arith.extf %120 : vector<8x16xbf16> to vector<8x16xf32>
    %122 = arith.addf %113, %121 : vector<8x16xf32>
    %123 = arith.addf %114, %121 : vector<8x16xf32>
    %124 = arith.addf %115, %121 : vector<8x16xf32>
    %125 = arith.addf %116, %121 : vector<8x16xf32>
    %c20 = arith.constant 20 : index
    %c0_57 = arith.constant 0 : index
    %c0_58 = arith.constant 0 : index
    %126 = vector.load %arg1[%c20, %c0_57, %c0_58] : memref<64x8x16xbf16, #tpu.memory_space<vmem>>, vector<1x8x16xbf16>
    %127 = vector.shape_cast %126 : vector<1x8x16xbf16> to vector<8x16xbf16>
    %cst_59 = arith.constant 0.000000e+00 : bf16
    %128 = vector.broadcast %cst_59 : bf16 to vector<8x16xbf16>
    %129 = arith.maximumf %127, %128 : vector<8x16xbf16>
    %130 = arith.extf %129 : vector<8x16xbf16> to vector<8x16xf32>
    %131 = arith.addf %122, %130 : vector<8x16xf32>
    %132 = arith.addf %123, %130 : vector<8x16xf32>
    %133 = arith.addf %124, %130 : vector<8x16xf32>
    %134 = arith.addf %125, %130 : vector<8x16xf32>
    %c21 = arith.constant 21 : index
    %c0_60 = arith.constant 0 : index
    %c0_61 = arith.constant 0 : index
    %135 = vector.load %arg1[%c21, %c0_60, %c0_61] : memref<64x8x16xbf16, #tpu.memory_space<vmem>>, vector<1x8x16xbf16>
    %136 = vector.shape_cast %135 : vector<1x8x16xbf16> to vector<8x16xbf16>
    %cst_62 = arith.constant 0.000000e+00 : bf16
    %137 = vector.broadcast %cst_62 : bf16 to vector<8x16xbf16>
    %138 = arith.maximumf %136, %137 : vector<8x16xbf16>
    %139 = arith.extf %138 : vector<8x16xbf16> to vector<8x16xf32>
    %140 = arith.addf %132, %139 : vector<8x16xf32>
    %141 = arith.addf %134, %139 : vector<8x16xf32>
    %c22 = arith.constant 22 : index
    %c0_63 = arith.constant 0 : index
    %c0_64 = arith.constant 0 : index
    %142 = vector.load %arg1[%c22, %c0_63, %c0_64] : memref<64x8x16xbf16, #tpu.memory_space<vmem>>, vector<1x8x16xbf16>
    %143 = vector.shape_cast %142 : vector<1x8x16xbf16> to vector<8x16xbf16>
    %cst_65 = arith.constant 0.000000e+00 : bf16
    %144 = vector.broadcast %cst_65 : bf16 to vector<8x16xbf16>
    %145 = arith.maximumf %143, %144 : vector<8x16xbf16>
    %146 = arith.extf %145 : vector<8x16xbf16> to vector<8x16xf32>
    %147 = arith.addf %140, %146 : vector<8x16xf32>
    %148 = arith.addf %141, %146 : vector<8x16xf32>
    %c24 = arith.constant 24 : index
    %c0_66 = arith.constant 0 : index
    %c0_67 = arith.constant 0 : index
    %149 = vector.load %arg1[%c24, %c0_66, %c0_67] : memref<64x8x16xbf16, #tpu.memory_space<vmem>>, vector<1x8x16xbf16>
    %150 = vector.shape_cast %149 : vector<1x8x16xbf16> to vector<8x16xbf16>
    %cst_68 = arith.constant 0.000000e+00 : bf16
    %151 = vector.broadcast %cst_68 : bf16 to vector<8x16xbf16>
    %152 = arith.maximumf %150, %151 : vector<8x16xbf16>
    %153 = arith.extf %152 : vector<8x16xbf16> to vector<8x16xf32>
    %154 = arith.addf %131, %153 : vector<8x16xf32>
    %155 = arith.addf %133, %153 : vector<8x16xf32>
    %c25 = arith.constant 25 : index
    %c0_69 = arith.constant 0 : index
    %c0_70 = arith.constant 0 : index
    %156 = vector.load %arg1[%c25, %c0_69, %c0_70] : memref<64x8x16xbf16, #tpu.memory_space<vmem>>, vector<1x8x16xbf16>
    %157 = vector.shape_cast %156 : vector<1x8x16xbf16> to vector<8x16xbf16>
    %cst_71 = arith.constant 0.000000e+00 : bf16
    %158 = vector.broadcast %cst_71 : bf16 to vector<8x16xbf16>
    %159 = arith.maximumf %157, %158 : vector<8x16xbf16>
    %160 = arith.extf %159 : vector<8x16xbf16> to vector<8x16xf32>
    %161 = arith.addf %154, %160 : vector<8x16xf32>
    %162 = arith.addf %155, %160 : vector<8x16xf32>
    %c26 = arith.constant 26 : index
    %c0_72 = arith.constant 0 : index
    %c0_73 = arith.constant 0 : index
    %163 = vector.load %arg1[%c26, %c0_72, %c0_73] : memref<64x8x16xbf16, #tpu.memory_space<vmem>>, vector<1x8x16xbf16>
    %164 = vector.shape_cast %163 : vector<1x8x16xbf16> to vector<8x16xbf16>
    %cst_74 = arith.constant 0.000000e+00 : bf16
    %165 = vector.broadcast %cst_74 : bf16 to vector<8x16xbf16>
    %166 = arith.maximumf %164, %165 : vector<8x16xbf16>
    %167 = arith.extf %166 : vector<8x16xbf16> to vector<8x16xf32>
    %168 = arith.addf %161, %167 : vector<8x16xf32>
    %169 = arith.addf %147, %167 : vector<8x16xf32>
    %170 = arith.addf %162, %167 : vector<8x16xf32>
    %171 = arith.addf %148, %167 : vector<8x16xf32>
    %c27 = arith.constant 27 : index
    %c0_75 = arith.constant 0 : index
    %c0_76 = arith.constant 0 : index
    %172 = vector.load %arg1[%c27, %c0_75, %c0_76] : memref<64x8x16xbf16, #tpu.memory_space<vmem>>, vector<1x8x16xbf16>
    %173 = vector.shape_cast %172 : vector<1x8x16xbf16> to vector<8x16xbf16>
    %cst_77 = arith.constant 0.000000e+00 : bf16
    %174 = vector.broadcast %cst_77 : bf16 to vector<8x16xbf16>
    %175 = arith.maximumf %173, %174 : vector<8x16xbf16>
    %176 = arith.extf %175 : vector<8x16xbf16> to vector<8x16xf32>
    %177 = arith.addf %168, %176 : vector<8x16xf32>
    %178 = arith.addf %169, %176 : vector<8x16xf32>
    %179 = arith.addf %170, %176 : vector<8x16xf32>
    %180 = arith.addf %171, %176 : vector<8x16xf32>
    %c28 = arith.constant 28 : index
    %c0_78 = arith.constant 0 : index
    %c0_79 = arith.constant 0 : index
    %181 = vector.load %arg1[%c28, %c0_78, %c0_79] : memref<64x8x16xbf16, #tpu.memory_space<vmem>>, vector<1x8x16xbf16>
    %182 = vector.shape_cast %181 : vector<1x8x16xbf16> to vector<8x16xbf16>
    %cst_80 = arith.constant 0.000000e+00 : bf16
    %183 = vector.broadcast %cst_80 : bf16 to vector<8x16xbf16>
    %184 = arith.maximumf %182, %183 : vector<8x16xbf16>
    %185 = arith.extf %184 : vector<8x16xbf16> to vector<8x16xf32>
    %186 = arith.addf %177, %185 : vector<8x16xf32>
    %187 = arith.addf %178, %185 : vector<8x16xf32>
    %188 = arith.addf %179, %185 : vector<8x16xf32>
    %189 = arith.addf %180, %185 : vector<8x16xf32>
    %c29 = arith.constant 29 : index
    %c0_81 = arith.constant 0 : index
    %c0_82 = arith.constant 0 : index
    %190 = vector.load %arg1[%c29, %c0_81, %c0_82] : memref<64x8x16xbf16, #tpu.memory_space<vmem>>, vector<1x8x16xbf16>
    %191 = vector.shape_cast %190 : vector<1x8x16xbf16> to vector<8x16xbf16>
    %cst_83 = arith.constant 0.000000e+00 : bf16
    %192 = vector.broadcast %cst_83 : bf16 to vector<8x16xbf16>
    %193 = arith.maximumf %191, %192 : vector<8x16xbf16>
    %194 = arith.extf %193 : vector<8x16xbf16> to vector<8x16xf32>
    %195 = arith.addf %187, %194 : vector<8x16xf32>
    %196 = arith.addf %189, %194 : vector<8x16xf32>
    %c30 = arith.constant 30 : index
    %c0_84 = arith.constant 0 : index
    %c0_85 = arith.constant 0 : index
    %197 = vector.load %arg1[%c30, %c0_84, %c0_85] : memref<64x8x16xbf16, #tpu.memory_space<vmem>>, vector<1x8x16xbf16>
    %198 = vector.shape_cast %197 : vector<1x8x16xbf16> to vector<8x16xbf16>
    %cst_86 = arith.constant 0.000000e+00 : bf16
    %199 = vector.broadcast %cst_86 : bf16 to vector<8x16xbf16>
    %200 = arith.maximumf %198, %199 : vector<8x16xbf16>
    %201 = arith.extf %200 : vector<8x16xbf16> to vector<8x16xf32>
    %202 = arith.addf %195, %201 : vector<8x16xf32>
    %203 = arith.addf %196, %201 : vector<8x16xf32>
    %c32 = arith.constant 32 : index
    %c0_87 = arith.constant 0 : index
    %c0_88 = arith.constant 0 : index
    %204 = vector.load %arg1[%c32, %c0_87, %c0_88] : memref<64x8x16xbf16, #tpu.memory_space<vmem>>, vector<1x8x16xbf16>
    %205 = vector.shape_cast %204 : vector<1x8x16xbf16> to vector<8x16xbf16>
    %cst_89 = arith.constant 0.000000e+00 : bf16
    %206 = vector.broadcast %cst_89 : bf16 to vector<8x16xbf16>
    %207 = arith.maximumf %205, %206 : vector<8x16xbf16>
    %208 = arith.extf %207 : vector<8x16xbf16> to vector<8x16xf32>
    %209 = arith.addf %186, %208 : vector<8x16xf32>
    %210 = arith.addf %188, %208 : vector<8x16xf32>
    %c33 = arith.constant 33 : index
    %c0_90 = arith.constant 0 : index
    %c0_91 = arith.constant 0 : index
    %211 = vector.load %arg1[%c33, %c0_90, %c0_91] : memref<64x8x16xbf16, #tpu.memory_space<vmem>>, vector<1x8x16xbf16>
    %212 = vector.shape_cast %211 : vector<1x8x16xbf16> to vector<8x16xbf16>
    %cst_92 = arith.constant 0.000000e+00 : bf16
    %213 = vector.broadcast %cst_92 : bf16 to vector<8x16xbf16>
    %214 = arith.maximumf %212, %213 : vector<8x16xbf16>
    %215 = arith.extf %214 : vector<8x16xbf16> to vector<8x16xf32>
    %216 = arith.addf %209, %215 : vector<8x16xf32>
    %217 = arith.addf %210, %215 : vector<8x16xf32>
    %c34 = arith.constant 34 : index
    %c0_93 = arith.constant 0 : index
    %c0_94 = arith.constant 0 : index
    %218 = vector.load %arg1[%c34, %c0_93, %c0_94] : memref<64x8x16xbf16, #tpu.memory_space<vmem>>, vector<1x8x16xbf16>
    %219 = vector.shape_cast %218 : vector<1x8x16xbf16> to vector<8x16xbf16>
    %cst_95 = arith.constant 0.000000e+00 : bf16
    %220 = vector.broadcast %cst_95 : bf16 to vector<8x16xbf16>
    %221 = arith.maximumf %219, %220 : vector<8x16xbf16>
    %222 = arith.extf %221 : vector<8x16xbf16> to vector<8x16xf32>
    %223 = arith.addf %216, %222 : vector<8x16xf32>
    %224 = arith.addf %202, %222 : vector<8x16xf32>
    %225 = arith.addf %217, %222 : vector<8x16xf32>
    %226 = arith.addf %203, %222 : vector<8x16xf32>
    %c35 = arith.constant 35 : index
    %c0_96 = arith.constant 0 : index
    %c0_97 = arith.constant 0 : index
    %227 = vector.load %arg1[%c35, %c0_96, %c0_97] : memref<64x8x16xbf16, #tpu.memory_space<vmem>>, vector<1x8x16xbf16>
    %228 = vector.shape_cast %227 : vector<1x8x16xbf16> to vector<8x16xbf16>
    %cst_98 = arith.constant 0.000000e+00 : bf16
    %229 = vector.broadcast %cst_98 : bf16 to vector<8x16xbf16>
    %230 = arith.maximumf %228, %229 : vector<8x16xbf16>
    %231 = arith.extf %230 : vector<8x16xbf16> to vector<8x16xf32>
    %232 = arith.addf %223, %231 : vector<8x16xf32>
    %233 = arith.addf %224, %231 : vector<8x16xf32>
    %234 = arith.addf %225, %231 : vector<8x16xf32>
    %235 = arith.addf %226, %231 : vector<8x16xf32>
    %c36 = arith.constant 36 : index
    %c0_99 = arith.constant 0 : index
    %c0_100 = arith.constant 0 : index
    %236 = vector.load %arg1[%c36, %c0_99, %c0_100] : memref<64x8x16xbf16, #tpu.memory_space<vmem>>, vector<1x8x16xbf16>
    %237 = vector.shape_cast %236 : vector<1x8x16xbf16> to vector<8x16xbf16>
    %cst_101 = arith.constant 0.000000e+00 : bf16
    %238 = vector.broadcast %cst_101 : bf16 to vector<8x16xbf16>
    %239 = arith.maximumf %237, %238 : vector<8x16xbf16>
    %240 = arith.extf %239 : vector<8x16xbf16> to vector<8x16xf32>
    %241 = arith.addf %232, %240 : vector<8x16xf32>
    %242 = arith.addf %233, %240 : vector<8x16xf32>
    %243 = arith.addf %234, %240 : vector<8x16xf32>
    %244 = arith.addf %235, %240 : vector<8x16xf32>
    %c37 = arith.constant 37 : index
    %c0_102 = arith.constant 0 : index
    %c0_103 = arith.constant 0 : index
    %245 = vector.load %arg1[%c37, %c0_102, %c0_103] : memref<64x8x16xbf16, #tpu.memory_space<vmem>>, vector<1x8x16xbf16>
    %246 = vector.shape_cast %245 : vector<1x8x16xbf16> to vector<8x16xbf16>
    %cst_104 = arith.constant 0.000000e+00 : bf16
    %247 = vector.broadcast %cst_104 : bf16 to vector<8x16xbf16>
    %248 = arith.maximumf %246, %247 : vector<8x16xbf16>
    %249 = arith.extf %248 : vector<8x16xbf16> to vector<8x16xf32>
    %250 = arith.addf %242, %249 : vector<8x16xf32>
    %251 = arith.addf %244, %249 : vector<8x16xf32>
    %c38 = arith.constant 38 : index
    %c0_105 = arith.constant 0 : index
    %c0_106 = arith.constant 0 : index
    %252 = vector.load %arg1[%c38, %c0_105, %c0_106] : memref<64x8x16xbf16, #tpu.memory_space<vmem>>, vector<1x8x16xbf16>
    %253 = vector.shape_cast %252 : vector<1x8x16xbf16> to vector<8x16xbf16>
    %cst_107 = arith.constant 0.000000e+00 : bf16
    %254 = vector.broadcast %cst_107 : bf16 to vector<8x16xbf16>
    %255 = arith.maximumf %253, %254 : vector<8x16xbf16>
    %256 = arith.extf %255 : vector<8x16xbf16> to vector<8x16xf32>
    %257 = arith.addf %250, %256 : vector<8x16xf32>
    %258 = arith.addf %251, %256 : vector<8x16xf32>
    %c40 = arith.constant 40 : index
    %c0_108 = arith.constant 0 : index
    %c0_109 = arith.constant 0 : index
    %259 = vector.load %arg1[%c40, %c0_108, %c0_109] : memref<64x8x16xbf16, #tpu.memory_space<vmem>>, vector<1x8x16xbf16>
    %260 = vector.shape_cast %259 : vector<1x8x16xbf16> to vector<8x16xbf16>
    %cst_110 = arith.constant 0.000000e+00 : bf16
    %261 = vector.broadcast %cst_110 : bf16 to vector<8x16xbf16>
    %262 = arith.maximumf %260, %261 : vector<8x16xbf16>
    %263 = arith.extf %262 : vector<8x16xbf16> to vector<8x16xf32>
    %264 = arith.addf %243, %263 : vector<8x16xf32>
    %c41 = arith.constant 41 : index
    %c0_111 = arith.constant 0 : index
    %c0_112 = arith.constant 0 : index
    %265 = vector.load %arg1[%c41, %c0_111, %c0_112] : memref<64x8x16xbf16, #tpu.memory_space<vmem>>, vector<1x8x16xbf16>
    %266 = vector.shape_cast %265 : vector<1x8x16xbf16> to vector<8x16xbf16>
    %cst_113 = arith.constant 0.000000e+00 : bf16
    %267 = vector.broadcast %cst_113 : bf16 to vector<8x16xbf16>
    %268 = arith.maximumf %266, %267 : vector<8x16xbf16>
    %269 = arith.extf %268 : vector<8x16xbf16> to vector<8x16xf32>
    %270 = arith.addf %264, %269 : vector<8x16xf32>
    %c42 = arith.constant 42 : index
    %c0_114 = arith.constant 0 : index
    %c0_115 = arith.constant 0 : index
    %271 = vector.load %arg1[%c42, %c0_114, %c0_115] : memref<64x8x16xbf16, #tpu.memory_space<vmem>>, vector<1x8x16xbf16>
    %272 = vector.shape_cast %271 : vector<1x8x16xbf16> to vector<8x16xbf16>
    %cst_116 = arith.constant 0.000000e+00 : bf16
    %273 = vector.broadcast %cst_116 : bf16 to vector<8x16xbf16>
    %274 = arith.maximumf %272, %273 : vector<8x16xbf16>
    %275 = arith.extf %274 : vector<8x16xbf16> to vector<8x16xf32>
    %276 = arith.addf %270, %275 : vector<8x16xf32>
    %277 = arith.addf %258, %275 : vector<8x16xf32>
    %c43 = arith.constant 43 : index
    %c0_117 = arith.constant 0 : index
    %c0_118 = arith.constant 0 : index
    %278 = vector.load %arg1[%c43, %c0_117, %c0_118] : memref<64x8x16xbf16, #tpu.memory_space<vmem>>, vector<1x8x16xbf16>
    %279 = vector.shape_cast %278 : vector<1x8x16xbf16> to vector<8x16xbf16>
    %cst_119 = arith.constant 0.000000e+00 : bf16
    %280 = vector.broadcast %cst_119 : bf16 to vector<8x16xbf16>
    %281 = arith.maximumf %279, %280 : vector<8x16xbf16>
    %282 = arith.extf %281 : vector<8x16xbf16> to vector<8x16xf32>
    %283 = arith.addf %276, %282 : vector<8x16xf32>
    %284 = arith.addf %277, %282 : vector<8x16xf32>
    %c44 = arith.constant 44 : index
    %c0_120 = arith.constant 0 : index
    %c0_121 = arith.constant 0 : index
    %285 = vector.load %arg1[%c44, %c0_120, %c0_121] : memref<64x8x16xbf16, #tpu.memory_space<vmem>>, vector<1x8x16xbf16>
    %286 = vector.shape_cast %285 : vector<1x8x16xbf16> to vector<8x16xbf16>
    %cst_122 = arith.constant 0.000000e+00 : bf16
    %287 = vector.broadcast %cst_122 : bf16 to vector<8x16xbf16>
    %288 = arith.maximumf %286, %287 : vector<8x16xbf16>
    %289 = arith.extf %288 : vector<8x16xbf16> to vector<8x16xf32>
    %290 = arith.addf %283, %289 : vector<8x16xf32>
    %291 = arith.addf %284, %289 : vector<8x16xf32>
    %c45 = arith.constant 45 : index
    %c0_123 = arith.constant 0 : index
    %c0_124 = arith.constant 0 : index
    %292 = vector.load %arg1[%c45, %c0_123, %c0_124] : memref<64x8x16xbf16, #tpu.memory_space<vmem>>, vector<1x8x16xbf16>
    %293 = vector.shape_cast %292 : vector<1x8x16xbf16> to vector<8x16xbf16>
    %cst_125 = arith.constant 0.000000e+00 : bf16
    %294 = vector.broadcast %cst_125 : bf16 to vector<8x16xbf16>
    %295 = arith.maximumf %293, %294 : vector<8x16xbf16>
    %296 = arith.extf %295 : vector<8x16xbf16> to vector<8x16xf32>
    %297 = arith.addf %291, %296 : vector<8x16xf32>
    %c46 = arith.constant 46 : index
    %c0_126 = arith.constant 0 : index
    %c0_127 = arith.constant 0 : index
    %298 = vector.load %arg1[%c46, %c0_126, %c0_127] : memref<64x8x16xbf16, #tpu.memory_space<vmem>>, vector<1x8x16xbf16>
    %299 = vector.shape_cast %298 : vector<1x8x16xbf16> to vector<8x16xbf16>
    %cst_128 = arith.constant 0.000000e+00 : bf16
    %300 = vector.broadcast %cst_128 : bf16 to vector<8x16xbf16>
    %301 = arith.maximumf %299, %300 : vector<8x16xbf16>
    %302 = arith.extf %301 : vector<8x16xbf16> to vector<8x16xf32>
    %303 = arith.addf %297, %302 : vector<8x16xf32>
    %c48 = arith.constant 48 : index
    %c0_129 = arith.constant 0 : index
    %c0_130 = arith.constant 0 : index
    %304 = vector.load %arg1[%c48, %c0_129, %c0_130] : memref<64x8x16xbf16, #tpu.memory_space<vmem>>, vector<1x8x16xbf16>
    %305 = vector.shape_cast %304 : vector<1x8x16xbf16> to vector<8x16xbf16>
    %cst_131 = arith.constant 0.000000e+00 : bf16
    %306 = vector.broadcast %cst_131 : bf16 to vector<8x16xbf16>
    %307 = arith.maximumf %305, %306 : vector<8x16xbf16>
    %308 = arith.extf %307 : vector<8x16xbf16> to vector<8x16xf32>
    %309 = arith.addf %290, %308 : vector<8x16xf32>
    %c49 = arith.constant 49 : index
    %c0_132 = arith.constant 0 : index
    %c0_133 = arith.constant 0 : index
    %310 = vector.load %arg1[%c49, %c0_132, %c0_133] : memref<64x8x16xbf16, #tpu.memory_space<vmem>>, vector<1x8x16xbf16>
    %311 = vector.shape_cast %310 : vector<1x8x16xbf16> to vector<8x16xbf16>
    %cst_134 = arith.constant 0.000000e+00 : bf16
    %312 = vector.broadcast %cst_134 : bf16 to vector<8x16xbf16>
    %313 = arith.maximumf %311, %312 : vector<8x16xbf16>
    %314 = arith.extf %313 : vector<8x16xbf16> to vector<8x16xf32>
    %315 = arith.addf %309, %314 : vector<8x16xf32>
    %c50 = arith.constant 50 : index
    %c0_135 = arith.constant 0 : index
    %c0_136 = arith.constant 0 : index
    %316 = vector.load %arg1[%c50, %c0_135, %c0_136] : memref<64x8x16xbf16, #tpu.memory_space<vmem>>, vector<1x8x16xbf16>
    %317 = vector.shape_cast %316 : vector<1x8x16xbf16> to vector<8x16xbf16>
    %cst_137 = arith.constant 0.000000e+00 : bf16
    %318 = vector.broadcast %cst_137 : bf16 to vector<8x16xbf16>
    %319 = arith.maximumf %317, %318 : vector<8x16xbf16>
    %320 = arith.extf %319 : vector<8x16xbf16> to vector<8x16xf32>
    %321 = arith.addf %315, %320 : vector<8x16xf32>
    %322 = arith.addf %303, %320 : vector<8x16xf32>
    %c51 = arith.constant 51 : index
    %c0_138 = arith.constant 0 : index
    %c0_139 = arith.constant 0 : index
    %323 = vector.load %arg1[%c51, %c0_138, %c0_139] : memref<64x8x16xbf16, #tpu.memory_space<vmem>>, vector<1x8x16xbf16>
    %324 = vector.shape_cast %323 : vector<1x8x16xbf16> to vector<8x16xbf16>
    %cst_140 = arith.constant 0.000000e+00 : bf16
    %325 = vector.broadcast %cst_140 : bf16 to vector<8x16xbf16>
    %326 = arith.maximumf %324, %325 : vector<8x16xbf16>
    %327 = arith.extf %326 : vector<8x16xbf16> to vector<8x16xf32>
    %328 = arith.addf %321, %327 : vector<8x16xf32>
    %329 = arith.addf %322, %327 : vector<8x16xf32>
    %c52 = arith.constant 52 : index
    %c0_141 = arith.constant 0 : index
    %c0_142 = arith.constant 0 : index
    %330 = vector.load %arg1[%c52, %c0_141, %c0_142] : memref<64x8x16xbf16, #tpu.memory_space<vmem>>, vector<1x8x16xbf16>
    %331 = vector.shape_cast %330 : vector<1x8x16xbf16> to vector<8x16xbf16>
    %cst_143 = arith.constant 0.000000e+00 : bf16
    %332 = vector.broadcast %cst_143 : bf16 to vector<8x16xbf16>
    %333 = arith.maximumf %331, %332 : vector<8x16xbf16>
    %334 = arith.extf %333 : vector<8x16xbf16> to vector<8x16xf32>
    %335 = arith.addf %328, %334 : vector<8x16xf32>
    %336 = arith.addf %329, %334 : vector<8x16xf32>
    %c53 = arith.constant 53 : index
    %c0_144 = arith.constant 0 : index
    %c0_145 = arith.constant 0 : index
    %337 = vector.load %arg1[%c53, %c0_144, %c0_145] : memref<64x8x16xbf16, #tpu.memory_space<vmem>>, vector<1x8x16xbf16>
    %338 = vector.shape_cast %337 : vector<1x8x16xbf16> to vector<8x16xbf16>
    %cst_146 = arith.constant 0.000000e+00 : bf16
    %339 = vector.broadcast %cst_146 : bf16 to vector<8x16xbf16>
    %340 = arith.maximumf %338, %339 : vector<8x16xbf16>
    %341 = arith.extf %340 : vector<8x16xbf16> to vector<8x16xf32>
    %342 = arith.addf %336, %341 : vector<8x16xf32>
    %c54 = arith.constant 54 : index
    %c0_147 = arith.constant 0 : index
    %c0_148 = arith.constant 0 : index
    %343 = vector.load %arg1[%c54, %c0_147, %c0_148] : memref<64x8x16xbf16, #tpu.memory_space<vmem>>, vector<1x8x16xbf16>
    %344 = vector.shape_cast %343 : vector<1x8x16xbf16> to vector<8x16xbf16>
    %cst_149 = arith.constant 0.000000e+00 : bf16
    %345 = vector.broadcast %cst_149 : bf16 to vector<8x16xbf16>
    %346 = arith.maximumf %344, %345 : vector<8x16xbf16>
    %347 = arith.extf %346 : vector<8x16xbf16> to vector<8x16xf32>
    %348 = arith.addf %342, %347 : vector<8x16xf32>
    %349 = arith.truncf %241 : vector<8x16xf32> to vector<8x16xbf16>
    %c0_150 = arith.constant 0 : index
    %c0_151 = arith.constant 0 : index
    %350 = vector.load %arg2[%c0_150, %c0_151] : memref<16x128xbf16, #tpu.memory_space<vmem>>, vector<16x128xbf16>
    %cst_152 = arith.constant dense<0.000000e+00> : vector<8x128xf32>
    %351 = tpu.matmul %349, %350, %cst_152 {dimension_numbers = #tpu.dot_dimension_numbers<[1], [0], [0], [1], [0, 0, 1, 1], [], []>} : vector<8x16xbf16>, vector<16x128xbf16>, vector<8x128xf32> -> vector<8x128xf32>
    %c0_153 = arith.constant 0 : index
    %c0_154 = arith.constant 0 : index
    %352 = vector.load %arg3[%c0_153, %c0_154] : memref<1x128xf32, #tpu.memory_space<vmem>>, vector<1x128xf32>
    %353 = vector.broadcast %352 : vector<1x128xf32> to vector<8x128xf32>
    %354 = arith.addf %351, %353 : vector<8x128xf32>
    %cst_155 = arith.constant 0.000000e+00 : f32
    %355 = vector.broadcast %cst_155 : f32 to vector<8x128xf32>
    %356 = arith.maximumf %354, %355 : vector<8x128xf32>
    %357 = arith.truncf %257 : vector<8x16xf32> to vector<8x16xbf16>
    %c0_156 = arith.constant 0 : index
    %c0_157 = arith.constant 0 : index
    %358 = vector.load %arg2[%c0_156, %c0_157] : memref<16x128xbf16, #tpu.memory_space<vmem>>, vector<16x128xbf16>
    %cst_158 = arith.constant dense<0.000000e+00> : vector<8x128xf32>
    %359 = tpu.matmul %357, %358, %cst_158 {dimension_numbers = #tpu.dot_dimension_numbers<[1], [0], [0], [1], [0, 0, 1, 1], [], []>} : vector<8x16xbf16>, vector<16x128xbf16>, vector<8x128xf32> -> vector<8x128xf32>
    %c0_159 = arith.constant 0 : index
    %c0_160 = arith.constant 0 : index
    %360 = vector.load %arg3[%c0_159, %c0_160] : memref<1x128xf32, #tpu.memory_space<vmem>>, vector<1x128xf32>
    %361 = vector.broadcast %360 : vector<1x128xf32> to vector<8x128xf32>
    %362 = arith.addf %359, %361 : vector<8x128xf32>
    %cst_161 = arith.constant 0.000000e+00 : f32
    %363 = vector.broadcast %cst_161 : f32 to vector<8x128xf32>
    %364 = arith.maximumf %362, %363 : vector<8x128xf32>
    %365 = arith.truncf %335 : vector<8x16xf32> to vector<8x16xbf16>
    %c0_162 = arith.constant 0 : index
    %c0_163 = arith.constant 0 : index
    %366 = vector.load %arg2[%c0_162, %c0_163] : memref<16x128xbf16, #tpu.memory_space<vmem>>, vector<16x128xbf16>
    %cst_164 = arith.constant dense<0.000000e+00> : vector<8x128xf32>
    %367 = tpu.matmul %365, %366, %cst_164 {dimension_numbers = #tpu.dot_dimension_numbers<[1], [0], [0], [1], [0, 0, 1, 1], [], []>} : vector<8x16xbf16>, vector<16x128xbf16>, vector<8x128xf32> -> vector<8x128xf32>
    %c0_165 = arith.constant 0 : index
    %c0_166 = arith.constant 0 : index
    %368 = vector.load %arg3[%c0_165, %c0_166] : memref<1x128xf32, #tpu.memory_space<vmem>>, vector<1x128xf32>
    %369 = vector.broadcast %368 : vector<1x128xf32> to vector<8x128xf32>
    %370 = arith.addf %367, %369 : vector<8x128xf32>
    %cst_167 = arith.constant 0.000000e+00 : f32
    %371 = vector.broadcast %cst_167 : f32 to vector<8x128xf32>
    %372 = arith.maximumf %370, %371 : vector<8x128xf32>
    %373 = arith.truncf %348 : vector<8x16xf32> to vector<8x16xbf16>
    %c0_168 = arith.constant 0 : index
    %c0_169 = arith.constant 0 : index
    %374 = vector.load %arg2[%c0_168, %c0_169] : memref<16x128xbf16, #tpu.memory_space<vmem>>, vector<16x128xbf16>
    %cst_170 = arith.constant dense<0.000000e+00> : vector<8x128xf32>
    %375 = tpu.matmul %373, %374, %cst_170 {dimension_numbers = #tpu.dot_dimension_numbers<[1], [0], [0], [1], [0, 0, 1, 1], [], []>} : vector<8x16xbf16>, vector<16x128xbf16>, vector<8x128xf32> -> vector<8x128xf32>
    %c0_171 = arith.constant 0 : index
    %c0_172 = arith.constant 0 : index
    %376 = vector.load %arg3[%c0_171, %c0_172] : memref<1x128xf32, #tpu.memory_space<vmem>>, vector<1x128xf32>
    %377 = vector.broadcast %376 : vector<1x128xf32> to vector<8x128xf32>
    %378 = arith.addf %375, %377 : vector<8x128xf32>
    %cst_173 = arith.constant 0.000000e+00 : f32
    %379 = vector.broadcast %cst_173 : f32 to vector<8x128xf32>
    %380 = arith.maximumf %378, %379 : vector<8x128xf32>
    %cst_174 = arith.constant 0.000000e+00 : f32
    %381 = vector.broadcast %cst_174 : f32 to vector<8x768xf32>
    %382 = arith.truncf %356 : vector<8x128xf32> to vector<8x128xbf16>
    %c0_175 = arith.constant 0 : index
    %c0_176 = arith.constant 0 : index
    %c0_177 = arith.constant 0 : index
    %383 = vector.load %arg4[%c0_175, %c0_176, %c0_177] : memref<4x128x768xbf16, #tpu.memory_space<vmem>>, vector<1x128x768xbf16>
    %384 = vector.shape_cast %383 : vector<1x128x768xbf16> to vector<128x768xbf16>
    %cst_178 = arith.constant dense<0.000000e+00> : vector<8x768xf32>
    %385 = tpu.matmul %382, %384, %cst_178 {dimension_numbers = #tpu.dot_dimension_numbers<[1], [0], [0], [1], [0, 0, 1, 1], [], []>} : vector<8x128xbf16>, vector<128x768xbf16>, vector<8x768xf32> -> vector<8x768xf32>
    %386 = arith.addf %381, %385 : vector<8x768xf32>
    %387 = arith.truncf %364 : vector<8x128xf32> to vector<8x128xbf16>
    %c1_179 = arith.constant 1 : index
    %c0_180 = arith.constant 0 : index
    %c0_181 = arith.constant 0 : index
    %388 = vector.load %arg4[%c1_179, %c0_180, %c0_181] : memref<4x128x768xbf16, #tpu.memory_space<vmem>>, vector<1x128x768xbf16>
    %389 = vector.shape_cast %388 : vector<1x128x768xbf16> to vector<128x768xbf16>
    %cst_182 = arith.constant dense<0.000000e+00> : vector<8x768xf32>
    %390 = tpu.matmul %387, %389, %cst_182 {dimension_numbers = #tpu.dot_dimension_numbers<[1], [0], [0], [1], [0, 0, 1, 1], [], []>} : vector<8x128xbf16>, vector<128x768xbf16>, vector<8x768xf32> -> vector<8x768xf32>
    %391 = arith.addf %386, %390 : vector<8x768xf32>
    %392 = arith.truncf %372 : vector<8x128xf32> to vector<8x128xbf16>
    %c2_183 = arith.constant 2 : index
    %c0_184 = arith.constant 0 : index
    %c0_185 = arith.constant 0 : index
    %393 = vector.load %arg4[%c2_183, %c0_184, %c0_185] : memref<4x128x768xbf16, #tpu.memory_space<vmem>>, vector<1x128x768xbf16>
    %394 = vector.shape_cast %393 : vector<1x128x768xbf16> to vector<128x768xbf16>
    %cst_186 = arith.constant dense<0.000000e+00> : vector<8x768xf32>
    %395 = tpu.matmul %392, %394, %cst_186 {dimension_numbers = #tpu.dot_dimension_numbers<[1], [0], [0], [1], [0, 0, 1, 1], [], []>} : vector<8x128xbf16>, vector<128x768xbf16>, vector<8x768xf32> -> vector<8x768xf32>
    %396 = arith.addf %391, %395 : vector<8x768xf32>
    %397 = arith.truncf %380 : vector<8x128xf32> to vector<8x128xbf16>
    %c3_187 = arith.constant 3 : index
    %c0_188 = arith.constant 0 : index
    %c0_189 = arith.constant 0 : index
    %398 = vector.load %arg4[%c3_187, %c0_188, %c0_189] : memref<4x128x768xbf16, #tpu.memory_space<vmem>>, vector<1x128x768xbf16>
    %399 = vector.shape_cast %398 : vector<1x128x768xbf16> to vector<128x768xbf16>
    %cst_190 = arith.constant dense<0.000000e+00> : vector<8x768xf32>
    %400 = tpu.matmul %397, %399, %cst_190 {dimension_numbers = #tpu.dot_dimension_numbers<[1], [0], [0], [1], [0, 0, 1, 1], [], []>} : vector<8x128xbf16>, vector<128x768xbf16>, vector<8x768xf32> -> vector<8x768xf32>
    %401 = arith.addf %396, %400 : vector<8x768xf32>
    %c0_191 = arith.constant 0 : index
    %c0_192 = arith.constant 0 : index
    %402 = vector.load %arg5[%c0_191, %c0_192] : memref<1x768xf32, #tpu.memory_space<vmem>>, vector<1x768xf32>
    %403 = vector.broadcast %402 : vector<1x768xf32> to vector<8x768xf32>
    %404 = arith.addf %401, %403 : vector<8x768xf32>
    %cst_193 = arith.constant 0.000000e+00 : f32
    %405 = vector.broadcast %cst_193 : f32 to vector<8x768xf32>
    %406 = arith.maximumf %404, %405 : vector<8x768xf32>
    %407 = arith.truncf %406 : vector<8x768xf32> to vector<8x768xbf16>
    %c0_194 = arith.constant 0 : index
    %c0_195 = arith.constant 0 : index
    %408 = vector.load %arg6[%c0_194, %c0_195] : memref<768x128xbf16, #tpu.memory_space<vmem>>, vector<768x128xbf16>
    %cst_196 = arith.constant dense<0.000000e+00> : vector<8x128xf32>
    %409 = tpu.matmul %407, %408, %cst_196 {dimension_numbers = #tpu.dot_dimension_numbers<[1], [0], [0], [1], [0, 0, 1, 1], [], []>} : vector<8x768xbf16>, vector<768x128xbf16>, vector<8x128xf32> -> vector<8x128xf32>
    %c0_197 = arith.constant 0 : index
    %c0_198 = arith.constant 0 : index
    %410 = vector.load %arg7[%c0_197, %c0_198] : memref<1x128xf32, #tpu.memory_space<vmem>>, vector<1x128xf32>
    %411 = vector.broadcast %410 : vector<1x128xf32> to vector<8x128xf32>
    %412 = arith.addf %409, %411 : vector<8x128xf32>
    %c0_199 = arith.constant 0 : index
    %c0_200 = arith.constant 0 : index
    %413 = vector.load %arg8[%c0_199, %c0_200] : memref<8x128xf32, #tpu.memory_space<vmem>>, vector<8x128xf32>
    tpu.vector_store %arg8[%c0_199, %c0_200], %412 {strides = array<i32>} : memref<8x128xf32, #tpu.memory_space<vmem>>, vector<8x128xf32>,
    return
  }
  func.func @transform_0(%arg0: i32) -> (i32, i32, i32) {
    %c0_i32 = arith.constant 0 : i32
    %c0_i32_0 = arith.constant 0 : i32
    %c0_i32_1 = arith.constant 0 : i32
    return %c0_i32, %arg0, %c0_i32_0 : i32, i32, i32
  }
  func.func @transform_1(%arg0: i32) -> (i32, i32) {
    %c0_i32 = arith.constant 0 : i32
    %c0_i32_0 = arith.constant 0 : i32
    %c0_i32_1 = arith.constant 0 : i32
    return %c0_i32, %c0_i32_0 : i32, i32
  }
  func.func @transform_2(%arg0: i32) -> (i32, i32) {
    %c0_i32 = arith.constant 0 : i32
    %c0_i32_0 = arith.constant 0 : i32
    %c0_i32_1 = arith.constant 0 : i32
    return %c0_i32, %c0_i32_0 : i32, i32
  }
  func.func @transform_3(%arg0: i32) -> (i32, i32, i32) {
    %c0_i32 = arith.constant 0 : i32
    %c0_i32_0 = arith.constant 0 : i32
    %c0_i32_1 = arith.constant 0 : i32
    %c0_i32_2 = arith.constant 0 : i32
    return %c0_i32, %c0_i32_0, %c0_i32_1 : i32, i32, i32
  }
  func.func @transform_4(%arg0: i32) -> (i32, i32) {
    %c0_i32 = arith.constant 0 : i32
    %c0_i32_0 = arith.constant 0 : i32
    %c0_i32_1 = arith.constant 0 : i32
    return %c0_i32, %c0_i32_0 : i32, i32
  }
  func.func @transform_5(%arg0: i32) -> (i32, i32) {
    %c0_i32 = arith.constant 0 : i32
    %c0_i32_0 = arith.constant 0 : i32
    %c0_i32_1 = arith.constant 0 : i32
    return %c0_i32, %c0_i32_0 : i32, i32
  }
  func.func @transform_6(%arg0: i32) -> (i32, i32) {
    %c0_i32 = arith.constant 0 : i32
    %c0_i32_0 = arith.constant 0 : i32
    %c0_i32_1 = arith.constant 0 : i32
    return %c0_i32, %c0_i32_0 : i32, i32
  }
  func.func @transform_7(%arg0: i32) -> (i32, i32) {
    %c0_i32 = arith.constant 0 : i32
    %c0_i32_0 = arith.constant 0 : i32
    return %arg0, %c0_i32 : i32, i32
  }
}

</mosaic_0001>

<llo_original>
// kernel: tpu_custom_call.1
$region0: #{tpu_custom_call.1}
  #allocation0 [shape = 'u32[]', space=smem, size = 0x4, offset = 0x4, fixed_abs, tag = 'smem constant byte address 0x4 - core index']
  #allocation1 [shape = 'u32[144,128]{1,0:T(1,128)}', space=vmem, size = 0x12000, scoped, tag = 'internal scratch']
  %s0 = inlined_call_operand.vmem [shape: bf16[64,8,16], index: 0, kind: input, shape index: {}]
  %s1 = inlined_call_operand.vmem [shape: bf16[16,128], index: 1, kind: input, shape index: {}]
  %s2 = inlined_call_operand.vmem [shape: f32[1,128], index: 2, kind: input, shape index: {}]
  %s3 = inlined_call_operand.hbm [shape: bf16[4,128,768], index: 3, kind: input, shape index: {}]
  %s4 = inlined_call_operand.vmem [shape: f32[1,768], index: 4, kind: input, shape index: {}]
  %s5 = inlined_call_operand.hbm [shape: bf16[768,128], index: 5, kind: input, shape index: {}]
  %s6 = inlined_call_operand.vmem [shape: f32[1,128], index: 6, kind: input, shape index: {}]
  %s7 = inlined_call_operand.hbm [shape: f32[8,128], index: 7, kind: output, shape index: {}]
  %s8 = sld [smem:[#allocation0]]
  $region46: #{tpu_custom_call.1} parent=0
    _
  %s10 = ssub.s32 1, %s8
  %s11 = scalar_select 0, %s10, %s8
  $region1: #{tpu_custom_call.1} parent=0
    #allocation2 [shape = 'u8[786432]{0}', space=vmem, size = 0xc0000, scoped, tag = 'input window, operand 3, single buffered']
    #allocation3 [shape = 's32[1]{0}', space=sflag, size = 0x4, scoped, tag = 'scoped memory for tpu_custom_call.1']
    #allocation4 [shape = 's32[1]{0}', space=sflag, size = 0x4, scoped, tag = 'scoped memory for tpu_custom_call.1']
    #allocation5 [shape = 'u8[196608]{0}', space=vmem, size = 0x30000, scoped, tag = 'input window, operand 5, single buffered']
    #allocation6 [shape = 's32[1]{0}', space=sflag, size = 0x4, scoped, tag = 'scoped memory for tpu_custom_call.1']
    #allocation7 [shape = 'u8[4096]{0}', space=vmem, size = 0x1000, scoped, tag = 'output window, operand 0, single buffered']
    %12 = vsyncpa [#allocation3], 0
    %13 = vsyncpa [#allocation6], 0
    %14 = vsyncpa [#allocation4], 0
    // Predicated region
    $region2: #{tpu_custom_call.1} parent=1 // pred_check
      _
    $region3: #{tpu_custom_call.1} parent=1 // pred_check_branch
      %16 = sbr.rel (0) target = $region5
    $region4: #{tpu_custom_call.1} parent=1 // pred_region
      _
    $region5: #{tpu_custom_call.1} parent=1 // pred_fallthru
      _
    // Predicated region
    $region6: #{tpu_custom_call.1} parent=1 // pred_check
      _
    $region7: #{tpu_custom_call.1} parent=1 // pred_check_branch
      %18 = sbr.rel (0) target = $region9
    $region8: #{tpu_custom_call.1} parent=1 // pred_region
      _
    $region9: #{tpu_custom_call.1} parent=1 // pred_fallthru
      _
    // Predicated region
    $region10: #{tpu_custom_call.1} parent=1 // pred_check
      _
    $region11: #{tpu_custom_call.1} parent=1 // pred_check_branch
      %20 = sbr.rel (0) target = $region13
    $region12: #{tpu_custom_call.1} parent=1 // pred_region
      _
    $region13: #{tpu_custom_call.1} parent=1 // pred_fallthru
      _
    // Predicated region
    $region14: #{tpu_custom_call.1} parent=1 // pred_check
      _
    $region15: #{tpu_custom_call.1} parent=1 // pred_check_branch
      %22 = sbr.rel (0) target = $region17
    $region16: #{tpu_custom_call.1} parent=1 // pred_region
      %s24 = ssub.s32 24576, 24576
      %25 = vsyncadd [#allocation3], %s24
      %s26 = sshll.u32 [#allocation2], 4
      %s27 = int_to_ptr.vmem [resolvable:$true] %s26
      %32 = dma.hbm_to_vmem [thread:$0]  %s3, 24576, %s27, [#allocation3], 384, 384, 24
    $region17: #{tpu_custom_call.1} parent=1 // pred_fallthru
      _
    // Predicated region
    $region18: #{tpu_custom_call.1} parent=1 // pred_check
      _
    $region19: #{tpu_custom_call.1} parent=1 // pred_check_branch
      %34 = sbr.rel (0) target = $region21
    $region20: #{tpu_custom_call.1} parent=1 // pred_region
      _
    $region21: #{tpu_custom_call.1} parent=1 // pred_fallthru
      _
    // Predicated region
    $region22: #{tpu_custom_call.1} parent=1 // pred_check
      _
    $region23: #{tpu_custom_call.1} parent=1 // pred_check_branch
      %36 = sbr.rel (0) target = $region25
    $region24: #{tpu_custom_call.1} parent=1 // pred_region
      %s38 = ssub.s32 6144, 6144
      %39 = vsyncadd [#allocation6], %s38
      %s40 = sshll.u32 [#allocation5], 4
      %s41 = int_to_ptr.vmem [resolvable:$true] %s40
      %46 = dma.hbm_to_vmem [thread:$0]  %s5, 6144, %s41, [#allocation6], 64, 64, 4
    $region25: #{tpu_custom_call.1} parent=1 // pred_fallthru
      _
    // Predicated region
    $region26: #{tpu_custom_call.1} parent=1 // pred_check
      _
    $region27: #{tpu_custom_call.1} parent=1 // pred_check_branch
      %48 = sbr.rel (0) target = $region29
    $region28: #{tpu_custom_call.1} parent=1 // pred_region
      _
    $region29: #{tpu_custom_call.1} parent=1 // pred_fallthru
      _
    // Predicated region
    $region30: #{tpu_custom_call.1} parent=1 // pred_check
      _
    $region31: #{tpu_custom_call.1} parent=1 // pred_check_branch
      %50 = sbr.rel (0) target = $region33
    $region32: #{tpu_custom_call.1} parent=1 // pred_region
      %51 = dma.done [#allocation3], 24576
    $region33: #{tpu_custom_call.1} parent=1 // pred_fallthru
      _
    // Predicated region
    $region34: #{tpu_custom_call.1} parent=1 // pred_check
      _
    $region35: #{tpu_custom_call.1} parent=1 // pred_check_branch
      %53 = sbr.rel (0) target = $region37
    $region36: #{tpu_custom_call.1} parent=1 // pred_region
      %54 = dma.done [#allocation6], 6144
    $region37: #{tpu_custom_call.1} parent=1 // pred_fallthru
      _
    %v56 = vld [vmem:[%s0] sm:$0xf]
    %v57 = vmax.bf16 %v56, 0
    %v58 = vunpack.c.l.bf16 %v57
    %v59 = vadd.f32 %v58, 0.0
    %s60 = scalar_lea.vmem %s0, 4
    %v61 = vld [vmem:[%s60] sm:$0xf]
    %v62 = vmax.bf16 %v61, 0
    %v63 = vunpack.c.l.bf16 %v62
    %v64 = vadd.f32 %v59, %v63
    %s65 = scalar_lea.vmem %s0, 8
    %v66 = vld [vmem:[%s65] sm:$0xf]
    %v67 = vmax.bf16 %v66, 0
    %v68 = vunpack.c.l.bf16 %v67
    %v69 = vadd.f32 %v64, %v68
    %v70 = vadd.f32 %v68, 0.0
    %s71 = scalar_lea.vmem %s0, 12
    %v72 = vld [vmem:[%s71] sm:$0xf]
    %v73 = vmax.bf16 %v72, 0
    %v74 = vunpack.c.l.bf16 %v73
    %v75 = vadd.f32 %v69, %v74
    %v76 = vadd.f32 %v70, %v74
    %s77 = scalar_lea.vmem %s0, 16
    %v78 = vld [vmem:[%s77] sm:$0xf]
    %v79 = vmax.bf16 %v78, 0
    %v80 = vunpack.c.l.bf16 %v79
    %v81 = vadd.f32 %v75, %v80
    %v82 = vadd.f32 %v76, %v80
    %s83 = scalar_lea.vmem %s0, 20
    %v84 = vld [vmem:[%s83] sm:$0xf]
    %v85 = vmax.bf16 %v84, 0
    %v86 = vunpack.c.l.bf16 %v85
    %v87 = vadd.f32 %v82, %v86
    %s88 = scalar_lea.vmem %s0, 24
    %v89 = vld [vmem:[%s88] sm:$0xf]
    %v90 = vmax.bf16 %v89, 0
    %v91 = vunpack.c.l.bf16 %v90
    %v92 = vadd.f32 %v87, %v91
    %s93 = scalar_lea.vmem %s0, 32
    %v94 = vld [vmem:[%s93] sm:$0xf]
    %v95 = vmax.bf16 %v94, 0
    %v96 = vunpack.c.l.bf16 %v95
    %v97 = vadd.f32 %v81, %v96
    %s98 = scalar_lea.vmem %s0, 36
    %v99 = vld [vmem:[%s98] sm:$0xf]
    %v100 = vmax.bf16 %v99, 0
    %v101 = vunpack.c.l.bf16 %v100
    %v102 = vadd.f32 %v97, %v101
    %s103 = scalar_lea.vmem %s0, 40
    %v104 = vld [vmem:[%s103] sm:$0xf]
    %v105 = vmax.bf16 %v104, 0
    %v106 = vunpack.c.l.bf16 %v105
    %v107 = vadd.f32 %v102, %v106
    %v108 = vadd.f32 %v92, %v106
    %s109 = scalar_lea.vmem %s0, 44
    %v110 = vld [vmem:[%s109] sm:$0xf]
    %v111 = vmax.bf16 %v110, 0
    %v112 = vunpack.c.l.bf16 %v111
    %v113 = vadd.f32 %v107, %v112
    %v114 = vadd.f32 %v108, %v112
    %s115 = scalar_lea.vmem %s0, 48
    %v116 = vld [vmem:[%s115] sm:$0xf]
    %v117 = vmax.bf16 %v116, 0
    %v118 = vunpack.c.l.bf16 %v117
    %v119 = vadd.f32 %v113, %v118
    %v120 = vadd.f32 %v114, %v118
    %s121 = scalar_lea.vmem %s0, 52
    %v122 = vld [vmem:[%s121] sm:$0xf]
    %v123 = vmax.bf16 %v122, 0
    %v124 = vunpack.c.l.bf16 %v123
    %v125 = vadd.f32 %v120, %v124
    %s126 = scalar_lea.vmem %s0, 56
    %v127 = vld [vmem:[%s126] sm:$0xf]
    %v128 = vmax.bf16 %v127, 0
    %v129 = vunpack.c.l.bf16 %v128
    %v130 = vadd.f32 %v125, %v129
    %s131 = scalar_lea.vmem %s0, 64
    %v132 = vld [vmem:[%s131] sm:$0xf]
    %v133 = vmax.bf16 %v132, 0
    %v134 = vunpack.c.l.bf16 %v133
    %v135 = vadd.f32 %v119, %v134
    %v136 = vadd.f32 %v134, 0.0
    %s137 = scalar_lea.vmem %s0, 68
    %v138 = vld [vmem:[%s137] sm:$0xf]
    %v139 = vmax.bf16 %v138, 0
    %v140 = vunpack.c.l.bf16 %v139
    %v141 = vadd.f32 %v135, %v140
    %v142 = vadd.f32 %v136, %v140
    %s143 = scalar_lea.vmem %s0, 72
    %v144 = vld [vmem:[%s143] sm:$0xf]
    %v145 = vmax.bf16 %v144, 0
    %v146 = vunpack.c.l.bf16 %v145
    %v147 = vadd.f32 %v141, %v146
    %v148 = vadd.f32 %v130, %v146
    %v149 = vadd.f32 %v142, %v146
    %v150 = vadd.f32 %v146, 0.0
    %s151 = scalar_lea.vmem %s0, 76
    %v152 = vld [vmem:[%s151] sm:$0xf]
    %v153 = vmax.bf16 %v152, 0
    %v154 = vunpack.c.l.bf16 %v153
    %v155 = vadd.f32 %v147, %v154
    %v156 = vadd.f32 %v148, %v154
    %v157 = vadd.f32 %v149, %v154
    %v158 = vadd.f32 %v150, %v154
    %s159 = scalar_lea.vmem %s0, 80
    %v160 = vld [vmem:[%s159] sm:$0xf]
    %v161 = vmax.bf16 %v160, 0
    %v162 = vunpack.c.l.bf16 %v161
    %v163 = vadd.f32 %v155, %v162
    %v164 = vadd.f32 %v156, %v162
    %v165 = vadd.f32 %v157, %v162
    %v166 = vadd.f32 %v158, %v162
    %s167 = scalar_lea.vmem %s0, 84
    %v168 = vld [vmem:[%s167] sm:$0xf]
    %v169 = vmax.bf16 %v168, 0
    %v170 = vunpack.c.l.bf16 %v169
    %v171 = vadd.f32 %v164, %v170
    %v172 = vadd.f32 %v166, %v170
    %s173 = scalar_lea.vmem %s0, 88
    %v174 = vld [vmem:[%s173] sm:$0xf]
    %v175 = vmax.bf16 %v174, 0
    %v176 = vunpack.c.l.bf16 %v175
    %v177 = vadd.f32 %v171, %v176
    %v178 = vadd.f32 %v172, %v176
    %s179 = scalar_lea.vmem %s0, 96
    %v180 = vld [vmem:[%s179] sm:$0xf]
    %v181 = vmax.bf16 %v180, 0
    %v182 = vunpack.c.l.bf16 %v181
    %v183 = vadd.f32 %v163, %v182
    %v184 = vadd.f32 %v165, %v182
    %s185 = scalar_lea.vmem %s0, 100
    %v186 = vld [vmem:[%s185] sm:$0xf]
    %v187 = vmax.bf16 %v186, 0
    %v188 = vunpack.c.l.bf16 %v187
    %v189 = vadd.f32 %v183, %v188
    %v190 = vadd.f32 %v184, %v188
    %s191 = scalar_lea.vmem %s0, 104
    %v192 = vld [vmem:[%s191] sm:$0xf]
    %v193 = vmax.bf16 %v192, 0
    %v194 = vunpack.c.l.bf16 %v193
    %v195 = vadd.f32 %v189, %v194
    %v196 = vadd.f32 %v177, %v194
    %v197 = vadd.f32 %v190, %v194
    %v198 = vadd.f32 %v178, %v194
    %s199 = scalar_lea.vmem %s0, 108
    %v200 = vld [vmem:[%s199] sm:$0xf]
    %v201 = vmax.bf16 %v200, 0
    %v202 = vunpack.c.l.bf16 %v201
    %v203 = vadd.f32 %v195, %v202
    %v204 = vadd.f32 %v196, %v202
    %v205 = vadd.f32 %v197, %v202
    %v206 = vadd.f32 %v198, %v202
    %s207 = scalar_lea.vmem %s0, 112
    %v208 = vld [vmem:[%s207] sm:$0xf]
    %v209 = vmax.bf16 %v208, 0
    %v210 = vunpack.c.l.bf16 %v209
    %v211 = vadd.f32 %v203, %v210
    %v212 = vadd.f32 %v204, %v210
    %v213 = vadd.f32 %v205, %v210
    %v214 = vadd.f32 %v206, %v210
    %s215 = scalar_lea.vmem %s0, 116
    %v216 = vld [vmem:[%s215] sm:$0xf]
    %v217 = vmax.bf16 %v216, 0
    %v218 = vunpack.c.l.bf16 %v217
    %v219 = vadd.f32 %v212, %v218
    %v220 = vadd.f32 %v214, %v218
    %s221 = scalar_lea.vmem %s0, 120
    %v222 = vld [vmem:[%s221] sm:$0xf]
    %v223 = vmax.bf16 %v222, 0
    %v224 = vunpack.c.l.bf16 %v223
    %v225 = vadd.f32 %v219, %v224
    %v226 = vadd.f32 %v220, %v224
    %s227 = scalar_lea.vmem %s0, 128
    %v228 = vld [vmem:[%s227] sm:$0xf]
    %v229 = vmax.bf16 %v228, 0
    %v230 = vunpack.c.l.bf16 %v229
    %v231 = vadd.f32 %v211, %v230
    %v232 = vadd.f32 %v213, %v230
    %s233 = scalar_lea.vmem %s0, 132
    %v234 = vld [vmem:[%s233] sm:$0xf]
    %v235 = vmax.bf16 %v234, 0
    %v236 = vunpack.c.l.bf16 %v235
    %v237 = vadd.f32 %v231, %v236
    %v238 = vadd.f32 %v232, %v236
    %s239 = scalar_lea.vmem %s0, 136
    %v240 = vld [vmem:[%s239] sm:$0xf]
    %v241 = vmax.bf16 %v240, 0
    %v242 = vunpack.c.l.bf16 %v241
    %v243 = vadd.f32 %v237, %v242
    %v244 = vadd.f32 %v225, %v242
    %v245 = vadd.f32 %v238, %v242
    %v246 = vadd.f32 %v226, %v242
    %s247 = scalar_lea.vmem %s0, 140
    %v248 = vld [vmem:[%s247] sm:$0xf]
    %v249 = vmax.bf16 %v248, 0
    %v250 = vunpack.c.l.bf16 %v249
    %v251 = vadd.f32 %v243, %v250
    %v252 = vadd.f32 %v244, %v250
    %v253 = vadd.f32 %v245, %v250
    %v254 = vadd.f32 %v246, %v250
    %s255 = scalar_lea.vmem %s0, 144
    %v256 = vld [vmem:[%s255] sm:$0xf]
    %v257 = vmax.bf16 %v256, 0
    %v258 = vunpack.c.l.bf16 %v257
    %v259 = vadd.f32 %v251, %v258
    %v260 = vadd.f32 %v252, %v258
    %v261 = vadd.f32 %v253, %v258
    %v262 = vadd.f32 %v254, %v258
    %s263 = scalar_lea.vmem %s0, 148
    %v264 = vld [vmem:[%s263] sm:$0xf]
    %v265 = vmax.bf16 %v264, 0
    %v266 = vunpack.c.l.bf16 %v265
    %v267 = vadd.f32 %v260, %v266
    %v268 = vadd.f32 %v262, %v266
    %s269 = scalar_lea.vmem %s0, 152
    %v270 = vld [vmem:[%s269] sm:$0xf]
    %v271 = vmax.bf16 %v270, 0
    %v272 = vunpack.c.l.bf16 %v271
    %v273 = vadd.f32 %v267, %v272
    %v274 = vadd.f32 %v268, %v272
    %s275 = scalar_lea.vmem %s0, 160
    %v276 = vld [vmem:[%s275] sm:$0xf]
    %v277 = vmax.bf16 %v276, 0
    %v278 = vunpack.c.l.bf16 %v277
    %v279 = vadd.f32 %v261, %v278
    %s280 = scalar_lea.vmem %s0, 164
    %v281 = vld [vmem:[%s280] sm:$0xf]
    %v282 = vmax.bf16 %v281, 0
    %v283 = vunpack.c.l.bf16 %v282
    %v284 = vadd.f32 %v279, %v283
    %s285 = scalar_lea.vmem %s0, 168
    %v286 = vld [vmem:[%s285] sm:$0xf]
    %v287 = vmax.bf16 %v286, 0
    %v288 = vunpack.c.l.bf16 %v287
    %v289 = vadd.f32 %v284, %v288
    %v290 = vadd.f32 %v274, %v288
    %s291 = scalar_lea.vmem %s0, 172
    %v292 = vld [vmem:[%s291] sm:$0xf]
    %v293 = vmax.bf16 %v292, 0
    %v294 = vunpack.c.l.bf16 %v293
    %v295 = vadd.f32 %v289, %v294
    %v296 = vadd.f32 %v290, %v294
    %s297 = scalar_lea.vmem %s0, 176
    %v298 = vld [vmem:[%s297] sm:$0xf]
    %v299 = vmax.bf16 %v298, 0
    %v300 = vunpack.c.l.bf16 %v299
    %v301 = vadd.f32 %v295, %v300
    %v302 = vadd.f32 %v296, %v300
    %s303 = scalar_lea.vmem %s0, 180
    %v304 = vld [vmem:[%s303] sm:$0xf]
    %v305 = vmax.bf16 %v304, 0
    %v306 = vunpack.c.l.bf16 %v305
    %v307 = vadd.f32 %v302, %v306
    %s308 = scalar_lea.vmem %s0, 184
    %v309 = vld [vmem:[%s308] sm:$0xf]
    %v310 = vmax.bf16 %v309, 0
    %v311 = vunpack.c.l.bf16 %v310
    %v312 = vadd.f32 %v307, %v311
    %s313 = scalar_lea.vmem %s0, 192
    %v314 = vld [vmem:[%s313] sm:$0xf]
    %v315 = vmax.bf16 %v314, 0
    %v316 = vunpack.c.l.bf16 %v315
    %v317 = vadd.f32 %v301, %v316
    %s318 = scalar_lea.vmem %s0, 196
    %v319 = vld [vmem:[%s318] sm:$0xf]
    %v320 = vmax.bf16 %v319, 0
    %v321 = vunpack.c.l.bf16 %v320
    %v322 = vadd.f32 %v317, %v321
    %s323 = scalar_lea.vmem %s0, 200
    %v324 = vld [vmem:[%s323] sm:$0xf]
    %v325 = vmax.bf16 %v324, 0
    %v326 = vunpack.c.l.bf16 %v325
    %v327 = vadd.f32 %v322, %v326
    %v328 = vadd.f32 %v312, %v326
    %s329 = scalar_lea.vmem %s0, 204
    %v330 = vld [vmem:[%s329] sm:$0xf]
    %v331 = vmax.bf16 %v330, 0
    %v332 = vunpack.c.l.bf16 %v331
    %v333 = vadd.f32 %v327, %v332
    %v334 = vadd.f32 %v328, %v332
    %s335 = scalar_lea.vmem %s0, 208
    %v336 = vld [vmem:[%s335] sm:$0xf]
    %v337 = vmax.bf16 %v336, 0
    %v338 = vunpack.c.l.bf16 %v337
    %v339 = vadd.f32 %v333, %v338
    %v340 = vadd.f32 %v334, %v338
    %s341 = scalar_lea.vmem %s0, 212
    %v342 = vld [vmem:[%s341] sm:$0xf]
    %v343 = vmax.bf16 %v342, 0
    %v344 = vunpack.c.l.bf16 %v343
    %v345 = vadd.f32 %v340, %v344
    %s346 = scalar_lea.vmem %s0, 216
    %v347 = vld [vmem:[%s346] sm:$0xf]
    %v348 = vmax.bf16 %v347, 0
    %v349 = vunpack.c.l.bf16 %v348
    %v350 = vadd.f32 %v345, %v349
    %v351 = vpack.c.bf16 %v259, %v259
    %v352 = vld [vmem:[%s1] sm:$0xf]
    %v353 = vld [vmem:[%s1 + $0x4] sm:$0xf]
    %v354 = vld [vmem:[%s2] sm:$0x1]
    %v356 = vlaneseq
    %v357 = vshrl.u32 %v356, 7
    %v358 = vsub.s32 0, %v357
    %v359 = vrot.slane %v354, %v358
    %v363 = vunpack.c.l.b16 %v352
    %v364 = vunpack.c.l.b16 %v353
    %v365 = vpack.c.b16 %v364, %v363
    %vm367 = vcmask 130048
    %v369 = vsel %vm367, %v351, 0
    %371 = vmatprep.subr.bf16.mxu0 0
    %372 = vmatpush1.bf16.msra.mxu0 %v365
    %373 = vmatprep.subr.bf16.mxu0 0
    %374 = vmatpush1.bf16.msra.mxu0 0
    %375 = vmatprep.subr.bf16.mxu0 0
    %376 = vmatpush1.bf16.msra.mxu0 0
    %377 = vmatprep.subr.bf16.mxu0 0
    %378 = vmatpush1.bf16.msra.mxu0 0
    %379 = vmatprep.subr.bf16.mxu0 0
    %380 = vmatpush1.bf16.msra.mxu0 0
    %381 = vmatprep.subr.bf16.mxu0 0
    %382 = vmatpush1.bf16.msra.mxu0 0
    %383 = vmatprep.subr.bf16.mxu0 0
    %384 = vmatpush1.bf16.msra.mxu0 0
    %385 = vmatprep.subr.bf16.mxu0 0
    %386 = vmatpush1.bf16.msra.mxu0 0
    %387 = vmatprep.subr.bf16.mxu0 0
    %388 = vmatpush1.bf16.msra.mxu0 0
    %389 = vmatprep.subr.bf16.mxu0 0
    %390 = vmatpush1.bf16.msra.mxu0 0
    %391 = vmatprep.subr.bf16.mxu0 0
    %392 = vmatpush1.bf16.msra.mxu0 0
    %393 = vmatprep.subr.bf16.mxu0 0
    %394 = vmatpush1.bf16.msra.mxu0 0
    %395 = vmatprep.subr.bf16.mxu0 0
    %396 = vmatpush1.bf16.msra.mxu0 0
    %397 = vmatprep.subr.bf16.mxu0 0
    %398 = vmatpush1.bf16.msra.mxu0 0
    %399 = vmatprep.subr.bf16.mxu0 0
    %400 = vmatpush1.bf16.msra.mxu0 0
    %401 = vmatprep.subr.bf16.mxu0 0
    %402 = vmatpush1.bf16.msra.mxu0 0
    %403 = vmatprep.mubr.bf16.mxu0 0
    %404 = vmatmul.mubr.bf16.gmra.mrb[0].mxu0 %v369
    %v405 = vpop.f32.mrb[0].mxu0
    %v406 = vadd.f32 %v359, %v405
    %v407 = vpop.f32.mrb[0].mxu0
    %v408 = vpop.f32.mrb[0].mxu0
    %v409 = vpop.f32.mrb[0].mxu0
    %410 = vdwg.mxu0
    %v411 = vmax.f32 %v406, 0.0
    %v412 = vpack.c.bf16 %v273, %v273
    %v414 = vsel %vm367, %v412, 0
    %416 = vmatprep.subr.bf16.mxu0 0
    %417 = vmatpush1.bf16.msra.mxu0 %v365
    %418 = vmatprep.subr.bf16.mxu0 0
    %419 = vmatpush1.bf16.msra.mxu0 0
    %420 = vmatprep.subr.bf16.mxu0 0
    %421 = vmatpush1.bf16.msra.mxu0 0
    %422 = vmatprep.subr.bf16.mxu0 0
    %423 = vmatpush1.bf16.msra.mxu0 0
    %424 = vmatprep.subr.bf16.mxu0 0
    %425 = vmatpush1.bf16.msra.mxu0 0
    %426 = vmatprep.subr.bf16.mxu0 0
    %427 = vmatpush1.bf16.msra.mxu0 0
    %428 = vmatprep.subr.bf16.mxu0 0
    %429 = vmatpush1.bf16.msra.mxu0 0
    %430 = vmatprep.subr.bf16.mxu0 0
    %431 = vmatpush1.bf16.msra.mxu0 0
    %432 = vmatprep.subr.bf16.mxu0 0
    %433 = vmatpush1.bf16.msra.mxu0 0
    %434 = vmatprep.subr.bf16.mxu0 0
    %435 = vmatpush1.bf16.msra.mxu0 0
    %436 = vmatprep.subr.bf16.mxu0 0
    %437 = vmatpush1.bf16.msra.mxu0 0
    %438 = vmatprep.subr.bf16.mxu0 0
    %439 = vmatpush1.bf16.msra.mxu0 0
    %440 = vmatprep.subr.bf16.mxu0 0
    %441 = vmatpush1.bf16.msra.mxu0 0
    %442 = vmatprep.subr.bf16.mxu0 0
    %443 = vmatpush1.bf16.msra.mxu0 0
    %444 = vmatprep.subr.bf16.mxu0 0
    %445 = vmatpush1.bf16.msra.mxu0 0
    %446 = vmatprep.subr.bf16.mxu0 0
    %447 = vmatpush1.bf16.msra.mxu0 0
    %448 = vmatprep.mubr.bf16.mxu0 0
    %449 = vmatmul.mubr.bf16.gmra.mrb[0].mxu0 %v414
    %v450 = vpop.f32.mrb[0].mxu0
    %v451 = vadd.f32 %v359, %v450
    %v452 = vpop.f32.mrb[0].mxu0
    %v453 = vpop.f32.mrb[0].mxu0
    %v454 = vpop.f32.mrb[0].mxu0
    %455 = vdwg.mxu0
    %v456 = vmax.f32 %v451, 0.0
    %v457 = vpack.c.bf16 %v339, %v339
    %v459 = vsel %vm367, %v457, 0
    %461 = vmatprep.subr.bf16.mxu0 0
    %462 = vmatpush1.bf16.msra.mxu0 %v365
    %463 = vmatprep.subr.bf16.mxu0 0
    %464 = vmatpush1.bf16.msra.mxu0 0
    %465 = vmatprep.subr.bf16.mxu0 0
    %466 = vmatpush1.bf16.msra.mxu0 0
    %467 = vmatprep.subr.bf16.mxu0 0
    %468 = vmatpush1.bf16.msra.mxu0 0
    %469 = vmatprep.subr.bf16.mxu0 0
    %470 = vmatpush1.bf16.msra.mxu0 0
    %471 = vmatprep.subr.bf16.mxu0 0
    %472 = vmatpush1.bf16.msra.mxu0 0
    %473 = vmatprep.subr.bf16.mxu0 0
    %474 = vmatpush1.bf16.msra.mxu0 0
    %475 = vmatprep.subr.bf16.mxu0 0
    %476 = vmatpush1.bf16.msra.mxu0 0
    %477 = vmatprep.subr.bf16.mxu0 0
    %478 = vmatpush1.bf16.msra.mxu0 0
    %479 = vmatprep.subr.bf16.mxu0 0
    %480 = vmatpush1.bf16.msra.mxu0 0
    %481 = vmatprep.subr.bf16.mxu0 0
    %482 = vmatpush1.bf16.msra.mxu0 0
    %483 = vmatprep.subr.bf16.mxu0 0
    %484 = vmatpush1.bf16.msra.mxu0 0
    %485 = vmatprep.subr.bf16.mxu0 0
    %486 = vmatpush1.bf16.msra.mxu0 0
    %487 = vmatprep.subr.bf16.mxu0 0
    %488 = vmatpush1.bf16.msra.mxu0 0
    %489 = vmatprep.subr.bf16.mxu0 0
    %490 = vmatpush1.bf16.msra.mxu0 0
    %491 = vmatprep.subr.bf16.mxu0 0
    %492 = vmatpush1.bf16.msra.mxu0 0
    %493 = vmatprep.mubr.bf16.mxu0 0
    %494 = vmatmul.mubr.bf16.gmra.mrb[0].mxu0 %v459
    %v495 = vpop.f32.mrb[0].mxu0
    %v496 = vadd.f32 %v359, %v495
    %v497 = vpop.f32.mrb[0].mxu0
    %v498 = vpop.f32.mrb[0].mxu0
    %v499 = vpop.f32.mrb[0].mxu0
    %500 = vdwg.mxu0
    %v501 = vmax.f32 %v496, 0.0
    %v502 = vpack.c.bf16 %v350, %v350
    %v504 = vsel %vm367, %v502, 0
    %506 = vmatprep.subr.bf16.mxu0 0
    %507 = vmatpush1.bf16.msra.mxu0 %v365
    %508 = vmatprep.subr.bf16.mxu0 0
    %509 = vmatpush1.bf16.msra.mxu0 0
    %510 = vmatprep.subr.bf16.mxu0 0
    %511 = vmatpush1.bf16.msra.mxu0 0
    %512 = vmatprep.subr.bf16.mxu0 0
    %513 = vmatpush1.bf16.msra.mxu0 0
    %514 = vmatprep.subr.bf16.mxu0 0
    %515 = vmatpush1.bf16.msra.mxu0 0
    %516 = vmatprep.subr.bf16.mxu0 0
    %517 = vmatpush1.bf16.msra.mxu0 0
    %518 = vmatprep.subr.bf16.mxu0 0
    %519 = vmatpush1.bf16.msra.mxu0 0
    %520 = vmatprep.subr.bf16.mxu0 0
    %521 = vmatpush1.bf16.msra.mxu0 0
    %522 = vmatprep.subr.bf16.mxu0 0
    %523 = vmatpush1.bf16.msra.mxu0 0
    %524 = vmatprep.subr.bf16.mxu0 0
    %525 = vmatpush1.bf16.msra.mxu0 0
    %526 = vmatprep.subr.bf16.mxu0 0
    %527 = vmatpush1.bf16.msra.mxu0 0
    %528 = vmatprep.subr.bf16.mxu0 0
    %529 = vmatpush1.bf16.msra.mxu0 0
    %530 = vmatprep.subr.bf16.mxu0 0
    %531 = vmatpush1.bf16.msra.mxu0 0
    %532 = vmatprep.subr.bf16.mxu0 0
    %533 = vmatpush1.bf16.msra.mxu0 0
    %534 = vmatprep.subr.bf16.mxu0 0
    %535 = vmatpush1.bf16.msra.mxu0 0
    %536 = vmatprep.subr.bf16.mxu0 0
    %537 = vmatpush1.bf16.msra.mxu0 0
    %538 = vmatprep.mubr.bf16.mxu0 0
    %539 = vmatmul.mubr.bf16.gmra.mrb[0].mxu0 %v504
    %v540 = vpop.f32.mrb[0].mxu0
    %v541 = vadd.f32 %v359, %v540
    %v542 = vpop.f32.mrb[0].mxu0
    %v543 = vpop.f32.mrb[0].mxu0
    %v544 = vpop.f32.mrb[0].mxu0
    %545 = vdwg.mxu0
    %v546 = vmax.f32 %v541, 0.0
    %v547 = vpack.c.bf16 %v411, %v411
    %v548 = vld [vmem:[#allocation2] sm:$0xff]
    %v549 = vld [vmem:[#allocation2 + $0x8] sm:$0xff]
    %v550 = vld [vmem:[#allocation2 + $0x10] sm:$0xff]
    %v551 = vld [vmem:[#allocation2 + $0x18] sm:$0xff]
    %v552 = vld [vmem:[#allocation2 + $0x20] sm:$0xff]
    %v553 = vld [vmem:[#allocation2 + $0x28] sm:$0xff]
    %v554 = vld [vmem:[#allocation2 + $0x30] sm:$0xff]
    %v555 = vld [vmem:[#allocation2 + $0x38] sm:$0xff]
    %v556 = vld [vmem:[#allocation2 + $0x40] sm:$0xff]
    %v557 = vld [vmem:[#allocation2 + $0x48] sm:$0xff]
    %v558 = vld [vmem:[#allocation2 + $0x50] sm:$0xff]
    %v559 = vld [vmem:[#allocation2 + $0x58] sm:$0xff]
    %v560 = vld [vmem:[#allocation2 + $0x60] sm:$0xff]
    %v561 = vld [vmem:[#allocation2 + $0x68] sm:$0xff]
    %v562 = vld [vmem:[#allocation2 + $0x70] sm:$0xff]
    %v563 = vld [vmem:[#allocation2 + $0x78] sm:$0xff]
    %v564 = vld [vmem:[#allocation2 + $0x80] sm:$0xff]
    %v565 = vld [vmem:[#allocation2 + $0x88] sm:$0xff]
    %v566 = vld [vmem:[#allocation2 + $0x90] sm:$0xff]
    %v567 = vld [vmem:[#allocation2 + $0x98] sm:$0xff]
    %v568 = vld [vmem:[#allocation2 + $0xa0] sm:$0xff]
    %v569 = vld [vmem:[#allocation2 + $0xa8] sm:$0xff]
    %v570 = vld [vmem:[#allocation2 + $0xb0] sm:$0xff]
    %v571 = vld [vmem:[#allocation2 + $0xb8] sm:$0xff]
    %v572 = vld [vmem:[#allocation2 + $0xc0] sm:$0xff]
    %v573 = vld [vmem:[#allocation2 + $0xc8] sm:$0xff]
    %v574 = vld [vmem:[#allocation2 + $0xd0] sm:$0xff]
    %v575 = vld [vmem:[#allocation2 + $0xd8] sm:$0xff]
    %v576 = vld [vmem:[#allocation2 + $0xe0] sm:$0xff]
    %v577 = vld [vmem:[#allocation2 + $0xe8] sm:$0xff]
    %v578 = vld [vmem:[#allocation2 + $0xf0] sm:$0xff]
    %v579 = vld [vmem:[#allocation2 + $0xf8] sm:$0xff]
    %v580 = vld [vmem:[#allocation2 + $0x100] sm:$0xff]
    %v581 = vld [vmem:[#allocation2 + $0x108] sm:$0xff]
    %v582 = vld [vmem:[#allocation2 + $0x110] sm:$0xff]
    %v583 = vld [vmem:[#allocation2 + $0x118] sm:$0xff]
    %v584 = vld [vmem:[#allocation2 + $0x120] sm:$0xff]
    %v585 = vld [vmem:[#allocation2 + $0x128] sm:$0xff]
    %v586 = vld [vmem:[#allocation2 + $0x130] sm:$0xff]
    %v587 = vld [vmem:[#allocation2 + $0x138] sm:$0xff]
    %v588 = vld [vmem:[#allocation2 + $0x140] sm:$0xff]
    %v589 = vld [vmem:[#allocation2 + $0x148] sm:$0xff]
    %v590 = vld [vmem:[#allocation2 + $0x150] sm:$0xff]
    %v591 = vld [vmem:[#allocation2 + $0x158] sm:$0xff]
    %v592 = vld [vmem:[#allocation2 + $0x160] sm:$0xff]
    %v593 = vld [vmem:[#allocation2 + $0x168] sm:$0xff]
    %v594 = vld [vmem:[#allocation2 + $0x170] sm:$0xff]
    %v595 = vld [vmem:[#allocation2 + $0x178] sm:$0xff]
    %v596 = vpack.c.bf16 %v456, %v456
    %s597 = scalar_lea.vmem [#allocation2], 384
    %v598 = vld [vmem:[%s597] sm:$0xff]
    %v599 = vld [vmem:[%s597 + $0x8] sm:$0xff]
    %v600 = vld [vmem:[%s597 + $0x10] sm:$0xff]
    %v601 = vld [vmem:[%s597 + $0x18] sm:$0xff]
    %v602 = vld [vmem:[%s597 + $0x20] sm:$0xff]
    %v603 = vld [vmem:[%s597 + $0x28] sm:$0xff]
    %v604 = vld [vmem:[%s597 + $0x30] sm:$0xff]
    %v605 = vld [vmem:[%s597 + $0x38] sm:$0xff]
    %v606 = vld [vmem:[%s597 + $0x40] sm:$0xff]
    %v607 = vld [vmem:[%s597 + $0x48] sm:$0xff]
    %v608 = vld [vmem:[%s597 + $0x50] sm:$0xff]
    %v609 = vld [vmem:[%s597 + $0x58] sm:$0xff]
    %v610 = vld [vmem:[%s597 + $0x60] sm:$0xff]
    %v611 = vld [vmem:[%s597 + $0x68] sm:$0xff]
    %v612 = vld [vmem:[%s597 + $0x70] sm:$0xff]
    %v613 = vld [vmem:[%s597 + $0x78] sm:$0xff]
    %v614 = vld [vmem:[%s597 + $0x80] sm:$0xff]
    %v615 = vld [vmem:[%s597 + $0x88] sm:$0xff]
    %v616 = vld [vmem:[%s597 + $0x90] sm:$0xff]
    %v617 = vld [vmem:[%s597 + $0x98] sm:$0xff]
    %v618 = vld [vmem:[%s597 + $0xa0] sm:$0xff]
    %v619 = vld [vmem:[%s597 + $0xa8] sm:$0xff]
    %v620 = vld [vmem:[%s597 + $0xb0] sm:$0xff]
    %v621 = vld [vmem:[%s597 + $0xb8] sm:$0xff]
    %v622 = vld [vmem:[%s597 + $0xc0] sm:$0xff]
    %v623 = vld [vmem:[%s597 + $0xc8] sm:$0xff]
    %v624 = vld [vmem:[%s597 + $0xd0] sm:$0xff]
    %v625 = vld [vmem:[%s597 + $0xd8] sm:$0xff]
    %v626 = vld [vmem:[%s597 + $0xe0] sm:$0xff]
    %v627 = vld [vmem:[%s597 + $0xe8] sm:$0xff]
    %v628 = vld [vmem:[%s597 + $0xf0] sm:$0xff]
    %v629 = vld [vmem:[%s597 + $0xf8] sm:$0xff]
    %v630 = vld [vmem:[%s597 + $0x100] sm:$0xff]
    %v631 = vld [vmem:[%s597 + $0x108] sm:$0xff]
    %v632 = vld [vmem:[%s597 + $0x110] sm:$0xff]
    %v633 = vld [vmem:[%s597 + $0x118] sm:$0xff]
    %v634 = vld [vmem:[%s597 + $0x120] sm:$0xff]
    %v635 = vld [vmem:[%s597 + $0x128] sm:$0xff]
    %v636 = vld [vmem:[%s597 + $0x130] sm:$0xff]
    %v637 = vld [vmem:[%s597 + $0x138] sm:$0xff]
    %v638 = vld [vmem:[%s597 + $0x140] sm:$0xff]
    %v639 = vld [vmem:[%s597 + $0x148] sm:$0xff]
    %v640 = vld [vmem:[%s597 + $0x150] sm:$0xff]
    %v641 = vld [vmem:[%s597 + $0x158] sm:$0xff]
    %v642 = vld [vmem:[%s597 + $0x160] sm:$0xff]
    %v643 = vld [vmem:[%s597 + $0x168] sm:$0xff]
    %v644 = vld [vmem:[%s597 + $0x170] sm:$0xff]
    %v645 = vld [vmem:[%s597 + $0x178] sm:$0xff]
    %v694 = vunpack.c.l.b16 %v598
    %v695 = vunpack.c.h.b16 %v598
    %v696 = vunpack.c.l.b16 %v599
    %v697 = vunpack.c.h.b16 %v599
    %v698 = vunpack.c.l.b16 %v600
    %v699 = vunpack.c.h.b16 %v600
    %v700 = vunpack.c.l.b16 %v601
    %v701 = vunpack.c.h.b16 %v601
    %v702 = vunpack.c.l.b16 %v602
    %v703 = vunpack.c.h.b16 %v602
    %v704 = vunpack.c.l.b16 %v603
    %v705 = vunpack.c.h.b16 %v603
    %v706 = vunpack.c.l.b16 %v604
    %v707 = vunpack.c.h.b16 %v604
    %v708 = vunpack.c.l.b16 %v605
    %v709 = vunpack.c.h.b16 %v605
    %v710 = vunpack.c.l.b16 %v606
    %v711 = vunpack.c.h.b16 %v606
    %v712 = vunpack.c.l.b16 %v607
    %v713 = vunpack.c.h.b16 %v607
    %v714 = vunpack.c.l.b16 %v608
    %v715 = vunpack.c.h.b16 %v608
    %v716 = vunpack.c.l.b16 %v609
    %v717 = vunpack.c.h.b16 %v609
    %v718 = vunpack.c.l.b16 %v610
    %v719 = vunpack.c.h.b16 %v610
    %v720 = vunpack.c.l.b16 %v611
    %v721 = vunpack.c.h.b16 %v611
    %v722 = vunpack.c.l.b16 %v612
    %v723 = vunpack.c.h.b16 %v612
    %v724 = vunpack.c.l.b16 %v613
    %v725 = vunpack.c.h.b16 %v613
    %v726 = vunpack.c.l.b16 %v614
    %v727 = vunpack.c.h.b16 %v614
    %v728 = vunpack.c.l.b16 %v615
    %v729 = vunpack.c.h.b16 %v615
    %v730 = vunpack.c.l.b16 %v616
    %v731 = vunpack.c.h.b16 %v616
    %v732 = vunpack.c.l.b16 %v617
    %v733 = vunpack.c.h.b16 %v617
    %v734 = vunpack.c.l.b16 %v618
    %v735 = vunpack.c.h.b16 %v618
    %v736 = vunpack.c.l.b16 %v619
    %v737 = vunpack.c.h.b16 %v619
    %v738 = vunpack.c.l.b16 %v620
    %v739 = vunpack.c.h.b16 %v620
    %v740 = vunpack.c.l.b16 %v621
    %v741 = vunpack.c.h.b16 %v621
    %v742 = vunpack.c.l.b16 %v622
    %v743 = vunpack.c.h.b16 %v622
    %v744 = vunpack.c.l.b16 %v623
    %v745 = vunpack.c.h.b16 %v623
    %v746 = vunpack.c.l.b16 %v624
    %v747 = vunpack.c.h.b16 %v624
    %v748 = vunpack.c.l.b16 %v625
    %v749 = vunpack.c.h.b16 %v625
    %v750 = vunpack.c.l.b16 %v626
    %v751 = vunpack.c.h.b16 %v626
    %v752 = vunpack.c.l.b16 %v627
    %v753 = vunpack.c.h.b16 %v627
    %v754 = vunpack.c.l.b16 %v628
    %v755 = vunpack.c.h.b16 %v628
    %v756 = vunpack.c.l.b16 %v629
    %v757 = vunpack.c.h.b16 %v629
    %v758 = vunpack.c.l.b16 %v630
    %v759 = vunpack.c.h.b16 %v630
    %v760 = vunpack.c.l.b16 %v631
    %v761 = vunpack.c.h.b16 %v631
    %v762 = vunpack.c.l.b16 %v632
    %v763 = vunpack.c.h.b16 %v632
    %v764 = vunpack.c.l.b16 %v633
    %v765 = vunpack.c.h.b16 %v633
    %v766 = vunpack.c.l.b16 %v634
    %v767 = vunpack.c.h.b16 %v634
    %v768 = vunpack.c.l.b16 %v635
    %v769 = vunpack.c.h.b16 %v635
    %v770 = vunpack.c.l.b16 %v636
    %v771 = vunpack.c.h.b16 %v636
    %v772 = vunpack.c.l.b16 %v637
    %v773 = vunpack.c.h.b16 %v637
    %v774 = vunpack.c.l.b16 %v638
    %v775 = vunpack.c.h.b16 %v638
    %v776 = vunpack.c.l.b16 %v639
    %v777 = vunpack.c.h.b16 %v639
    %v778 = vunpack.c.l.b16 %v640
    %v779 = vunpack.c.h.b16 %v640
    %v780 = vunpack.c.l.b16 %v641
    %v781 = vunpack.c.h.b16 %v641
    %v782 = vunpack.c.l.b16 %v642
    %v783 = vunpack.c.h.b16 %v642
    %v784 = vunpack.c.l.b16 %v643
    %v785 = vunpack.c.h.b16 %v643
    %v786 = vunpack.c.l.b16 %v644
    %v787 = vunpack.c.h.b16 %v644
    %v788 = vunpack.c.l.b16 %v645
    %v789 = vunpack.c.h.b16 %v645
    %v790 = vpack.c.b16 %v700, %v694
    %v791 = vpack.c.b16 %v701, %v695
    %v792 = vpack.c.b16 %v702, %v696
    %v793 = vpack.c.b16 %v703, %v697
    %v794 = vpack.c.b16 %v704, %v698
    %v795 = vpack.c.b16 %v705, %v699
    %v796 = vpack.c.b16 %v712, %v706
    %v797 = vpack.c.b16 %v713, %v707
    %v798 = vpack.c.b16 %v714, %v708
    %v799 = vpack.c.b16 %v715, %v709
    %v800 = vpack.c.b16 %v716, %v710
    %v801 = vpack.c.b16 %v717, %v711
    %v802 = vpack.c.b16 %v724, %v718
    %v803 = vpack.c.b16 %v725, %v719
    %v804 = vpack.c.b16 %v726, %v720
    %v805 = vpack.c.b16 %v727, %v721
    %v806 = vpack.c.b16 %v728, %v722
    %v807 = vpack.c.b16 %v729, %v723
    %v808 = vpack.c.b16 %v736, %v730
    %v809 = vpack.c.b16 %v737, %v731
    %v810 = vpack.c.b16 %v738, %v732
    %v811 = vpack.c.b16 %v739, %v733
    %v812 = vpack.c.b16 %v740, %v734
    %v813 = vpack.c.b16 %v741, %v735
    %v814 = vpack.c.b16 %v748, %v742
    %v815 = vpack.c.b16 %v749, %v743
    %v816 = vpack.c.b16 %v750, %v744
    %v817 = vpack.c.b16 %v751, %v745
    %v818 = vpack.c.b16 %v752, %v746
    %v819 = vpack.c.b16 %v753, %v747
    %v820 = vpack.c.b16 %v760, %v754
    %v821 = vpack.c.b16 %v761, %v755
    %v822 = vpack.c.b16 %v762, %v756
    %v823 = vpack.c.b16 %v763, %v757
    %v824 = vpack.c.b16 %v764, %v758
    %v825 = vpack.c.b16 %v765, %v759
    %v826 = vpack.c.b16 %v772, %v766
    %v827 = vpack.c.b16 %v773, %v767
    %v828 = vpack.c.b16 %v774, %v768
    %v829 = vpack.c.b16 %v775, %v769
    %v830 = vpack.c.b16 %v776, %v770
    %v831 = vpack.c.b16 %v777, %v771
    %v832 = vpack.c.b16 %v784, %v778
    %v833 = vpack.c.b16 %v785, %v779
    %v834 = vpack.c.b16 %v786, %v780
    %v835 = vpack.c.b16 %v787, %v781
    %v836 = vpack.c.b16 %v788, %v782
    %v837 = vpack.c.b16 %v789, %v783
    %886 = vmatprep.subr.bf16.mxu0 %v791
    %887 = vmatpush1.bf16.msra.mxu0 %v790
    %888 = vmatprep.subr.bf16.mxu0 %v797
    %889 = vmatpush1.bf16.msra.mxu0 %v796
    %890 = vmatprep.subr.bf16.mxu0 %v803
    %891 = vmatpush1.bf16.msra.mxu0 %v802
    %892 = vmatprep.subr.bf16.mxu0 %v809
    %893 = vmatpush1.bf16.msra.mxu0 %v808
    %894 = vmatprep.subr.bf16.mxu0 %v815
    %895 = vmatpush1.bf16.msra.mxu0 %v814
    %896 = vmatprep.subr.bf16.mxu0 %v821
    %897 = vmatpush1.bf16.msra.mxu0 %v820
    %898 = vmatprep.subr.bf16.mxu0 %v827
    %899 = vmatpush1.bf16.msra.mxu0 %v826
    %900 = vmatprep.subr.bf16.mxu0 %v833
    %901 = vmatpush1.bf16.msra.mxu0 %v832
    %902 = vmatprep.subr.bf16.mxu0 0
    %903 = vmatpush1.bf16.msra.mxu0 0
    %904 = vmatprep.subr.bf16.mxu0 0
    %905 = vmatpush1.bf16.msra.mxu0 0
    %906 = vmatprep.subr.bf16.mxu0 0
    %907 = vmatpush1.bf16.msra.mxu0 0
    %908 = vmatprep.subr.bf16.mxu0 0
    %909 = vmatpush1.bf16.msra.mxu0 0
    %910 = vmatprep.subr.bf16.mxu0 0
    %911 = vmatpush1.bf16.msra.mxu0 0
    %912 = vmatprep.subr.bf16.mxu0 0
    %913 = vmatpush1.bf16.msra.mxu0 0
    %914 = vmatprep.subr.bf16.mxu0 0
    %915 = vmatpush1.bf16.msra.mxu0 0
    %916 = vmatprep.subr.bf16.mxu0 0
    %917 = vmatpush1.bf16.msra.mxu0 0
    %918 = vmatprep.mubr.bf16.mxu0 0
    %919 = vmatmul.mubr.bf16.gmra.mrb[0].mxu0 %v596
    %v920 = vpop.f32.mrb[0].mxu0
    %v921 = vadd.f32 0.0, %v920
    %v922 = vpop.f32.mrb[0].mxu0
    %v923 = vadd.f32 0.0, %v922
    %v924 = vpop.f32.mrb[0].mxu0
    %v925 = vpop.f32.mrb[0].mxu0
    %926 = vdwg.mxu0
    %927 = vmatprep.subr.bf16.mxu0 %v793
    %928 = vmatpush1.bf16.msra.mxu0 %v792
    %929 = vmatprep.subr.bf16.mxu0 %v799
    %930 = vmatpush1.bf16.msra.mxu0 %v798
    %931 = vmatprep.subr.bf16.mxu0 %v805
    %932 = vmatpush1.bf16.msra.mxu0 %v804
    %933 = vmatprep.subr.bf16.mxu0 %v811
    %934 = vmatpush1.bf16.msra.mxu0 %v810
    %935 = vmatprep.subr.bf16.mxu0 %v817
    %936 = vmatpush1.bf16.msra.mxu0 %v816
    %937 = vmatprep.subr.bf16.mxu0 %v823
    %938 = vmatpush1.bf16.msra.mxu0 %v822
    %939 = vmatprep.subr.bf16.mxu0 %v829
    %940 = vmatpush1.bf16.msra.mxu0 %v828
    %941 = vmatprep.subr.bf16.mxu0 %v835
    %942 = vmatpush1.bf16.msra.mxu0 %v834
    %943 = vmatprep.subr.bf16.mxu0 0
    %944 = vmatpush1.bf16.msra.mxu0 0
    %945 = vmatprep.subr.bf16.mxu0 0
    %946 = vmatpush1.bf16.msra.mxu0 0
    %947 = vmatprep.subr.bf16.mxu0 0
    %948 = vmatpush1.bf16.msra.mxu0 0
    %949 = vmatprep.subr.bf16.mxu0 0
    %950 = vmatpush1.bf16.msra.mxu0 0
    %951 = vmatprep.subr.bf16.mxu0 0
    %952 = vmatpush1.bf16.msra.mxu0 0
    %953 = vmatprep.subr.bf16.mxu0 0
    %954 = vmatpush1.bf16.msra.mxu0 0
    %955 = vmatprep.subr.bf16.mxu0 0
    %956 = vmatpush1.bf16.msra.mxu0 0
    %957 = vmatprep.subr.bf16.mxu0 0
    %958 = vmatpush1.bf16.msra.mxu0 0
    %959 = vmatprep.mubr.bf16.mxu0 0
    %960 = vmatmul.mubr.bf16.gmra.mrb[0].mxu0 %v596
    %v961 = vpop.f32.mrb[0].mxu0
    %v962 = vadd.f32 0.0, %v961
    %v963 = vpop.f32.mrb[0].mxu0
    %v964 = vadd.f32 0.0, %v963
    %v965 = vpop.f32.mrb[0].mxu0
    %v966 = vpop.f32.mrb[0].mxu0
    %967 = vdwg.mxu0
    %968 = vmatprep.subr.bf16.mxu0 %v795
    %969 = vmatpush1.bf16.msra.mxu0 %v794
    %970 = vmatprep.subr.bf16.mxu0 %v801
    %971 = vmatpush1.bf16.msra.mxu0 %v800
    %972 = vmatprep.subr.bf16.mxu0 %v807
    %973 = vmatpush1.bf16.msra.mxu0 %v806
    %974 = vmatprep.subr.bf16.mxu0 %v813
    %975 = vmatpush1.bf16.msra.mxu0 %v812
    %976 = vmatprep.subr.bf16.mxu0 %v819
    %977 = vmatpush1.bf16.msra.mxu0 %v818
    %978 = vmatprep.subr.bf16.mxu0 %v825
    %979 = vmatpush1.bf16.msra.mxu0 %v824
    %980 = vmatprep.subr.bf16.mxu0 %v831
    %981 = vmatpush1.bf16.msra.mxu0 %v830
    %982 = vmatprep.subr.bf16.mxu0 %v837
    %983 = vmatpush1.bf16.msra.mxu0 %v836
    %984 = vmatprep.subr.bf16.mxu0 0
    %985 = vmatpush1.bf16.msra.mxu0 0
    %986 = vmatprep.subr.bf16.mxu0 0
    %987 = vmatpush1.bf16.msra.mxu0 0
    %988 = vmatprep.subr.bf16.mxu0 0
    %989 = vmatpush1.bf16.msra.mxu0 0
    %990 = vmatprep.subr.bf16.mxu0 0
    %991 = vmatpush1.bf16.msra.mxu0 0
    %992 = vmatprep.subr.bf16.mxu0 0
    %993 = vmatpush1.bf16.msra.mxu0 0
    %994 = vmatprep.subr.bf16.mxu0 0
    %995 = vmatpush1.bf16.msra.mxu0 0
    %996 = vmatprep.subr.bf16.mxu0 0
    %997 = vmatpush1.bf16.msra.mxu0 0
    %998 = vmatprep.subr.bf16.mxu0 0
    %999 = vmatpush1.bf16.msra.mxu0 0
    %1000 = vmatprep.mubr.bf16.mxu0 0
    %1001 = vmatmul.mubr.bf16.gmra.mrb[0].mxu0 %v596
    %v1002 = vpop.f32.mrb[0].mxu0
    %v1003 = vadd.f32 0.0, %v1002
    %v1004 = vpop.f32.mrb[0].mxu0
    %v1005 = vadd.f32 0.0, %v1004
    %v1006 = vpop.f32.mrb[0].mxu0
    %v1007 = vpop.f32.mrb[0].mxu0
    %1008 = vdwg.mxu0
    %v1057 = vunpack.c.l.b16 %v548
    %v1058 = vunpack.c.h.b16 %v548
    %v1059 = vunpack.c.l.b16 %v549
    %v1060 = vunpack.c.h.b16 %v549
    %v1061 = vunpack.c.l.b16 %v550
    %v1062 = vunpack.c.h.b16 %v550
    %v1063 = vunpack.c.l.b16 %v551
    %v1064 = vunpack.c.h.b16 %v551
    %v1065 = vunpack.c.l.b16 %v552
    %v1066 = vunpack.c.h.b16 %v552
    %v1067 = vunpack.c.l.b16 %v553
    %v1068 = vunpack.c.h.b16 %v553
    %v1069 = vunpack.c.l.b16 %v554
    %v1070 = vunpack.c.h.b16 %v554
    %v1071 = vunpack.c.l.b16 %v555
    %v1072 = vunpack.c.h.b16 %v555
    %v1073 = vunpack.c.l.b16 %v556
    %v1074 = vunpack.c.h.b16 %v556
    %v1075 = vunpack.c.l.b16 %v557
    %v1076 = vunpack.c.h.b16 %v557
    %v1077 = vunpack.c.l.b16 %v558
    %v1078 = vunpack.c.h.b16 %v558
    %v1079 = vunpack.c.l.b16 %v559
    %v1080 = vunpack.c.h.b16 %v559
    %v1081 = vunpack.c.l.b16 %v560
    %v1082 = vunpack.c.h.b16 %v560
    %v1083 = vunpack.c.l.b16 %v561
    %v1084 = vunpack.c.h.b16 %v561
    %v1085 = vunpack.c.l.b16 %v562
    %v1086 = vunpack.c.h.b16 %v562
    %v1087 = vunpack.c.l.b16 %v563
    %v1088 = vunpack.c.h.b16 %v563
    %v1089 = vunpack.c.l.b16 %v564
    %v1090 = vunpack.c.h.b16 %v564
    %v1091 = vunpack.c.l.b16 %v565
    %v1092 = vunpack.c.h.b16 %v565
    %v1093 = vunpack.c.l.b16 %v566
    %v1094 = vunpack.c.h.b16 %v566
    %v1095 = vunpack.c.l.b16 %v567
    %v1096 = vunpack.c.h.b16 %v567
    %v1097 = vunpack.c.l.b16 %v568
    %v1098 = vunpack.c.h.b16 %v568
    %v1099 = vunpack.c.l.b16 %v569
    %v1100 = vunpack.c.h.b16 %v569
    %v1101 = vunpack.c.l.b16 %v570
    %v1102 = vunpack.c.h.b16 %v570
    %v1103 = vunpack.c.l.b16 %v571
    %v1104 = vunpack.c.h.b16 %v571
    %v1105 = vunpack.c.l.b16 %v572
    %v1106 = vunpack.c.h.b16 %v572
    %v1107 = vunpack.c.l.b16 %v573
    %v1108 = vunpack.c.h.b16 %v573
    %v1109 = vunpack.c.l.b16 %v574
    %v1110 = vunpack.c.h.b16 %v574
    %v1111 = vunpack.c.l.b16 %v575
    %v1112 = vunpack.c.h.b16 %v575
    %v1113 = vunpack.c.l.b16 %v576
    %v1114 = vunpack.c.h.b16 %v576
    %v1115 = vunpack.c.l.b16 %v577
    %v1116 = vunpack.c.h.b16 %v577
    %v1117 = vunpack.c.l.b16 %v578
    %v1118 = vunpack.c.h.b16 %v578
    %v1119 = vunpack.c.l.b16 %v579
    %v1120 = vunpack.c.h.b16 %v579
    %v1121 = vunpack.c.l.b16 %v580
    %v1122 = vunpack.c.h.b16 %v580
    %v1123 = vunpack.c.l.b16 %v581
    %v1124 = vunpack.c.h.b16 %v581
    %v1125 = vunpack.c.l.b16 %v582
    %v1126 = vunpack.c.h.b16 %v582
    %v1127 = vunpack.c.l.b16 %v583
    %v1128 = vunpack.c.h.b16 %v583
    %v1129 = vunpack.c.l.b16 %v584
    %v1130 = vunpack.c.h.b16 %v584
    %v1131 = vunpack.c.l.b16 %v585
    %v1132 = vunpack.c.h.b16 %v585
    %v1133 = vunpack.c.l.b16 %v586
    %v1134 = vunpack.c.h.b16 %v586
    %v1135 = vunpack.c.l.b16 %v587
    %v1136 = vunpack.c.h.b16 %v587
    %v1137 = vunpack.c.l.b16 %v588
    %v1138 = vunpack.c.h.b16 %v588
    %v1139 = vunpack.c.l.b16 %v589
    %v1140 = vunpack.c.h.b16 %v589
    %v1141 = vunpack.c.l.b16 %v590
    %v1142 = vunpack.c.h.b16 %v590
    %v1143 = vunpack.c.l.b16 %v591
    %v1144 = vunpack.c.h.b16 %v591
    %v1145 = vunpack.c.l.b16 %v592
    %v1146 = vunpack.c.h.b16 %v592
    %v1147 = vunpack.c.l.b16 %v593
    %v1148 = vunpack.c.h.b16 %v593
    %v1149 = vunpack.c.l.b16 %v594
    %v1150 = vunpack.c.h.b16 %v594
    %v1151 = vunpack.c.l.b16 %v595
    %v1152 = vunpack.c.h.b16 %v595
    %v1153 = vpack.c.b16 %v1063, %v1057
    %v1154 = vpack.c.b16 %v1064, %v1058
    %v1155 = vpack.c.b16 %v1065, %v1059
    %v1156 = vpack.c.b16 %v1066, %v1060
    %v1157 = vpack.c.b16 %v1067, %v1061
    %v1158 = vpack.c.b16 %v1068, %v1062
    %v1159 = vpack.c.b16 %v1075, %v1069
    %v1160 = vpack.c.b16 %v1076, %v1070
    %v1161 = vpack.c.b16 %v1077, %v1071
    %v1162 = vpack.c.b16 %v1078, %v1072
    %v1163 = vpack.c.b16 %v1079, %v1073
    %v1164 = vpack.c.b16 %v1080, %v1074
    %v1165 = vpack.c.b16 %v1087, %v1081
    %v1166 = vpack.c.b16 %v1088, %v1082
    %v1167 = vpack.c.b16 %v1089, %v1083
    %v1168 = vpack.c.b16 %v1090, %v1084
    %v1169 = vpack.c.b16 %v1091, %v1085
    %v1170 = vpack.c.b16 %v1092, %v1086
    %v1171 = vpack.c.b16 %v1099, %v1093
    %v1172 = vpack.c.b16 %v1100, %v1094
    %v1173 = vpack.c.b16 %v1101, %v1095
    %v1174 = vpack.c.b16 %v1102, %v1096
    %v1175 = vpack.c.b16 %v1103, %v1097
    %v1176 = vpack.c.b16 %v1104, %v1098
    %v1177 = vpack.c.b16 %v1111, %v1105
    %v1178 = vpack.c.b16 %v1112, %v1106
    %v1179 = vpack.c.b16 %v1113, %v1107
    %v1180 = vpack.c.b16 %v1114, %v1108
    %v1181 = vpack.c.b16 %v1115, %v1109
    %v1182 = vpack.c.b16 %v1116, %v1110
    %v1183 = vpack.c.b16 %v1123, %v1117
    %v1184 = vpack.c.b16 %v1124, %v1118
    %v1185 = vpack.c.b16 %v1125, %v1119
    %v1186 = vpack.c.b16 %v1126, %v1120
    %v1187 = vpack.c.b16 %v1127, %v1121
    %v1188 = vpack.c.b16 %v1128, %v1122
    %v1189 = vpack.c.b16 %v1135, %v1129
    %v1190 = vpack.c.b16 %v1136, %v1130
    %v1191 = vpack.c.b16 %v1137, %v1131
    %v1192 = vpack.c.b16 %v1138, %v1132
    %v1193 = vpack.c.b16 %v1139, %v1133
    %v1194 = vpack.c.b16 %v1140, %v1134
    %v1195 = vpack.c.b16 %v1147, %v1141
    %v1196 = vpack.c.b16 %v1148, %v1142
    %v1197 = vpack.c.b16 %v1149, %v1143
    %v1198 = vpack.c.b16 %v1150, %v1144
    %v1199 = vpack.c.b16 %v1151, %v1145
    %v1200 = vpack.c.b16 %v1152, %v1146
    %1249 = vmatprep.subr.bf16.mxu0 %v1154
    %1250 = vmatpush1.bf16.msra.mxu0 %v1153
    %1251 = vmatprep.subr.bf16.mxu0 %v1160
    %1252 = vmatpush1.bf16.msra.mxu0 %v1159
    %1253 = vmatprep.subr.bf16.mxu0 %v1166
    %1254 = vmatpush1.bf16.msra.mxu0 %v1165
    %1255 = vmatprep.subr.bf16.mxu0 %v1172
    %1256 = vmatpush1.bf16.msra.mxu0 %v1171
    %1257 = vmatprep.subr.bf16.mxu0 %v1178
    %1258 = vmatpush1.bf16.msra.mxu0 %v1177
    %1259 = vmatprep.subr.bf16.mxu0 %v1184
    %1260 = vmatpush1.bf16.msra.mxu0 %v1183
    %1261 = vmatprep.subr.bf16.mxu0 %v1190
    %1262 = vmatpush1.bf16.msra.mxu0 %v1189
    %1263 = vmatprep.subr.bf16.mxu0 %v1196
    %1264 = vmatpush1.bf16.msra.mxu0 %v1195
    %1265 = vmatprep.subr.bf16.mxu0 0
    %1266 = vmatpush1.bf16.msra.mxu0 0
    %1267 = vmatprep.subr.bf16.mxu0 0
    %1268 = vmatpush1.bf16.msra.mxu0 0
    %1269 = vmatprep.subr.bf16.mxu0 0
    %1270 = vmatpush1.bf16.msra.mxu0 0
    %1271 = vmatprep.subr.bf16.mxu0 0
    %1272 = vmatpush1.bf16.msra.mxu0 0
    %1273 = vmatprep.subr.bf16.mxu0 0
    %1274 = vmatpush1.bf16.msra.mxu0 0
    %1275 = vmatprep.subr.bf16.mxu0 0
    %1276 = vmatpush1.bf16.msra.mxu0 0
    %1277 = vmatprep.subr.bf16.mxu0 0
    %1278 = vmatpush1.bf16.msra.mxu0 0
    %1279 = vmatprep.subr.bf16.mxu0 0
    %1280 = vmatpush1.bf16.msra.mxu0 0
    %1281 = vmatprep.mubr.bf16.mxu0 0
    %1282 = vmatmul.mubr.bf16.gmra.mrb[0].mxu0 %v547
    %v1283 = vpop.f32.mrb[0].mxu0
    %v1284 = vadd.f32 %v921, %v1283
    %v1285 = vpop.f32.mrb[0].mxu0
    %v1286 = vadd.f32 %v923, %v1285
    %v1287 = vpop.f32.mrb[0].mxu0
    %v1288 = vpop.f32.mrb[0].mxu0
    %1289 = vdwg.mxu0
    %1290 = vmatprep.subr.bf16.mxu0 %v1156
    %1291 = vmatpush1.bf16.msra.mxu0 %v1155
    %1292 = vmatprep.subr.bf16.mxu0 %v1162
    %1293 = vmatpush1.bf16.msra.mxu0 %v1161
    %1294 = vmatprep.subr.bf16.mxu0 %v1168
    %1295 = vmatpush1.bf16.msra.mxu0 %v1167
    %1296 = vmatprep.subr.bf16.mxu0 %v1174
    %1297 = vmatpush1.bf16.msra.mxu0 %v1173
    %1298 = vmatprep.subr.bf16.mxu0 %v1180
    %1299 = vmatpush1.bf16.msra.mxu0 %v1179
    %1300 = vmatprep.subr.bf16.mxu0 %v1186
    %1301 = vmatpush1.bf16.msra.mxu0 %v1185
    %1302 = vmatprep.subr.bf16.mxu0 %v1192
    %1303 = vmatpush1.bf16.msra.mxu0 %v1191
    %1304 = vmatprep.subr.bf16.mxu0 %v1198
    %1305 = vmatpush1.bf16.msra.mxu0 %v1197
    %1306 = vmatprep.subr.bf16.mxu0 0
    %1307 = vmatpush1.bf16.msra.mxu0 0
    %1308 = vmatprep.subr.bf16.mxu0 0
    %1309 = vmatpush1.bf16.msra.mxu0 0
    %1310 = vmatprep.subr.bf16.mxu0 0
    %1311 = vmatpush1.bf16.msra.mxu0 0
    %1312 = vmatprep.subr.bf16.mxu0 0
    %1313 = vmatpush1.bf16.msra.mxu0 0
    %1314 = vmatprep.subr.bf16.mxu0 0
    %1315 = vmatpush1.bf16.msra.mxu0 0
    %1316 = vmatprep.subr.bf16.mxu0 0
    %1317 = vmatpush1.bf16.msra.mxu0 0
    %1318 = vmatprep.subr.bf16.mxu0 0
    %1319 = vmatpush1.bf16.msra.mxu0 0
    %1320 = vmatprep.subr.bf16.mxu0 0
    %1321 = vmatpush1.bf16.msra.mxu0 0
    %1322 = vmatprep.mubr.bf16.mxu0 0
    %1323 = vmatmul.mubr.bf16.gmra.mrb[0].mxu0 %v547
    %v1324 = vpop.f32.mrb[0].mxu0
    %v1325 = vadd.f32 %v962, %v1324
    %v1326 = vpop.f32.mrb[0].mxu0
    %v1327 = vadd.f32 %v964, %v1326
    %v1328 = vpop.f32.mrb[0].mxu0
    %v1329 = vpop.f32.mrb[0].mxu0
    %1330 = vdwg.mxu0
    %1331 = vmatprep.subr.bf16.mxu0 %v1158
    %1332 = vmatpush1.bf16.msra.mxu0 %v1157
    %1333 = vmatprep.subr.bf16.mxu0 %v1164
    %1334 = vmatpush1.bf16.msra.mxu0 %v1163
    %1335 = vmatprep.subr.bf16.mxu0 %v1170
    %1336 = vmatpush1.bf16.msra.mxu0 %v1169
    %1337 = vmatprep.subr.bf16.mxu0 %v1176
    %1338 = vmatpush1.bf16.msra.mxu0 %v1175
    %1339 = vmatprep.subr.bf16.mxu0 %v1182
    %1340 = vmatpush1.bf16.msra.mxu0 %v1181
    %1341 = vmatprep.subr.bf16.mxu0 %v1188
    %1342 = vmatpush1.bf16.msra.mxu0 %v1187
    %1343 = vmatprep.subr.bf16.mxu0 %v1194
    %1344 = vmatpush1.bf16.msra.mxu0 %v1193
    %1345 = vmatprep.subr.bf16.mxu0 %v1200
    %1346 = vmatpush1.bf16.msra.mxu0 %v1199
    %1347 = vmatprep.subr.bf16.mxu0 0
    %1348 = vmatpush1.bf16.msra.mxu0 0
    %1349 = vmatprep.subr.bf16.mxu0 0
    %1350 = vmatpush1.bf16.msra.mxu0 0
    %1351 = vmatprep.subr.bf16.mxu0 0
    %1352 = vmatpush1.bf16.msra.mxu0 0
    %1353 = vmatprep.subr.bf16.mxu0 0
    %1354 = vmatpush1.bf16.msra.mxu0 0
    %1355 = vmatprep.subr.bf16.mxu0 0
    %1356 = vmatpush1.bf16.msra.mxu0 0
    %1357 = vmatprep.subr.bf16.mxu0 0
    %1358 = vmatpush1.bf16.msra.mxu0 0
    %1359 = vmatprep.subr.bf16.mxu0 0
    %1360 = vmatpush1.bf16.msra.mxu0 0
    %1361 = vmatprep.subr.bf16.mxu0 0
    %1362 = vmatpush1.bf16.msra.mxu0 0
    %1363 = vmatprep.mubr.bf16.mxu0 0
    %1364 = vmatmul.mubr.bf16.gmra.mrb[0].mxu0 %v547
    %v1365 = vpop.f32.mrb[0].mxu0
    %v1366 = vadd.f32 %v1003, %v1365
    %v1367 = vpop.f32.mrb[0].mxu0
    %v1368 = vadd.f32 %v1005, %v1367
    %v1369 = vpop.f32.mrb[0].mxu0
    %v1370 = vpop.f32.mrb[0].mxu0
    %1371 = vdwg.mxu0
    %v1372 = vpack.c.bf16 %v501, %v501
    %s1373 = scalar_lea.vmem [#allocation2], 768
    %v1374 = vld [vmem:[%s1373] sm:$0xff]
    %v1375 = vld [vmem:[%s1373 + $0x8] sm:$0xff]
    %v1376 = vld [vmem:[%s1373 + $0x10] sm:$0xff]
    %v1377 = vld [vmem:[%s1373 + $0x18] sm:$0xff]
    %v1378 = vld [vmem:[%s1373 + $0x20] sm:$0xff]
    %v1379 = vld [vmem:[%s1373 + $0x28] sm:$0xff]
    %v1380 = vld [vmem:[%s1373 + $0x30] sm:$0xff]
    %v1381 = vld [vmem:[%s1373 + $0x38] sm:$0xff]
    %v1382 = vld [vmem:[%s1373 + $0x40] sm:$0xff]
    %v1383 = vld [vmem:[%s1373 + $0x48] sm:$0xff]
    %v1384 = vld [vmem:[%s1373 + $0x50] sm:$0xff]
    %v1385 = vld [vmem:[%s1373 + $0x58] sm:$0xff]
    %v1386 = vld [vmem:[%s1373 + $0x60] sm:$0xff]
    %v1387 = vld [vmem:[%s1373 + $0x68] sm:$0xff]
    %v1388 = vld [vmem:[%s1373 + $0x70] sm:$0xff]
    %v1389 = vld [vmem:[%s1373 + $0x78] sm:$0xff]
    %v1390 = vld [vmem:[%s1373 + $0x80] sm:$0xff]
    %v1391 = vld [vmem:[%s1373 + $0x88] sm:$0xff]
    %v1392 = vld [vmem:[%s1373 + $0x90] sm:$0xff]
    %v1393 = vld [vmem:[%s1373 + $0x98] sm:$0xff]
    %v1394 = vld [vmem:[%s1373 + $0xa0] sm:$0xff]
    %v1395 = vld [vmem:[%s1373 + $0xa8] sm:$0xff]
    %v1396 = vld [vmem:[%s1373 + $0xb0] sm:$0xff]
    %v1397 = vld [vmem:[%s1373 + $0xb8] sm:$0xff]
    %v1398 = vld [vmem:[%s1373 + $0xc0] sm:$0xff]
    %v1399 = vld [vmem:[%s1373 + $0xc8] sm:$0xff]
    %v1400 = vld [vmem:[%s1373 + $0xd0] sm:$0xff]
    %v1401 = vld [vmem:[%s1373 + $0xd8] sm:$0xff]
    %v1402 = vld [vmem:[%s1373 + $0xe0] sm:$0xff]
    %v1403 = vld [vmem:[%s1373 + $0xe8] sm:$0xff]
    %v1404 = vld [vmem:[%s1373 + $0xf0] sm:$0xff]
    %v1405 = vld [vmem:[%s1373 + $0xf8] sm:$0xff]
    %v1406 = vld [vmem:[%s1373 + $0x100] sm:$0xff]
    %v1407 = vld [vmem:[%s1373 + $0x108] sm:$0xff]
    %v1408 = vld [vmem:[%s1373 + $0x110] sm:$0xff]
    %v1409 = vld [vmem:[%s1373 + $0x118] sm:$0xff]
    %v1410 = vld [vmem:[%s1373 + $0x120] sm:$0xff]
    %v1411 = vld [vmem:[%s1373 + $0x128] sm:$0xff]
    %v1412 = vld [vmem:[%s1373 + $0x130] sm:$0xff]
    %v1413 = vld [vmem:[%s1373 + $0x138] sm:$0xff]
    %v1414 = vld [vmem:[%s1373 + $0x140] sm:$0xff]
    %v1415 = vld [vmem:[%s1373 + $0x148] sm:$0xff]
    %v1416 = vld [vmem:[%s1373 + $0x150] sm:$0xff]
    %v1417 = vld [vmem:[%s1373 + $0x158] sm:$0xff]
    %v1418 = vld [vmem:[%s1373 + $0x160] sm:$0xff]
    %v1419 = vld [vmem:[%s1373 + $0x168] sm:$0xff]
    %v1420 = vld [vmem:[%s1373 + $0x170] sm:$0xff]
    %v1421 = vld [vmem:[%s1373 + $0x178] sm:$0xff]
    %v1470 = vunpack.c.l.b16 %v1374
    %v1471 = vunpack.c.h.b16 %v1374
    %v1472 = vunpack.c.l.b16 %v1375
    %v1473 = vunpack.c.h.b16 %v1375
    %v1474 = vunpack.c.l.b16 %v1376
    %v1475 = vunpack.c.h.b16 %v1376
    %v1476 = vunpack.c.l.b16 %v1377
    %v1477 = vunpack.c.h.b16 %v1377
    %v1478 = vunpack.c.l.b16 %v1378
    %v1479 = vunpack.c.h.b16 %v1378
    %v1480 = vunpack.c.l.b16 %v1379
    %v1481 = vunpack.c.h.b16 %v1379
    %v1482 = vunpack.c.l.b16 %v1380
    %v1483 = vunpack.c.h.b16 %v1380
    %v1484 = vunpack.c.l.b16 %v1381
    %v1485 = vunpack.c.h.b16 %v1381
    %v1486 = vunpack.c.l.b16 %v1382
    %v1487 = vunpack.c.h.b16 %v1382
    %v1488 = vunpack.c.l.b16 %v1383
    %v1489 = vunpack.c.h.b16 %v1383
    %v1490 = vunpack.c.l.b16 %v1384
    %v1491 = vunpack.c.h.b16 %v1384
    %v1492 = vunpack.c.l.b16 %v1385
    %v1493 = vunpack.c.h.b16 %v1385
    %v1494 = vunpack.c.l.b16 %v1386
    %v1495 = vunpack.c.h.b16 %v1386
    %v1496 = vunpack.c.l.b16 %v1387
    %v1497 = vunpack.c.h.b16 %v1387
    %v1498 = vunpack.c.l.b16 %v1388
    %v1499 = vunpack.c.h.b16 %v1388
    %v1500 = vunpack.c.l.b16 %v1389
    %v1501 = vunpack.c.h.b16 %v1389
    %v1502 = vunpack.c.l.b16 %v1390
    %v1503 = vunpack.c.h.b16 %v1390
    %v1504 = vunpack.c.l.b16 %v1391
    %v1505 = vunpack.c.h.b16 %v1391
    %v1506 = vunpack.c.l.b16 %v1392
    %v1507 = vunpack.c.h.b16 %v1392
    %v1508 = vunpack.c.l.b16 %v1393
    %v1509 = vunpack.c.h.b16 %v1393
    %v1510 = vunpack.c.l.b16 %v1394
    %v1511 = vunpack.c.h.b16 %v1394
    %v1512 = vunpack.c.l.b16 %v1395
    %v1513 = vunpack.c.h.b16 %v1395
    %v1514 = vunpack.c.l.b16 %v1396
    %v1515 = vunpack.c.h.b16 %v1396
    %v1516 = vunpack.c.l.b16 %v1397
    %v1517 = vunpack.c.h.b16 %v1397
    %v1518 = vunpack.c.l.b16 %v1398
    %v1519 = vunpack.c.h.b16 %v1398
    %v1520 = vunpack.c.l.b16 %v1399
    %v1521 = vunpack.c.h.b16 %v1399
    %v1522 = vunpack.c.l.b16 %v1400
    %v1523 = vunpack.c.h.b16 %v1400
    %v1524 = vunpack.c.l.b16 %v1401
    %v1525 = vunpack.c.h.b16 %v1401
    %v1526 = vunpack.c.l.b16 %v1402
    %v1527 = vunpack.c.h.b16 %v1402
    %v1528 = vunpack.c.l.b16 %v1403
    %v1529 = vunpack.c.h.b16 %v1403
    %v1530 = vunpack.c.l.b16 %v1404
    %v1531 = vunpack.c.h.b16 %v1404
    %v1532 = vunpack.c.l.b16 %v1405
    %v1533 = vunpack.c.h.b16 %v1405
    %v1534 = vunpack.c.l.b16 %v1406
    %v1535 = vunpack.c.h.b16 %v1406
    %v1536 = vunpack.c.l.b16 %v1407
    %v1537 = vunpack.c.h.b16 %v1407
    %v1538 = vunpack.c.l.b16 %v1408
    %v1539 = vunpack.c.h.b16 %v1408
    %v1540 = vunpack.c.l.b16 %v1409
    %v1541 = vunpack.c.h.b16 %v1409
    %v1542 = vunpack.c.l.b16 %v1410
    %v1543 = vunpack.c.h.b16 %v1410
    %v1544 = vunpack.c.l.b16 %v1411
    %v1545 = vunpack.c.h.b16 %v1411
    %v1546 = vunpack.c.l.b16 %v1412
    %v1547 = vunpack.c.h.b16 %v1412
    %v1548 = vunpack.c.l.b16 %v1413
    %v1549 = vunpack.c.h.b16 %v1413
    %v1550 = vunpack.c.l.b16 %v1414
    %v1551 = vunpack.c.h.b16 %v1414
    %v1552 = vunpack.c.l.b16 %v1415
    %v1553 = vunpack.c.h.b16 %v1415
    %v1554 = vunpack.c.l.b16 %v1416
    %v1555 = vunpack.c.h.b16 %v1416
    %v1556 = vunpack.c.l.b16 %v1417
    %v1557 = vunpack.c.h.b16 %v1417
    %v1558 = vunpack.c.l.b16 %v1418
    %v1559 = vunpack.c.h.b16 %v1418
    %v1560 = vunpack.c.l.b16 %v1419
    %v1561 = vunpack.c.h.b16 %v1419
    %v1562 = vunpack.c.l.b16 %v1420
    %v1563 = vunpack.c.h.b16 %v1420
    %v1564 = vunpack.c.l.b16 %v1421
    %v1565 = vunpack.c.h.b16 %v1421
    %v1566 = vpack.c.b16 %v1476, %v1470
    %v1567 = vpack.c.b16 %v1477, %v1471
    %v1568 = vpack.c.b16 %v1478, %v1472
    %v1569 = vpack.c.b16 %v1479, %v1473
    %v1570 = vpack.c.b16 %v1480, %v1474
    %v1571 = vpack.c.b16 %v1481, %v1475
    %v1572 = vpack.c.b16 %v1488, %v1482
    %v1573 = vpack.c.b16 %v1489, %v1483
    %v1574 = vpack.c.b16 %v1490, %v1484
    %v1575 = vpack.c.b16 %v1491, %v1485
    %v1576 = vpack.c.b16 %v1492, %v1486
    %v1577 = vpack.c.b16 %v1493, %v1487
    %v1578 = vpack.c.b16 %v1500, %v1494
    %v1579 = vpack.c.b16 %v1501, %v1495
    %v1580 = vpack.c.b16 %v1502, %v1496
    %v1581 = vpack.c.b16 %v1503, %v1497
    %v1582 = vpack.c.b16 %v1504, %v1498
    %v1583 = vpack.c.b16 %v1505, %v1499
    %v1584 = vpack.c.b16 %v1512, %v1506
    %v1585 = vpack.c.b16 %v1513, %v1507
    %v1586 = vpack.c.b16 %v1514, %v1508
    %v1587 = vpack.c.b16 %v1515, %v1509
    %v1588 = vpack.c.b16 %v1516, %v1510
    %v1589 = vpack.c.b16 %v1517, %v1511
    %v1590 = vpack.c.b16 %v1524, %v1518
    %v1591 = vpack.c.b16 %v1525, %v1519
    %v1592 = vpack.c.b16 %v1526, %v1520
    %v1593 = vpack.c.b16 %v1527, %v1521
    %v1594 = vpack.c.b16 %v1528, %v1522
    %v1595 = vpack.c.b16 %v1529, %v1523
    %v1596 = vpack.c.b16 %v1536, %v1530
    %v1597 = vpack.c.b16 %v1537, %v1531
    %v1598 = vpack.c.b16 %v1538, %v1532
    %v1599 = vpack.c.b16 %v1539, %v1533
    %v1600 = vpack.c.b16 %v1540, %v1534
    %v1601 = vpack.c.b16 %v1541, %v1535
    %v1602 = vpack.c.b16 %v1548, %v1542
    %v1603 = vpack.c.b16 %v1549, %v1543
    %v1604 = vpack.c.b16 %v1550, %v1544
    %v1605 = vpack.c.b16 %v1551, %v1545
    %v1606 = vpack.c.b16 %v1552, %v1546
    %v1607 = vpack.c.b16 %v1553, %v1547
    %v1608 = vpack.c.b16 %v1560, %v1554
    %v1609 = vpack.c.b16 %v1561, %v1555
    %v1610 = vpack.c.b16 %v1562, %v1556
    %v1611 = vpack.c.b16 %v1563, %v1557
    %v1612 = vpack.c.b16 %v1564, %v1558
    %v1613 = vpack.c.b16 %v1565, %v1559
    %1662 = vmatprep.subr.bf16.mxu0 %v1567
    %1663 = vmatpush1.bf16.msra.mxu0 %v1566
    %1664 = vmatprep.subr.bf16.mxu0 %v1573
    %1665 = vmatpush1.bf16.msra.mxu0 %v1572
    %1666 = vmatprep.subr.bf16.mxu0 %v1579
    %1667 = vmatpush1.bf16.msra.mxu0 %v1578
    %1668 = vmatprep.subr.bf16.mxu0 %v1585
    %1669 = vmatpush1.bf16.msra.mxu0 %v1584
    %1670 = vmatprep.subr.bf16.mxu0 %v1591
    %1671 = vmatpush1.bf16.msra.mxu0 %v1590
    %1672 = vmatprep.subr.bf16.mxu0 %v1597
    %1673 = vmatpush1.bf16.msra.mxu0 %v1596
    %1674 = vmatprep.subr.bf16.mxu0 %v1603
    %1675 = vmatpush1.bf16.msra.mxu0 %v1602
    %1676 = vmatprep.subr.bf16.mxu0 %v1609
    %1677 = vmatpush1.bf16.msra.mxu0 %v1608
    %1678 = vmatprep.subr.bf16.mxu0 0
    %1679 = vmatpush1.bf16.msra.mxu0 0
    %1680 = vmatprep.subr.bf16.mxu0 0
    %1681 = vmatpush1.bf16.msra.mxu0 0
    %1682 = vmatprep.subr.bf16.mxu0 0
    %1683 = vmatpush1.bf16.msra.mxu0 0
    %1684 = vmatprep.subr.bf16.mxu0 0
    %1685 = vmatpush1.bf16.msra.mxu0 0
    %1686 = vmatprep.subr.bf16.mxu0 0
    %1687 = vmatpush1.bf16.msra.mxu0 0
    %1688 = vmatprep.subr.bf16.mxu0 0
    %1689 = vmatpush1.bf16.msra.mxu0 0
    %1690 = vmatprep.subr.bf16.mxu0 0
    %1691 = vmatpush1.bf16.msra.mxu0 0
    %1692 = vmatprep.subr.bf16.mxu0 0
    %1693 = vmatpush1.bf16.msra.mxu0 0
    %1694 = vmatprep.mubr.bf16.mxu0 0
    %1695 = vmatmul.mubr.bf16.gmra.mrb[0].mxu0 %v1372
    %v1696 = vpop.f32.mrb[0].mxu0
    %v1697 = vadd.f32 0.0, %v1696
    %v1698 = vpop.f32.mrb[0].mxu0
    %v1699 = vadd.f32 0.0, %v1698
    %v1700 = vpop.f32.mrb[0].mxu0
    %v1701 = vpop.f32.mrb[0].mxu0
    %1702 = vdwg.mxu0
    %1703 = vmatprep.subr.bf16.mxu0 %v1569
    %1704 = vmatpush1.bf16.msra.mxu0 %v1568
    %1705 = vmatprep.subr.bf16.mxu0 %v1575
    %1706 = vmatpush1.bf16.msra.mxu0 %v1574
    %1707 = vmatprep.subr.bf16.mxu0 %v1581
    %1708 = vmatpush1.bf16.msra.mxu0 %v1580
    %1709 = vmatprep.subr.bf16.mxu0 %v1587
    %1710 = vmatpush1.bf16.msra.mxu0 %v1586
    %1711 = vmatprep.subr.bf16.mxu0 %v1593
    %1712 = vmatpush1.bf16.msra.mxu0 %v1592
    %1713 = vmatprep.subr.bf16.mxu0 %v1599
    %1714 = vmatpush1.bf16.msra.mxu0 %v1598
    %1715 = vmatprep.subr.bf16.mxu0 %v1605
    %1716 = vmatpush1.bf16.msra.mxu0 %v1604
    %1717 = vmatprep.subr.bf16.mxu0 %v1611
    %1718 = vmatpush1.bf16.msra.mxu0 %v1610
    %1719 = vmatprep.subr.bf16.mxu0 0
    %1720 = vmatpush1.bf16.msra.mxu0 0
    %1721 = vmatprep.subr.bf16.mxu0 0
    %1722 = vmatpush1.bf16.msra.mxu0 0
    %1723 = vmatprep.subr.bf16.mxu0 0
    %1724 = vmatpush1.bf16.msra.mxu0 0
    %1725 = vmatprep.subr.bf16.mxu0 0
    %1726 = vmatpush1.bf16.msra.mxu0 0
    %1727 = vmatprep.subr.bf16.mxu0 0
    %1728 = vmatpush1.bf16.msra.mxu0 0
    %1729 = vmatprep.subr.bf16.mxu0 0
    %1730 = vmatpush1.bf16.msra.mxu0 0
    %1731 = vmatprep.subr.bf16.mxu0 0
    %1732 = vmatpush1.bf16.msra.mxu0 0
    %1733 = vmatprep.subr.bf16.mxu0 0
    %1734 = vmatpush1.bf16.msra.mxu0 0
    %1735 = vmatprep.mubr.bf16.mxu0 0
    %1736 = vmatmul.mubr.bf16.gmra.mrb[0].mxu0 %v1372
    %v1737 = vpop.f32.mrb[0].mxu0
    %v1738 = vadd.f32 0.0, %v1737
    %v1739 = vpop.f32.mrb[0].mxu0
    %v1740 = vadd.f32 0.0, %v1739
    %v1741 = vpop.f32.mrb[0].mxu0
    %v1742 = vpop.f32.mrb[0].mxu0
    %1743 = vdwg.mxu0
    %1744 = vmatprep.subr.bf16.mxu0 %v1571
    %1745 = vmatpush1.bf16.msra.mxu0 %v1570
    %1746 = vmatprep.subr.bf16.mxu0 %v1577
    %1747 = vmatpush1.bf16.msra.mxu0 %v1576
    %1748 = vmatprep.subr.bf16.mxu0 %v1583
    %1749 = vmatpush1.bf16.msra.mxu0 %v1582
    %1750 = vmatprep.subr.bf16.mxu0 %v1589
    %1751 = vmatpush1.bf16.msra.mxu0 %v1588
    %1752 = vmatprep.subr.bf16.mxu0 %v1595
    %1753 = vmatpush1.bf16.msra.mxu0 %v1594
    %1754 = vmatprep.subr.bf16.mxu0 %v1601
    %1755 = vmatpush1.bf16.msra.mxu0 %v1600
    %1756 = vmatprep.subr.bf16.mxu0 %v1607
    %1757 = vmatpush1.bf16.msra.mxu0 %v1606
    %1758 = vmatprep.subr.bf16.mxu0 %v1613
    %1759 = vmatpush1.bf16.msra.mxu0 %v1612
    %1760 = vmatprep.subr.bf16.mxu0 0
    %1761 = vmatpush1.bf16.msra.mxu0 0
    %1762 = vmatprep.subr.bf16.mxu0 0
    %1763 = vmatpush1.bf16.msra.mxu0 0
    %1764 = vmatprep.subr.bf16.mxu0 0
    %1765 = vmatpush1.bf16.msra.mxu0 0
    %1766 = vmatprep.subr.bf16.mxu0 0
    %1767 = vmatpush1.bf16.msra.mxu0 0
    %1768 = vmatprep.subr.bf16.mxu0 0
    %1769 = vmatpush1.bf16.msra.mxu0 0
    %1770 = vmatprep.subr.bf16.mxu0 0
    %1771 = vmatpush1.bf16.msra.mxu0 0
    %1772 = vmatprep.subr.bf16.mxu0 0
    %1773 = vmatpush1.bf16.msra.mxu0 0
    %1774 = vmatprep.subr.bf16.mxu0 0
    %1775 = vmatpush1.bf16.msra.mxu0 0
    %1776 = vmatprep.mubr.bf16.mxu0 0
    %1777 = vmatmul.mubr.bf16.gmra.mrb[0].mxu0 %v1372
    %v1778 = vpop.f32.mrb[0].mxu0
    %v1779 = vadd.f32 0.0, %v1778
    %v1780 = vpop.f32.mrb[0].mxu0
    %v1781 = vadd.f32 0.0, %v1780
    %v1782 = vpop.f32.mrb[0].mxu0
    %v1783 = vpop.f32.mrb[0].mxu0
    %1784 = vdwg.mxu0
    %v1785 = vadd.f32 %v1284, %v1697
    %v1786 = vadd.f32 %v1286, %v1699
    %v1787 = vadd.f32 %v1325, %v1738
    %v1788 = vadd.f32 %v1327, %v1740
    %v1789 = vadd.f32 %v1366, %v1779
    %v1790 = vadd.f32 %v1368, %v1781
    %v1791 = vpack.c.bf16 %v546, %v546
    %s1792 = scalar_lea.vmem [#allocation2], 1152
    %v1793 = vld [vmem:[%s1792] sm:$0xff]
    %v1794 = vld [vmem:[%s1792 + $0x8] sm:$0xff]
    %v1795 = vld [vmem:[%s1792 + $0x10] sm:$0xff]
    %v1796 = vld [vmem:[%s1792 + $0x18] sm:$0xff]
    %v1797 = vld [vmem:[%s1792 + $0x20] sm:$0xff]
    %v1798 = vld [vmem:[%s1792 + $0x28] sm:$0xff]
    %v1799 = vld [vmem:[%s1792 + $0x30] sm:$0xff]
    %v1800 = vld [vmem:[%s1792 + $0x38] sm:$0xff]
    %v1801 = vld [vmem:[%s1792 + $0x40] sm:$0xff]
    %v1802 = vld [vmem:[%s1792 + $0x48] sm:$0xff]
    %v1803 = vld [vmem:[%s1792 + $0x50] sm:$0xff]
    %v1804 = vld [vmem:[%s1792 + $0x58] sm:$0xff]
    %v1805 = vld [vmem:[%s1792 + $0x60] sm:$0xff]
    %v1806 = vld [vmem:[%s1792 + $0x68] sm:$0xff]
    %v1807 = vld [vmem:[%s1792 + $0x70] sm:$0xff]
    %v1808 = vld [vmem:[%s1792 + $0x78] sm:$0xff]
    %v1809 = vld [vmem:[%s1792 + $0x80] sm:$0xff]
    %v1810 = vld [vmem:[%s1792 + $0x88] sm:$0xff]
    %v1811 = vld [vmem:[%s1792 + $0x90] sm:$0xff]
    %v1812 = vld [vmem:[%s1792 + $0x98] sm:$0xff]
    %v1813 = vld [vmem:[%s1792 + $0xa0] sm:$0xff]
    %v1814 = vld [vmem:[%s1792 + $0xa8] sm:$0xff]
    %v1815 = vld [vmem:[%s1792 + $0xb0] sm:$0xff]
    %v1816 = vld [vmem:[%s1792 + $0xb8] sm:$0xff]
    %v1817 = vld [vmem:[%s1792 + $0xc0] sm:$0xff]
    %v1818 = vld [vmem:[%s1792 + $0xc8] sm:$0xff]
    %v1819 = vld [vmem:[%s1792 + $0xd0] sm:$0xff]
    %v1820 = vld [vmem:[%s1792 + $0xd8] sm:$0xff]
    %v1821 = vld [vmem:[%s1792 + $0xe0] sm:$0xff]
    %v1822 = vld [vmem:[%s1792 + $0xe8] sm:$0xff]
    %v1823 = vld [vmem:[%s1792 + $0xf0] sm:$0xff]
    %v1824 = vld [vmem:[%s1792 + $0xf8] sm:$0xff]
    %v1825 = vld [vmem:[%s1792 + $0x100] sm:$0xff]
    %v1826 = vld [vmem:[%s1792 + $0x108] sm:$0xff]
    %v1827 = vld [vmem:[%s1792 + $0x110] sm:$0xff]
    %v1828 = vld [vmem:[%s1792 + $0x118] sm:$0xff]
    %v1829 = vld [vmem:[%s1792 + $0x120] sm:$0xff]
    %v1830 = vld [vmem:[%s1792 + $0x128] sm:$0xff]
    %v1831 = vld [vmem:[%s1792 + $0x130] sm:$0xff]
    %v1832 = vld [vmem:[%s1792 + $0x138] sm:$0xff]
    %v1833 = vld [vmem:[%s1792 + $0x140] sm:$0xff]
    %v1834 = vld [vmem:[%s1792 + $0x148] sm:$0xff]
    %v1835 = vld [vmem:[%s1792 + $0x150] sm:$0xff]
    %v1836 = vld [vmem:[%s1792 + $0x158] sm:$0xff]
    %v1837 = vld [vmem:[%s1792 + $0x160] sm:$0xff]
    %v1838 = vld [vmem:[%s1792 + $0x168] sm:$0xff]
    %v1839 = vld [vmem:[%s1792 + $0x170] sm:$0xff]
    %v1840 = vld [vmem:[%s1792 + $0x178] sm:$0xff]
    %v1889 = vunpack.c.l.b16 %v1793
    %v1890 = vunpack.c.h.b16 %v1793
    %v1891 = vunpack.c.l.b16 %v1794
    %v1892 = vunpack.c.h.b16 %v1794
    %v1893 = vunpack.c.l.b16 %v1795
    %v1894 = vunpack.c.h.b16 %v1795
    %v1895 = vunpack.c.l.b16 %v1796
    %v1896 = vunpack.c.h.b16 %v1796
    %v1897 = vunpack.c.l.b16 %v1797
    %v1898 = vunpack.c.h.b16 %v1797
    %v1899 = vunpack.c.l.b16 %v1798
    %v1900 = vunpack.c.h.b16 %v1798
    %v1901 = vunpack.c.l.b16 %v1799
    %v1902 = vunpack.c.h.b16 %v1799
    %v1903 = vunpack.c.l.b16 %v1800
    %v1904 = vunpack.c.h.b16 %v1800
    %v1905 = vunpack.c.l.b16 %v1801
    %v1906 = vunpack.c.h.b16 %v1801
    %v1907 = vunpack.c.l.b16 %v1802
    %v1908 = vunpack.c.h.b16 %v1802
    %v1909 = vunpack.c.l.b16 %v1803
    %v1910 = vunpack.c.h.b16 %v1803
    %v1911 = vunpack.c.l.b16 %v1804
    %v1912 = vunpack.c.h.b16 %v1804
    %v1913 = vunpack.c.l.b16 %v1805
    %v1914 = vunpack.c.h.b16 %v1805
    %v1915 = vunpack.c.l.b16 %v1806
    %v1916 = vunpack.c.h.b16 %v1806
    %v1917 = vunpack.c.l.b16 %v1807
    %v1918 = vunpack.c.h.b16 %v1807
    %v1919 = vunpack.c.l.b16 %v1808
    %v1920 = vunpack.c.h.b16 %v1808
    %v1921 = vunpack.c.l.b16 %v1809
    %v1922 = vunpack.c.h.b16 %v1809
    %v1923 = vunpack.c.l.b16 %v1810
    %v1924 = vunpack.c.h.b16 %v1810
    %v1925 = vunpack.c.l.b16 %v1811
    %v1926 = vunpack.c.h.b16 %v1811
    %v1927 = vunpack.c.l.b16 %v1812
    %v1928 = vunpack.c.h.b16 %v1812
    %v1929 = vunpack.c.l.b16 %v1813
    %v1930 = vunpack.c.h.b16 %v1813
    %v1931 = vunpack.c.l.b16 %v1814
    %v1932 = vunpack.c.h.b16 %v1814
    %v1933 = vunpack.c.l.b16 %v1815
    %v1934 = vunpack.c.h.b16 %v1815
    %v1935 = vunpack.c.l.b16 %v1816
    %v1936 = vunpack.c.h.b16 %v1816
    %v1937 = vunpack.c.l.b16 %v1817
    %v1938 = vunpack.c.h.b16 %v1817
    %v1939 = vunpack.c.l.b16 %v1818
    %v1940 = vunpack.c.h.b16 %v1818
    %v1941 = vunpack.c.l.b16 %v1819
    %v1942 = vunpack.c.h.b16 %v1819
    %v1943 = vunpack.c.l.b16 %v1820
    %v1944 = vunpack.c.h.b16 %v1820
    %v1945 = vunpack.c.l.b16 %v1821
    %v1946 = vunpack.c.h.b16 %v1821
    %v1947 = vunpack.c.l.b16 %v1822
    %v1948 = vunpack.c.h.b16 %v1822
    %v1949 = vunpack.c.l.b16 %v1823
    %v1950 = vunpack.c.h.b16 %v1823
    %v1951 = vunpack.c.l.b16 %v1824
    %v1952 = vunpack.c.h.b16 %v1824
    %v1953 = vunpack.c.l.b16 %v1825
    %v1954 = vunpack.c.h.b16 %v1825
    %v1955 = vunpack.c.l.b16 %v1826
    %v1956 = vunpack.c.h.b16 %v1826
    %v1957 = vunpack.c.l.b16 %v1827
    %v1958 = vunpack.c.h.b16 %v1827
    %v1959 = vunpack.c.l.b16 %v1828
    %v1960 = vunpack.c.h.b16 %v1828
    %v1961 = vunpack.c.l.b16 %v1829
    %v1962 = vunpack.c.h.b16 %v1829
    %v1963 = vunpack.c.l.b16 %v1830
    %v1964 = vunpack.c.h.b16 %v1830
    %v1965 = vunpack.c.l.b16 %v1831
    %v1966 = vunpack.c.h.b16 %v1831
    %v1967 = vunpack.c.l.b16 %v1832
    %v1968 = vunpack.c.h.b16 %v1832
    %v1969 = vunpack.c.l.b16 %v1833
    %v1970 = vunpack.c.h.b16 %v1833
    %v1971 = vunpack.c.l.b16 %v1834
    %v1972 = vunpack.c.h.b16 %v1834
    %v1973 = vunpack.c.l.b16 %v1835
    %v1974 = vunpack.c.h.b16 %v1835
    %v1975 = vunpack.c.l.b16 %v1836
    %v1976 = vunpack.c.h.b16 %v1836
    %v1977 = vunpack.c.l.b16 %v1837
    %v1978 = vunpack.c.h.b16 %v1837
    %v1979 = vunpack.c.l.b16 %v1838
    %v1980 = vunpack.c.h.b16 %v1838
    %v1981 = vunpack.c.l.b16 %v1839
    %v1982 = vunpack.c.h.b16 %v1839
    %v1983 = vunpack.c.l.b16 %v1840
    %v1984 = vunpack.c.h.b16 %v1840
    %v1985 = vpack.c.b16 %v1895, %v1889
    %v1986 = vpack.c.b16 %v1896, %v1890
    %v1987 = vpack.c.b16 %v1897, %v1891
    %v1988 = vpack.c.b16 %v1898, %v1892
    %v1989 = vpack.c.b16 %v1899, %v1893
    %v1990 = vpack.c.b16 %v1900, %v1894
    %v1991 = vpack.c.b16 %v1907, %v1901
    %v1992 = vpack.c.b16 %v1908, %v1902
    %v1993 = vpack.c.b16 %v1909, %v1903
    %v1994 = vpack.c.b16 %v1910, %v1904
    %v1995 = vpack.c.b16 %v1911, %v1905
    %v1996 = vpack.c.b16 %v1912, %v1906
    %v1997 = vpack.c.b16 %v1919, %v1913
    %v1998 = vpack.c.b16 %v1920, %v1914
    %v1999 = vpack.c.b16 %v1921, %v1915
    %v2000 = vpack.c.b16 %v1922, %v1916
    %v2001 = vpack.c.b16 %v1923, %v1917
    %v2002 = vpack.c.b16 %v1924, %v1918
    %v2003 = vpack.c.b16 %v1931, %v1925
    %v2004 = vpack.c.b16 %v1932, %v1926
    %v2005 = vpack.c.b16 %v1933, %v1927
    %v2006 = vpack.c.b16 %v1934, %v1928
    %v2007 = vpack.c.b16 %v1935, %v1929
    %v2008 = vpack.c.b16 %v1936, %v1930
    %v2009 = vpack.c.b16 %v1943, %v1937
    %v2010 = vpack.c.b16 %v1944, %v1938
    %v2011 = vpack.c.b16 %v1945, %v1939
    %v2012 = vpack.c.b16 %v1946, %v1940
    %v2013 = vpack.c.b16 %v1947, %v1941
    %v2014 = vpack.c.b16 %v1948, %v1942
    %v2015 = vpack.c.b16 %v1955, %v1949
    %v2016 = vpack.c.b16 %v1956, %v1950
    %v2017 = vpack.c.b16 %v1957, %v1951
    %v2018 = vpack.c.b16 %v1958, %v1952
    %v2019 = vpack.c.b16 %v1959, %v1953
    %v2020 = vpack.c.b16 %v1960, %v1954
    %v2021 = vpack.c.b16 %v1967, %v1961
    %v2022 = vpack.c.b16 %v1968, %v1962
    %v2023 = vpack.c.b16 %v1969, %v1963
    %v2024 = vpack.c.b16 %v1970, %v1964
    %v2025 = vpack.c.b16 %v1971, %v1965
    %v2026 = vpack.c.b16 %v1972, %v1966
    %v2027 = vpack.c.b16 %v1979, %v1973
    %v2028 = vpack.c.b16 %v1980, %v1974
    %v2029 = vpack.c.b16 %v1981, %v1975
    %v2030 = vpack.c.b16 %v1982, %v1976
    %v2031 = vpack.c.b16 %v1983, %v1977
    %v2032 = vpack.c.b16 %v1984, %v1978
    %2081 = vmatprep.subr.bf16.mxu0 %v1986
    %2082 = vmatpush1.bf16.msra.mxu0 %v1985
    %2083 = vmatprep.subr.bf16.mxu0 %v1992
    %2084 = vmatpush1.bf16.msra.mxu0 %v1991
    %2085 = vmatprep.subr.bf16.mxu0 %v1998
    %2086 = vmatpush1.bf16.msra.mxu0 %v1997
    %2087 = vmatprep.subr.bf16.mxu0 %v2004
    %2088 = vmatpush1.bf16.msra.mxu0 %v2003
    %2089 = vmatprep.subr.bf16.mxu0 %v2010
    %2090 = vmatpush1.bf16.msra.mxu0 %v2009
    %2091 = vmatprep.subr.bf16.mxu0 %v2016
    %2092 = vmatpush1.bf16.msra.mxu0 %v2015
    %2093 = vmatprep.subr.bf16.mxu0 %v2022
    %2094 = vmatpush1.bf16.msra.mxu0 %v2021
    %2095 = vmatprep.subr.bf16.mxu0 %v2028
    %2096 = vmatpush1.bf16.msra.mxu0 %v2027
    %2097 = vmatprep.subr.bf16.mxu0 0
    %2098 = vmatpush1.bf16.msra.mxu0 0
    %2099 = vmatprep.subr.bf16.mxu0 0
    %2100 = vmatpush1.bf16.msra.mxu0 0
    %2101 = vmatprep.subr.bf16.mxu0 0
    %2102 = vmatpush1.bf16.msra.mxu0 0
    %2103 = vmatprep.subr.bf16.mxu0 0
    %2104 = vmatpush1.bf16.msra.mxu0 0
    %2105 = vmatprep.subr.bf16.mxu0 0
    %2106 = vmatpush1.bf16.msra.mxu0 0
    %2107 = vmatprep.subr.bf16.mxu0 0
    %2108 = vmatpush1.bf16.msra.mxu0 0
    %2109 = vmatprep.subr.bf16.mxu0 0
    %2110 = vmatpush1.bf16.msra.mxu0 0
    %2111 = vmatprep.subr.bf16.mxu0 0
    %2112 = vmatpush1.bf16.msra.mxu0 0
    %2113 = vmatprep.mubr.bf16.mxu0 0
    %2114 = vmatmul.mubr.bf16.gmra.mrb[0].mxu0 %v1791
    %v2115 = vpop.f32.mrb[0].mxu0
    %v2116 = vadd.f32 0.0, %v2115
    %v2117 = vpop.f32.mrb[0].mxu0
    %v2118 = vadd.f32 0.0, %v2117
    %v2119 = vpop.f32.mrb[0].mxu0
    %v2120 = vpop.f32.mrb[0].mxu0
    %2121 = vdwg.mxu0
    %2122 = vmatprep.subr.bf16.mxu0 %v1988
    %2123 = vmatpush1.bf16.msra.mxu0 %v1987
    %2124 = vmatprep.subr.bf16.mxu0 %v1994
    %2125 = vmatpush1.bf16.msra.mxu0 %v1993
    %2126 = vmatprep.subr.bf16.mxu0 %v2000
    %2127 = vmatpush1.bf16.msra.mxu0 %v1999
    %2128 = vmatprep.subr.bf16.mxu0 %v2006
    %2129 = vmatpush1.bf16.msra.mxu0 %v2005
    %2130 = vmatprep.subr.bf16.mxu0 %v2012
    %2131 = vmatpush1.bf16.msra.mxu0 %v2011
    %2132 = vmatprep.subr.bf16.mxu0 %v2018
    %2133 = vmatpush1.bf16.msra.mxu0 %v2017
    %2134 = vmatprep.subr.bf16.mxu0 %v2024
    %2135 = vmatpush1.bf16.msra.mxu0 %v2023
    %2136 = vmatprep.subr.bf16.mxu0 %v2030
    %2137 = vmatpush1.bf16.msra.mxu0 %v2029
    %2138 = vmatprep.subr.bf16.mxu0 0
    %2139 = vmatpush1.bf16.msra.mxu0 0
    %2140 = vmatprep.subr.bf16.mxu0 0
    %2141 = vmatpush1.bf16.msra.mxu0 0
    %2142 = vmatprep.subr.bf16.mxu0 0
    %2143 = vmatpush1.bf16.msra.mxu0 0
    %2144 = vmatprep.subr.bf16.mxu0 0
    %2145 = vmatpush1.bf16.msra.mxu0 0
    %2146 = vmatprep.subr.bf16.mxu0 0
    %2147 = vmatpush1.bf16.msra.mxu0 0
    %2148 = vmatprep.subr.bf16.mxu0 0
    %2149 = vmatpush1.bf16.msra.mxu0 0
    %2150 = vmatprep.subr.bf16.mxu0 0
    %2151 = vmatpush1.bf16.msra.mxu0 0
    %2152 = vmatprep.subr.bf16.mxu0 0
    %2153 = vmatpush1.bf16.msra.mxu0 0
    %2154 = vmatprep.mubr.bf16.mxu0 0
    %2155 = vmatmul.mubr.bf16.gmra.mrb[0].mxu0 %v1791
    %v2156 = vpop.f32.mrb[0].mxu0
    %v2157 = vadd.f32 0.0, %v2156
    %v2158 = vpop.f32.mrb[0].mxu0
    %v2159 = vadd.f32 0.0, %v2158
    %v2160 = vpop.f32.mrb[0].mxu0
    %v2161 = vpop.f32.mrb[0].mxu0
    %2162 = vdwg.mxu0
    %2163 = vmatprep.subr.bf16.mxu0 %v1990
    %2164 = vmatpush1.bf16.msra.mxu0 %v1989
    %2165 = vmatprep.subr.bf16.mxu0 %v1996
    %2166 = vmatpush1.bf16.msra.mxu0 %v1995
    %2167 = vmatprep.subr.bf16.mxu0 %v2002
    %2168 = vmatpush1.bf16.msra.mxu0 %v2001
    %2169 = vmatprep.subr.bf16.mxu0 %v2008
    %2170 = vmatpush1.bf16.msra.mxu0 %v2007
    %2171 = vmatprep.subr.bf16.mxu0 %v2014
    %2172 = vmatpush1.bf16.msra.mxu0 %v2013
    %2173 = vmatprep.subr.bf16.mxu0 %v2020
    %2174 = vmatpush1.bf16.msra.mxu0 %v2019
    %2175 = vmatprep.subr.bf16.mxu0 %v2026
    %2176 = vmatpush1.bf16.msra.mxu0 %v2025
    %2177 = vmatprep.subr.bf16.mxu0 %v2032
    %2178 = vmatpush1.bf16.msra.mxu0 %v2031
    %2179 = vmatprep.subr.bf16.mxu0 0
    %2180 = vmatpush1.bf16.msra.mxu0 0
    %2181 = vmatprep.subr.bf16.mxu0 0
    %2182 = vmatpush1.bf16.msra.mxu0 0
    %2183 = vmatprep.subr.bf16.mxu0 0
    %2184 = vmatpush1.bf16.msra.mxu0 0
    %2185 = vmatprep.subr.bf16.mxu0 0
    %2186 = vmatpush1.bf16.msra.mxu0 0
    %2187 = vmatprep.subr.bf16.mxu0 0
    %2188 = vmatpush1.bf16.msra.mxu0 0
    %2189 = vmatprep.subr.bf16.mxu0 0
    %2190 = vmatpush1.bf16.msra.mxu0 0
    %2191 = vmatprep.subr.bf16.mxu0 0
    %2192 = vmatpush1.bf16.msra.mxu0 0
    %2193 = vmatprep.subr.bf16.mxu0 0
    %2194 = vmatpush1.bf16.msra.mxu0 0
    %2195 = vmatprep.mubr.bf16.mxu0 0
    %2196 = vmatmul.mubr.bf16.gmra.mrb[0].mxu0 %v1791
    %v2197 = vpop.f32.mrb[0].mxu0
    %v2198 = vadd.f32 0.0, %v2197
    %v2199 = vpop.f32.mrb[0].mxu0
    %v2200 = vadd.f32 0.0, %v2199
    %v2201 = vpop.f32.mrb[0].mxu0
    %v2202 = vpop.f32.mrb[0].mxu0
    %2203 = vdwg.mxu0
    %v2204 = vadd.f32 %v1785, %v2116
    %v2205 = vadd.f32 %v1786, %v2118
    %v2206 = vadd.f32 %v1787, %v2157
    %v2207 = vadd.f32 %v1788, %v2159
    %v2208 = vadd.f32 %v1789, %v2198
    %v2209 = vadd.f32 %v1790, %v2200
    %v2210 = vld [vmem:[%s4] sm:$0x3f]
    %v2212 = vlaneseq
    %v2213 = vshrl.u32 %v2212, 7
    %v2214 = vsub.s32 0, %v2213
    %v2215 = vrot.slane %v2210, %v2214
    %v2216 = vlaneseq
    %v2217 = vshrl.u32 %v2216, 7
    %v2218 = vsub.s32 1, %v2217
    %v2219 = vrot.slane %v2210, %v2218
    %v2220 = vlaneseq
    %v2221 = vshrl.u32 %v2220, 7
    %v2222 = vsub.s32 2, %v2221
    %v2223 = vrot.slane %v2210, %v2222
    %v2224 = vlaneseq
    %v2225 = vshrl.u32 %v2224, 7
    %v2226 = vsub.s32 3, %v2225
    %v2227 = vrot.slane %v2210, %v2226
    %v2228 = vlaneseq
    %v2229 = vshrl.u32 %v2228, 7
    %v2230 = vsub.s32 4, %v2229
    %v2231 = vrot.slane %v2210, %v2230
    %v2232 = vlaneseq
    %v2233 = vshrl.u32 %v2232, 7
    %v2234 = vsub.s32 5, %v2233
    %v2235 = vrot.slane %v2210, %v2234
    %v2242 = vadd.f32 %v2204, %v2215
    %v2243 = vadd.f32 %v2205, %v2219
    %v2244 = vadd.f32 %v2206, %v2223
    %v2245 = vadd.f32 %v2207, %v2227
    %v2246 = vadd.f32 %v2208, %v2231
    %v2247 = vadd.f32 %v2209, %v2235
    %v2248 = vmax.f32 %v2242, 0.0
    %v2249 = vmax.f32 %v2243, 0.0
    %v2250 = vmax.f32 %v2244, 0.0
    %v2251 = vmax.f32 %v2245, 0.0
    %v2252 = vmax.f32 %v2246, 0.0
    %v2253 = vmax.f32 %v2247, 0.0
    %v2254 = vpack.c.bf16 %v2248, %v2248
    %v2255 = vpack.c.bf16 %v2249, %v2249
    %v2256 = vpack.c.bf16 %v2250, %v2250
    %v2257 = vpack.c.bf16 %v2251, %v2251
    %v2258 = vpack.c.bf16 %v2252, %v2252
    %v2259 = vpack.c.bf16 %v2253, %v2253
    %v2260 = vld [vmem:[#allocation5] sm:$0xf]
    %v2261 = vld [vmem:[#allocation5 + $0x4] sm:$0xf]
    %v2262 = vld [vmem:[#allocation5 + $0x8] sm:$0xf]
    %v2263 = vld [vmem:[#allocation5 + $0xc] sm:$0xf]
    %v2264 = vld [vmem:[#allocation5 + $0x10] sm:$0xf]
    %v2265 = vld [vmem:[#allocation5 + $0x14] sm:$0xf]
    %v2266 = vld [vmem:[#allocation5 + $0x18] sm:$0xf]
    %v2267 = vld [vmem:[#allocation5 + $0x1c] sm:$0xf]
    %v2268 = vld [vmem:[#allocation5 + $0x20] sm:$0xf]
    %v2269 = vld [vmem:[#allocation5 + $0x24] sm:$0xf]
    %v2270 = vld [vmem:[#allocation5 + $0x28] sm:$0xf]
    %v2271 = vld [vmem:[#allocation5 + $0x2c] sm:$0xf]
    %v2272 = vld [vmem:[#allocation5 + $0x30] sm:$0xf]
    %v2273 = vld [vmem:[#allocation5 + $0x34] sm:$0xf]
    %v2274 = vld [vmem:[#allocation5 + $0x38] sm:$0xf]
    %v2275 = vld [vmem:[#allocation5 + $0x3c] sm:$0xf]
    %v2276 = vld [vmem:[#allocation5 + $0x40] sm:$0xf]
    %v2277 = vld [vmem:[#allocation5 + $0x44] sm:$0xf]
    %v2278 = vld [vmem:[#allocation5 + $0x48] sm:$0xf]
    %v2279 = vld [vmem:[#allocation5 + $0x4c] sm:$0xf]
    %v2280 = vld [vmem:[#allocation5 + $0x50] sm:$0xf]
    %v2281 = vld [vmem:[#allocation5 + $0x54] sm:$0xf]
    %v2282 = vld [vmem:[#allocation5 + $0x58] sm:$0xf]
    %v2283 = vld [vmem:[#allocation5 + $0x5c] sm:$0xf]
    %v2284 = vld [vmem:[#allocation5 + $0x60] sm:$0xf]
    %v2285 = vld [vmem:[#allocation5 + $0x64] sm:$0xf]
    %v2286 = vld [vmem:[#allocation5 + $0x68] sm:$0xf]
    %v2287 = vld [vmem:[#allocation5 + $0x6c] sm:$0xf]
    %v2288 = vld [vmem:[#allocation5 + $0x70] sm:$0xf]
    %v2289 = vld [vmem:[#allocation5 + $0x74] sm:$0xf]
    %v2290 = vld [vmem:[#allocation5 + $0x78] sm:$0xf]
    %v2291 = vld [vmem:[#allocation5 + $0x7c] sm:$0xf]
    %v2292 = vld [vmem:[#allocation5 + $0x80] sm:$0xf]
    %v2293 = vld [vmem:[#allocation5 + $0x84] sm:$0xf]
    %v2294 = vld [vmem:[#allocation5 + $0x88] sm:$0xf]
    %v2295 = vld [vmem:[#allocation5 + $0x8c] sm:$0xf]
    %v2296 = vld [vmem:[#allocation5 + $0x90] sm:$0xf]
    %v2297 = vld [vmem:[#allocation5 + $0x94] sm:$0xf]
    %v2298 = vld [vmem:[#allocation5 + $0x98] sm:$0xf]
    %v2299 = vld [vmem:[#allocation5 + $0x9c] sm:$0xf]
    %v2300 = vld [vmem:[#allocation5 + $0xa0] sm:$0xf]
    %v2301 = vld [vmem:[#allocation5 + $0xa4] sm:$0xf]
    %v2302 = vld [vmem:[#allocation5 + $0xa8] sm:$0xf]
    %v2303 = vld [vmem:[#allocation5 + $0xac] sm:$0xf]
    %v2304 = vld [vmem:[#allocation5 + $0xb0] sm:$0xf]
    %v2305 = vld [vmem:[#allocation5 + $0xb4] sm:$0xf]
    %v2306 = vld [vmem:[#allocation5 + $0xb8] sm:$0xf]
    %v2307 = vld [vmem:[#allocation5 + $0xbc] sm:$0xf]
    %v2308 = vld [vmem:[#allocation5 + $0xc0] sm:$0xf]
    %v2309 = vld [vmem:[#allocation5 + $0xc4] sm:$0xf]
    %v2310 = vld [vmem:[#allocation5 + $0xc8] sm:$0xf]
    %v2311 = vld [vmem:[#allocation5 + $0xcc] sm:$0xf]
    %v2312 = vld [vmem:[#allocation5 + $0xd0] sm:$0xf]
    %v2313 = vld [vmem:[#allocation5 + $0xd4] sm:$0xf]
    %v2314 = vld [vmem:[#allocation5 + $0xd8] sm:$0xf]
    %v2315 = vld [vmem:[#allocation5 + $0xdc] sm:$0xf]
    %v2316 = vld [vmem:[#allocation5 + $0xe0] sm:$0xf]
    %v2317 = vld [vmem:[#allocation5 + $0xe4] sm:$0xf]
    %v2318 = vld [vmem:[#allocation5 + $0xe8] sm:$0xf]
    %v2319 = vld [vmem:[#allocation5 + $0xec] sm:$0xf]
    %v2320 = vld [vmem:[#allocation5 + $0xf0] sm:$0xf]
    %v2321 = vld [vmem:[#allocation5 + $0xf4] sm:$0xf]
    %v2322 = vld [vmem:[#allocation5 + $0xf8] sm:$0xf]
    %v2323 = vld [vmem:[#allocation5 + $0xfc] sm:$0xf]
    %v2324 = vld [vmem:[#allocation5 + $0x100] sm:$0xf]
    %v2325 = vld [vmem:[#allocation5 + $0x104] sm:$0xf]
    %v2326 = vld [vmem:[#allocation5 + $0x108] sm:$0xf]
    %v2327 = vld [vmem:[#allocation5 + $0x10c] sm:$0xf]
    %v2328 = vld [vmem:[#allocation5 + $0x110] sm:$0xf]
    %v2329 = vld [vmem:[#allocation5 + $0x114] sm:$0xf]
    %v2330 = vld [vmem:[#allocation5 + $0x118] sm:$0xf]
    %v2331 = vld [vmem:[#allocation5 + $0x11c] sm:$0xf]
    %v2332 = vld [vmem:[#allocation5 + $0x120] sm:$0xf]
    %v2333 = vld [vmem:[#allocation5 + $0x124] sm:$0xf]
    %v2334 = vld [vmem:[#allocation5 + $0x128] sm:$0xf]
    %v2335 = vld [vmem:[#allocation5 + $0x12c] sm:$0xf]
    %v2336 = vld [vmem:[#allocation5 + $0x130] sm:$0xf]
    %v2337 = vld [vmem:[#allocation5 + $0x134] sm:$0xf]
    %v2338 = vld [vmem:[#allocation5 + $0x138] sm:$0xf]
    %v2339 = vld [vmem:[#allocation5 + $0x13c] sm:$0xf]
    %v2340 = vld [vmem:[#allocation5 + $0x140] sm:$0xf]
    %v2341 = vld [vmem:[#allocation5 + $0x144] sm:$0xf]
    %v2342 = vld [vmem:[#allocation5 + $0x148] sm:$0xf]
    %v2343 = vld [vmem:[#allocation5 + $0x14c] sm:$0xf]
    %v2344 = vld [vmem:[#allocation5 + $0x150] sm:$0xf]
    %v2345 = vld [vmem:[#allocation5 + $0x154] sm:$0xf]
    %v2346 = vld [vmem:[#allocation5 + $0x158] sm:$0xf]
    %v2347 = vld [vmem:[#allocation5 + $0x15c] sm:$0xf]
    %v2348 = vld [vmem:[#allocation5 + $0x160] sm:$0xf]
    %v2349 = vld [vmem:[#allocation5 + $0x164] sm:$0xf]
    %v2350 = vld [vmem:[#allocation5 + $0x168] sm:$0xf]
    %v2351 = vld [vmem:[#allocation5 + $0x16c] sm:$0xf]
    %v2352 = vld [vmem:[#allocation5 + $0x170] sm:$0xf]
    %v2353 = vld [vmem:[#allocation5 + $0x174] sm:$0xf]
    %v2354 = vld [vmem:[#allocation5 + $0x178] sm:$0xf]
    %v2355 = vld [vmem:[#allocation5 + $0x17c] sm:$0xf]
    %v2356 = vld [vmem:[%s6] sm:$0x1]
    %v2358 = vlaneseq
    %v2359 = vshrl.u32 %v2358, 7
    %v2360 = vsub.s32 0, %v2359
    %v2361 = vrot.slane %v2356, %v2360
    %v2459 = vunpack.c.l.b16 %v2260
    %v2460 = vunpack.c.l.b16 %v2261
    %v2461 = vunpack.c.l.b16 %v2262
    %v2462 = vunpack.c.l.b16 %v2263
    %v2463 = vunpack.c.l.b16 %v2264
    %v2464 = vunpack.c.l.b16 %v2265
    %v2465 = vunpack.c.l.b16 %v2266
    %v2466 = vunpack.c.l.b16 %v2267
    %v2467 = vunpack.c.l.b16 %v2268
    %v2468 = vunpack.c.l.b16 %v2269
    %v2469 = vunpack.c.l.b16 %v2270
    %v2470 = vunpack.c.l.b16 %v2271
    %v2471 = vunpack.c.l.b16 %v2272
    %v2472 = vunpack.c.l.b16 %v2273
    %v2473 = vunpack.c.l.b16 %v2274
    %v2474 = vunpack.c.l.b16 %v2275
    %v2475 = vunpack.c.l.b16 %v2276
    %v2476 = vunpack.c.l.b16 %v2277
    %v2477 = vunpack.c.l.b16 %v2278
    %v2478 = vunpack.c.l.b16 %v2279
    %v2479 = vunpack.c.l.b16 %v2280
    %v2480 = vunpack.c.l.b16 %v2281
    %v2481 = vunpack.c.l.b16 %v2282
    %v2482 = vunpack.c.l.b16 %v2283
    %v2483 = vunpack.c.l.b16 %v2284
    %v2484 = vunpack.c.l.b16 %v2285
    %v2485 = vunpack.c.l.b16 %v2286
    %v2486 = vunpack.c.l.b16 %v2287
    %v2487 = vunpack.c.l.b16 %v2288
    %v2488 = vunpack.c.l.b16 %v2289
    %v2489 = vunpack.c.l.b16 %v2290
    %v2490 = vunpack.c.l.b16 %v2291
    %v2491 = vunpack.c.l.b16 %v2292
    %v2492 = vunpack.c.l.b16 %v2293
    %v2493 = vunpack.c.l.b16 %v2294
    %v2494 = vunpack.c.l.b16 %v2295
    %v2495 = vunpack.c.l.b16 %v2296
    %v2496 = vunpack.c.l.b16 %v2297
    %v2497 = vunpack.c.l.b16 %v2298
    %v2498 = vunpack.c.l.b16 %v2299
    %v2499 = vunpack.c.l.b16 %v2300
    %v2500 = vunpack.c.l.b16 %v2301
    %v2501 = vunpack.c.l.b16 %v2302
    %v2502 = vunpack.c.l.b16 %v2303
    %v2503 = vunpack.c.l.b16 %v2304
    %v2504 = vunpack.c.l.b16 %v2305
    %v2505 = vunpack.c.l.b16 %v2306
    %v2506 = vunpack.c.l.b16 %v2307
    %v2507 = vunpack.c.l.b16 %v2308
    %v2508 = vunpack.c.l.b16 %v2309
    %v2509 = vunpack.c.l.b16 %v2310
    %v2510 = vunpack.c.l.b16 %v2311
    %v2511 = vunpack.c.l.b16 %v2312
    %v2512 = vunpack.c.l.b16 %v2313
    %v2513 = vunpack.c.l.b16 %v2314
    %v2514 = vunpack.c.l.b16 %v2315
    %v2515 = vunpack.c.l.b16 %v2316
    %v2516 = vunpack.c.l.b16 %v2317
    %v2517 = vunpack.c.l.b16 %v2318
    %v2518 = vunpack.c.l.b16 %v2319
    %v2519 = vunpack.c.l.b16 %v2320
    %v2520 = vunpack.c.l.b16 %v2321
    %v2521 = vunpack.c.l.b16 %v2322
    %v2522 = vunpack.c.l.b16 %v2323
    %v2523 = vunpack.c.l.b16 %v2324
    %v2524 = vunpack.c.l.b16 %v2325
    %v2525 = vunpack.c.l.b16 %v2326
    %v2526 = vunpack.c.l.b16 %v2327
    %v2527 = vunpack.c.l.b16 %v2328
    %v2528 = vunpack.c.l.b16 %v2329
    %v2529 = vunpack.c.l.b16 %v2330
    %v2530 = vunpack.c.l.b16 %v2331
    %v2531 = vunpack.c.l.b16 %v2332
    %v2532 = vunpack.c.l.b16 %v2333
    %v2533 = vunpack.c.l.b16 %v2334
    %v2534 = vunpack.c.l.b16 %v2335
    %v2535 = vunpack.c.l.b16 %v2336
    %v2536 = vunpack.c.l.b16 %v2337
    %v2537 = vunpack.c.l.b16 %v2338
    %v2538 = vunpack.c.l.b16 %v2339
    %v2539 = vunpack.c.l.b16 %v2340
    %v2540 = vunpack.c.l.b16 %v2341
    %v2541 = vunpack.c.l.b16 %v2342
    %v2542 = vunpack.c.l.b16 %v2343
    %v2543 = vunpack.c.l.b16 %v2344
    %v2544 = vunpack.c.l.b16 %v2345
    %v2545 = vunpack.c.l.b16 %v2346
    %v2546 = vunpack.c.l.b16 %v2347
    %v2547 = vunpack.c.l.b16 %v2348
    %v2548 = vunpack.c.l.b16 %v2349
    %v2549 = vunpack.c.l.b16 %v2350
    %v2550 = vunpack.c.l.b16 %v2351
    %v2551 = vunpack.c.l.b16 %v2352
    %v2552 = vunpack.c.l.b16 %v2353
    %v2553 = vunpack.c.l.b16 %v2354
    %v2554 = vunpack.c.l.b16 %v2355
    %v2555 = vpack.c.b16 %v2460, %v2459
    %v2556 = vpack.c.b16 %v2462, %v2461
    %v2557 = vpack.c.b16 %v2464, %v2463
    %v2558 = vpack.c.b16 %v2466, %v2465
    %v2559 = vpack.c.b16 %v2468, %v2467
    %v2560 = vpack.c.b16 %v2470, %v2469
    %v2561 = vpack.c.b16 %v2472, %v2471
    %v2562 = vpack.c.b16 %v2474, %v2473
    %v2563 = vpack.c.b16 %v2476, %v2475
    %v2564 = vpack.c.b16 %v2478, %v2477
    %v2565 = vpack.c.b16 %v2480, %v2479
    %v2566 = vpack.c.b16 %v2482, %v2481
    %v2567 = vpack.c.b16 %v2484, %v2483
    %v2568 = vpack.c.b16 %v2486, %v2485
    %v2569 = vpack.c.b16 %v2488, %v2487
    %v2570 = vpack.c.b16 %v2490, %v2489
    %v2571 = vpack.c.b16 %v2492, %v2491
    %v2572 = vpack.c.b16 %v2494, %v2493
    %v2573 = vpack.c.b16 %v2496, %v2495
    %v2574 = vpack.c.b16 %v2498, %v2497
    %v2575 = vpack.c.b16 %v2500, %v2499
    %v2576 = vpack.c.b16 %v2502, %v2501
    %v2577 = vpack.c.b16 %v2504, %v2503
    %v2578 = vpack.c.b16 %v2506, %v2505
    %v2579 = vpack.c.b16 %v2508, %v2507
    %v2580 = vpack.c.b16 %v2510, %v2509
    %v2581 = vpack.c.b16 %v2512, %v2511
    %v2582 = vpack.c.b16 %v2514, %v2513
    %v2583 = vpack.c.b16 %v2516, %v2515
    %v2584 = vpack.c.b16 %v2518, %v2517
    %v2585 = vpack.c.b16 %v2520, %v2519
    %v2586 = vpack.c.b16 %v2522, %v2521
    %v2587 = vpack.c.b16 %v2524, %v2523
    %v2588 = vpack.c.b16 %v2526, %v2525
    %v2589 = vpack.c.b16 %v2528, %v2527
    %v2590 = vpack.c.b16 %v2530, %v2529
    %v2591 = vpack.c.b16 %v2532, %v2531
    %v2592 = vpack.c.b16 %v2534, %v2533
    %v2593 = vpack.c.b16 %v2536, %v2535
    %v2594 = vpack.c.b16 %v2538, %v2537
    %v2595 = vpack.c.b16 %v2540, %v2539
    %v2596 = vpack.c.b16 %v2542, %v2541
    %v2597 = vpack.c.b16 %v2544, %v2543
    %v2598 = vpack.c.b16 %v2546, %v2545
    %v2599 = vpack.c.b16 %v2548, %v2547
    %v2600 = vpack.c.b16 %v2550, %v2549
    %v2601 = vpack.c.b16 %v2552, %v2551
    %v2602 = vpack.c.b16 %v2554, %v2553
    %2651 = vmatprep.subr.bf16.mxu0 0
    %2652 = vmatpush1.bf16.msra.mxu0 %v2555
    %2653 = vmatprep.subr.bf16.mxu0 0
    %2654 = vmatpush1.bf16.msra.mxu0 %v2556
    %2655 = vmatprep.subr.bf16.mxu0 0
    %2656 = vmatpush1.bf16.msra.mxu0 %v2557
    %2657 = vmatprep.subr.bf16.mxu0 0
    %2658 = vmatpush1.bf16.msra.mxu0 %v2558
    %2659 = vmatprep.subr.bf16.mxu0 0
    %2660 = vmatpush1.bf16.msra.mxu0 %v2559
    %2661 = vmatprep.subr.bf16.mxu0 0
    %2662 = vmatpush1.bf16.msra.mxu0 %v2560
    %2663 = vmatprep.subr.bf16.mxu0 0
    %2664 = vmatpush1.bf16.msra.mxu0 %v2561
    %2665 = vmatprep.subr.bf16.mxu0 0
    %2666 = vmatpush1.bf16.msra.mxu0 %v2562
    %2667 = vmatprep.subr.bf16.mxu0 0
    %2668 = vmatpush1.bf16.msra.mxu0 %v2563
    %2669 = vmatprep.subr.bf16.mxu0 0
    %2670 = vmatpush1.bf16.msra.mxu0 %v2564
    %2671 = vmatprep.subr.bf16.mxu0 0
    %2672 = vmatpush1.bf16.msra.mxu0 %v2565
    %2673 = vmatprep.subr.bf16.mxu0 0
    %2674 = vmatpush1.bf16.msra.mxu0 %v2566
    %2675 = vmatprep.subr.bf16.mxu0 0
    %2676 = vmatpush1.bf16.msra.mxu0 %v2567
    %2677 = vmatprep.subr.bf16.mxu0 0
    %2678 = vmatpush1.bf16.msra.mxu0 %v2568
    %2679 = vmatprep.subr.bf16.mxu0 0
    %2680 = vmatpush1.bf16.msra.mxu0 %v2569
    %2681 = vmatprep.subr.bf16.mxu0 0
    %2682 = vmatpush1.bf16.msra.mxu0 %v2570
    %2683 = vmatprep.mubr.bf16.mxu0 %v2255
    %2684 = vmatmul.mubr.bf16.gmra.mrb[0].mxu0 %v2254
    %v2685 = vpop.f32.mrb[0].mxu0
    %v2686 = vadd.f32 %v2361, %v2685
    %v2687 = vpop.f32.mrb[0].mxu0
    %v2688 = vpop.f32.mrb[0].mxu0
    %v2689 = vpop.f32.mrb[0].mxu0
    %2690 = vdwg.mxu0
    %2691 = vmatprep.subr.bf16.mxu0 0
    %2692 = vmatpush1.bf16.msra.mxu0 %v2571
    %2693 = vmatprep.subr.bf16.mxu0 0
    %2694 = vmatpush1.bf16.msra.mxu0 %v2572
    %2695 = vmatprep.subr.bf16.mxu0 0
    %2696 = vmatpush1.bf16.msra.mxu0 %v2573
    %2697 = vmatprep.subr.bf16.mxu0 0
    %2698 = vmatpush1.bf16.msra.mxu0 %v2574
    %2699 = vmatprep.subr.bf16.mxu0 0
    %2700 = vmatpush1.bf16.msra.mxu0 %v2575
    %2701 = vmatprep.subr.bf16.mxu0 0
    %2702 = vmatpush1.bf16.msra.mxu0 %v2576
    %2703 = vmatprep.subr.bf16.mxu0 0
    %2704 = vmatpush1.bf16.msra.mxu0 %v2577
    %2705 = vmatprep.subr.bf16.mxu0 0
    %2706 = vmatpush1.bf16.msra.mxu0 %v2578
    %2707 = vmatprep.subr.bf16.mxu0 0
    %2708 = vmatpush1.bf16.msra.mxu0 %v2579
    %2709 = vmatprep.subr.bf16.mxu0 0
    %2710 = vmatpush1.bf16.msra.mxu0 %v2580
    %2711 = vmatprep.subr.bf16.mxu0 0
    %2712 = vmatpush1.bf16.msra.mxu0 %v2581
    %2713 = vmatprep.subr.bf16.mxu0 0
    %2714 = vmatpush1.bf16.msra.mxu0 %v2582
    %2715 = vmatprep.subr.bf16.mxu0 0
    %2716 = vmatpush1.bf16.msra.mxu0 %v2583
    %2717 = vmatprep.subr.bf16.mxu0 0
    %2718 = vmatpush1.bf16.msra.mxu0 %v2584
    %2719 = vmatprep.subr.bf16.mxu0 0
    %2720 = vmatpush1.bf16.msra.mxu0 %v2585
    %2721 = vmatprep.subr.bf16.mxu0 0
    %2722 = vmatpush1.bf16.msra.mxu0 %v2586
    %2723 = vmatprep.mubr.bf16.mxu0 %v2257
    %2724 = vmatmul.mubr.bf16.gmra.mrb[0].mxu0 %v2256
    %v2725 = vpop.f32.mrb[0].mxu0
    %v2726 = vadd.f32 %v2686, %v2725
    %v2727 = vpop.f32.mrb[0].mxu0
    %v2728 = vpop.f32.mrb[0].mxu0
    %v2729 = vpop.f32.mrb[0].mxu0
    %2730 = vdwg.mxu0
    %2731 = vmatprep.subr.bf16.mxu0 0
    %2732 = vmatpush1.bf16.msra.mxu0 %v2587
    %2733 = vmatprep.subr.bf16.mxu0 0
    %2734 = vmatpush1.bf16.msra.mxu0 %v2588
    %2735 = vmatprep.subr.bf16.mxu0 0
    %2736 = vmatpush1.bf16.msra.mxu0 %v2589
    %2737 = vmatprep.subr.bf16.mxu0 0
    %2738 = vmatpush1.bf16.msra.mxu0 %v2590
    %2739 = vmatprep.subr.bf16.mxu0 0
    %2740 = vmatpush1.bf16.msra.mxu0 %v2591
    %2741 = vmatprep.subr.bf16.mxu0 0
    %2742 = vmatpush1.bf16.msra.mxu0 %v2592
    %2743 = vmatprep.subr.bf16.mxu0 0
    %2744 = vmatpush1.bf16.msra.mxu0 %v2593
    %2745 = vmatprep.subr.bf16.mxu0 0
    %2746 = vmatpush1.bf16.msra.mxu0 %v2594
    %2747 = vmatprep.subr.bf16.mxu0 0
    %2748 = vmatpush1.bf16.msra.mxu0 %v2595
    %2749 = vmatprep.subr.bf16.mxu0 0
    %2750 = vmatpush1.bf16.msra.mxu0 %v2596
    %2751 = vmatprep.subr.bf16.mxu0 0
    %2752 = vmatpush1.bf16.msra.mxu0 %v2597
    %2753 = vmatprep.subr.bf16.mxu0 0
    %2754 = vmatpush1.bf16.msra.mxu0 %v2598
    %2755 = vmatprep.subr.bf16.mxu0 0
    %2756 = vmatpush1.bf16.msra.mxu0 %v2599
    %2757 = vmatprep.subr.bf16.mxu0 0
    %2758 = vmatpush1.bf16.msra.mxu0 %v2600
    %2759 = vmatprep.subr.bf16.mxu0 0
    %2760 = vmatpush1.bf16.msra.mxu0 %v2601
    %2761 = vmatprep.subr.bf16.mxu0 0
    %2762 = vmatpush1.bf16.msra.mxu0 %v2602
    %2763 = vmatprep.mubr.bf16.mxu0 %v2259
    %2764 = vmatmul.mubr.bf16.gmra.mrb[0].mxu0 %v2258
    %v2765 = vpop.f32.mrb[0].mxu0
    %v2766 = vadd.f32 %v2726, %v2765
    %v2767 = vpop.f32.mrb[0].mxu0
    %v2768 = vpop.f32.mrb[0].mxu0
    %v2769 = vpop.f32.mrb[0].mxu0
    %2770 = vdwg.mxu0
    %2771 = vst [vmem:[#allocation7] sm:$0xff] %v2766
    // Predicated region
    $region38: #{tpu_custom_call.1} parent=1 // pred_check
      _
    $region39: #{tpu_custom_call.1} parent=1 // pred_check_branch
      %2773 = sbr.rel (0) target = $region41
    $region40: #{tpu_custom_call.1} parent=1 // pred_region
      %s2775 = ssub.s32 128, 128
      %2776 = vsyncadd [#allocation4], %s2775
      %s2778 = sshll.u32 [#allocation7], 4
      %s2779 = int_to_ptr.vmem [resolvable:$true] %s2778
      %2781 = dma.vmem_to_hbm [thread:$0]  %s2779, 128, %s7, [#allocation4]
    $region41: #{tpu_custom_call.1} parent=1 // pred_fallthru
      _
    // Predicated region
    $region42: #{tpu_custom_call.1} parent=1 // pred_check
      _
    $region43: #{tpu_custom_call.1} parent=1 // pred_check_branch
      %2783 = sbr.rel (0) target = $region45
    $region44: #{tpu_custom_call.1} parent=1 // pred_region
      %2784 = dma.done [#allocation4], 128
    $region45: #{tpu_custom_call.1} parent=1 // pred_fallthru
      _
    %2785 = vsyncpa [#allocation3], 1
    %2786 = vsyncpa [#allocation6], 1
    %2787 = vsyncpa [#allocation4], 1

</llo_original>
